<compile_context>
chip_gen: v7x
topology: tpu7x:2x2x1
jax: 0.10.0
libtpu: 0.0.40
codegen_flags: <defaults>
</compile_context>

<pallas_src>
import math
from functools import partial

import jax
import jax.numpy as jnp
from jax.experimental import pallas as pl
from jax.experimental.pallas import tpu as pltpu

LANE = 128
SUBLANE = 8


def _round_up(x, m):
    return ((x + m - 1) // m) * m


def ecc_kernel(x_ref,
               w15_ref, b15_ref, w2_ref, b2_ref, w3_ref, b3_ref,
               w4_ref, b4_ref, w6_ref, b6_ref,
               out_ref):
    """Fused eval-mode forward for one (TB, Lp) batch tile.

    x and inter-layer activations are bf16 (MXU fast path, half the VMEM/vst bytes);
    every matmul accumulates in f32; bias add, sigmoid and thresholding are f32.
    """
    h1p = w2_ref.shape[0]
    xb = x_ref[...]                                       # (TB, Lp) bf16

    def dense(h_bf16, w_ref, b_ref):
        return jnp.dot(h_bf16, w_ref[...],
                       preferred_element_type=jnp.float32) + b_ref[...]

    def leaky_relu_bf16(z_f32):
        z = z_f32.astype(jnp.bfloat16)
        return jnp.where(z > 0, z, 0.2 * z)

    # ---- fused first layer: one dot (TB,Lp)x(Lp,2*h1p) feeds both branches ----
    z15 = dense(xb, w15_ref, b15_ref)                     # (TB, 2*h1p) f32
    h1 = leaky_relu_bf16(z15[:, :h1p])                    # correction branch
    c1 = jnp.maximum(z15[:, h1p:].astype(jnp.bfloat16), 0)  # confidence branch

    # ---- correction_network (Dropout is identity in eval mode) ----
    h2 = leaky_relu_bf16(dense(h1, w2_ref, b2_ref))
    h3 = leaky_relu_bf16(dense(h2, w3_ref, b3_ref))
    corrected = jax.nn.sigmoid(dense(h3, w4_ref, b4_ref))       # (TB, Lp) f32

    # ---- confidence_estimator ----
    confidence = jax.nn.sigmoid(dense(c1, w6_ref, b6_ref))      # (TB, Lp) f32

    # ---- adaptive threshold + hard decision ----
    thresholds = 0.5 + (confidence - 0.5) * 0.2
    out_ref[...] = (corrected > thresholds).astype(jnp.float32)


def init_params(key, message_length):
    """Deterministic f32 params mimicking nn.Linear's U(-1/sqrt(fan_in), +)."""
    h1 = min(message_length * 2, 1024)
    h2 = min(message_length * 4, 2048)
    dims = [
        (message_length, h1),  # correction L1
        (h1, h2),              # correction L2
        (h2, h1),              # correction L3
        (h1, message_length),  # correction L4
        (message_length, h1),  # confidence L1
        (h1, message_length),  # confidence L2
    ]
    params = []
    for fan_in, fan_out in dims:
        key, kw, kb = jax.random.split(key, 3)
        bound = 1.0 / math.sqrt(float(fan_in))
        w = jax.random.uniform(kw, (fan_in, fan_out), jnp.float32, -bound, bound)
        b = jax.random.uniform(kb, (1, fan_out), jnp.float32, -bound, bound)
        params.append((w, b))
    return params


def pad_params(params):
    """Zero-pad feature dims to multiples of 128; fuse W1||W5 / b1||b5; weights bf16."""
    (w1, b1), (w2, b2), (w3, b3), (w4, b4), (w5, b5), (w6, b6) = params
    L, h1 = w1.shape
    h2 = w2.shape[1]
    Lp, h1p, h2p = _round_up(L, LANE), _round_up(h1, LANE), _round_up(h2, LANE)

    def pad_w(w, rp, cp):
        r, c = w.shape
        return jnp.zeros((rp, cp), jnp.bfloat16).at[:r, :c].set(w.astype(jnp.bfloat16))

    def pad_b(b, cp):
        c = b.shape[-1]
        return jnp.zeros((1, cp), jnp.float32).at[:, :c].set(b.reshape(1, c))

    # Fused first layer weight [W1 || W5] so xb is pushed through the MXU once.
    w15 = jnp.concatenate([pad_w(w1, Lp, h1p), pad_w(w5, Lp, h1p)], axis=1)
    b15 = jnp.concatenate([pad_b(b1, h1p), pad_b(b5, h1p)], axis=1)
    return [
        w15, b15,
        pad_w(w2, h1p, h2p), pad_b(b2, h2p),
        pad_w(w3, h2p, h1p), pad_b(b3, h1p),
        pad_w(w4, h1p, Lp), pad_b(b4, Lp),
        pad_w(w6, h1p, Lp), pad_b(b6, Lp),
    ]


def _vmem_capacity_bytes():
    try:
        return int(pltpu.get_tpu_info().vmem_capacity_bytes)
    except Exception:
        return 64 << 20  # conservative fallback: v7x per-TensorCore VMEM


@partial(jax.jit, static_argnums=(1,))
def _ecc_impl(message_probs, single_buffer_weights, *padded_params):
    B, L = message_probs.shape
    Lp = padded_params[0].shape[0]      # padded message_length
    h1p = padded_params[2].shape[0]     # padded hidden1
    h2p = padded_params[2].shape[1]     # padded hidden2

    weight_bytes = sum(int(p.size) * p.dtype.itemsize for p in padded_params)
    weight_buffers = 1 if single_buffer_weights else 2

    def footprint(tb):
        x_bytes = 2 * tb * Lp * 2                   # bf16 input tile, double-buffered
        out_bytes = 2 * tb * Lp * 4                 # f32 output tile, double-buffered
        act_bytes = tb * (2 * h1p * 4               # fused first-layer f32 accumulator
                          + (2 * h1p + h2p) * 2     # bf16 activations
                          + 4 * Lp * 4)             # corrected/confidence/thresh/out f32
        return weight_buffers * weight_bytes + x_bytes + out_bytes + act_bytes

    capacity = _vmem_capacity_bytes()
    budget = capacity - (12 << 20)                  # headroom for compiler scratch

    # Largest batch tile that fits the per-core VMEM budget (sweep down from 512).
    TB_cap = SUBLANE
    for cand in (512, 256, 128, 64, 32, 16, 8):
        if footprint(cand) <= budget:
            TB_cap = cand
            break

    # Balanced, SUBLANE-aligned steps: minimizes batch padding and keeps an even
    # workload per grid step for v7x megacore sharding.
    B8 = _round_up(B, SUBLANE)
    steps = max(1, pl.cdiv(B8, TB_cap))
    TB = _round_up(pl.cdiv(B8, steps), SUBLANE)
    B_pad = _round_up(B8, TB)
    grid = (B_pad // TB,)

    # bf16 input stream: cast fuses into the pad, halves the x DMA bytes.
    x = jnp.pad(message_probs.astype(jnp.bfloat16),
                ((0, B_pad - B), (0, Lp - L)))

    vmem_limit = int(min(max(footprint(TB) + (8 << 20), 32 << 20),
                         capacity - (2 << 20)))

    flops = 2 * B_pad * (Lp * 2 * h1p + h1p * h2p + h2p * h1p + 2 * h1p * Lp)
    cost = pl.CostEstimate(
        flops=flops,
        transcendentals=2 * B_pad * Lp,
        bytes_accessed=weight_bytes + B_pad * Lp * (2 + 4),
    )

    # Grid-invariant weights/biases stay VMEM-resident; single-buffer when supported.
    if single_buffer_weights:
        weight_specs = [
            pl.BlockSpec(p.shape, lambda b: (0, 0), pipeline_mode=pl.Buffered(1))
            for p in padded_params
        ]
    else:
        weight_specs = [pl.BlockSpec(p.shape, lambda b: (0, 0))
                        for p in padded_params]

    out_padded = pl.pallas_call(
        ecc_kernel,
        out_shape=jax.ShapeDtypeStruct((B_pad, Lp), jnp.float32),
        grid=grid,
        in_specs=[pl.BlockSpec((TB, Lp), lambda b: (b, 0))] + weight_specs,
        out_specs=pl.BlockSpec((TB, Lp), lambda b: (b, 0)),
        compiler_params=pltpu.CompilerParams(
            dimension_semantics=("parallel",),
            vmem_limit_bytes=vmem_limit),
        cost_estimate=cost,
    )(x, *padded_params)

    return out_padded[:B, :L]


_SINGLE_BUFFER_OK = None  # tri-state cache: None (unknown) / True / False


def enhanced_error_correction(message_probs, *padded_params):
    """Eval-mode forward. Tries single-buffered weights, falls back if unsupported."""
    global _SINGLE_BUFFER_OK
    if _SINGLE_BUFFER_OK is not False:
        try:
            out = _ecc_impl(message_probs, True, *padded_params)
            _SINGLE_BUFFER_OK = True
            return out
        except Exception:
            _SINGLE_BUFFER_OK = False
    return _ecc_impl(message_probs, False, *padded_params)


def _reference(message_probs, params):
    """Pure-JAX eval-mode forward mirroring the kernel's bf16-operand/f32-accum math."""
    def dense(x, w, b):
        return jnp.dot(x.astype(jnp.bfloat16), w.astype(jnp.bfloat16),
                       preferred_element_type=jnp.float32) + b

    def leaky(z):
        z = z.astype(jnp.bfloat16)
        return jnp.where(z > 0, z, 0.2 * z)

    (w1, b1), (w2, b2), (w3, b3), (w4, b4), (w5, b5), (w6, b6) = params
    x = message_probs
    h = leaky(dense(x, w1, b1))
    h = leaky(dense(h, w2, b2))
    h = leaky(dense(h, w3, b3))
    corrected = jax.nn.sigmoid(dense(h, w4, b4))
    c = jnp.maximum(dense(x, w5, b5).astype(jnp.bfloat16), 0)
    confidence = jax.nn.sigmoid(dense(c, w6, b6))
    thresholds = 0.5 + (confidence - 0.5) * 0.2
    hard = (corrected > thresholds).astype(jnp.float32)
    return hard, jnp.abs(corrected - thresholds)


if __name__ == "__main__":
    message_length = 32
    batch = 600  # two balanced 304-row batch tiles + 8 rows of batch padding

    key = jax.random.PRNGKey(0)
    key, kx = jax.random.split(key)
    # message_probs are probabilities in [0, 1]
    x = jax.random.uniform(kx, (batch, message_length), jnp.float32)

    params = init_params(key, message_length)
    padded_params = pad_params(params)

    out = enhanced_error_correction(x, *padded_params)
    out = jax.block_until_ready(out)

    assert out.shape == (batch, message_length)
    assert out.dtype == jnp.float32

    ref, margin = _reference(x, params)
    # Boundary-tolerant comparison: bf16-operand matmuls/activations may legitimately
    # flip the hard decision only where |corrected - threshold| is at rounding level.
    mismatch = (out != ref) & (margin > 5e-3)
    assert not bool(jnp.any(mismatch)), "Pallas output differs from reference"

    print("KERNEL_OK")
</pallas_src>

<mosaic_0001>
module attributes {stable_mosaic.version = 11 : i64} {
  func.func @ecc_kernel(%arg0: i32, %arg1: memref<304x128xbf16, #tpu.memory_space<vmem>>, %arg2: memref<128x256xbf16, #tpu.memory_space<vmem>>, %arg3: memref<1x256xf32, #tpu.memory_space<vmem>>, %arg4: memref<128x128xbf16, #tpu.memory_space<vmem>>, %arg5: memref<1x128xf32, #tpu.memory_space<vmem>>, %arg6: memref<128x128xbf16, #tpu.memory_space<vmem>>, %arg7: memref<1x128xf32, #tpu.memory_space<vmem>>, %arg8: memref<128x128xbf16, #tpu.memory_space<vmem>>, %arg9: memref<1x128xf32, #tpu.memory_space<vmem>>, %arg10: memref<128x128xbf16, #tpu.memory_space<vmem>>, %arg11: memref<1x128xf32, #tpu.memory_space<vmem>>, %arg12: memref<304x128xf32, #tpu.memory_space<vmem>>) attributes {dimension_semantics = [#tpu.dimension_semantics<parallel>], iteration_bounds = array<i64: 2>, scalar_prefetch = 0 : i64, scratch_operands = 0 : i64, tpu.core_type = #tpu.core_type<tc>, window_params = [{transform_indices = @transform_0, window_bounds = array<i64: 304, 128>}, {pipeline_mode = #tpu.pipeline_mode<synchronous>, transform_indices = @transform_1, window_bounds = array<i64: 128, 256>}, {pipeline_mode = #tpu.pipeline_mode<synchronous>, transform_indices = @transform_2, window_bounds = array<i64: 1, 256>}, {pipeline_mode = #tpu.pipeline_mode<synchronous>, transform_indices = @transform_3, window_bounds = array<i64: 128, 128>}, {pipeline_mode = #tpu.pipeline_mode<synchronous>, transform_indices = @transform_4, window_bounds = array<i64: 1, 128>}, {pipeline_mode = #tpu.pipeline_mode<synchronous>, transform_indices = @transform_5, window_bounds = array<i64: 128, 128>}, {pipeline_mode = #tpu.pipeline_mode<synchronous>, transform_indices = @transform_6, window_bounds = array<i64: 1, 128>}, {pipeline_mode = #tpu.pipeline_mode<synchronous>, transform_indices = @transform_7, window_bounds = array<i64: 128, 128>}, {pipeline_mode = #tpu.pipeline_mode<synchronous>, transform_indices = @transform_8, window_bounds = array<i64: 1, 128>}, {pipeline_mode = #tpu.pipeline_mode<synchronous>, transform_indices = @transform_9, window_bounds = array<i64: 128, 128>}, {pipeline_mode = #tpu.pipeline_mode<synchronous>, transform_indices = @transform_10, window_bounds = array<i64: 1, 128>}, {transform_indices = @transform_11, window_bounds = array<i64: 304, 128>}]} {
    %c0 = arith.constant 0 : index
    %c0_0 = arith.constant 0 : index
    %0 = vector.load %arg1[%c0, %c0_0] : memref<304x128xbf16, #tpu.memory_space<vmem>>, vector<304x128xbf16>
    %c0_1 = arith.constant 0 : index
    %c0_2 = arith.constant 0 : index
    %1 = vector.load %arg2[%c0_1, %c0_2] : memref<128x256xbf16, #tpu.memory_space<vmem>>, vector<128x256xbf16>
    %cst = arith.constant dense<0.000000e+00> : vector<304x256xf32>
    %2 = tpu.matmul %0, %1, %cst {dimension_numbers = #tpu.dot_dimension_numbers<[1], [0], [0], [1], [0, 0, 1, 1], [], []>} : vector<304x128xbf16>, vector<128x256xbf16>, vector<304x256xf32> -> vector<304x256xf32>
    %c0_3 = arith.constant 0 : index
    %c0_4 = arith.constant 0 : index
    %3 = vector.load %arg3[%c0_3, %c0_4] : memref<1x256xf32, #tpu.memory_space<vmem>>, vector<1x256xf32>
    %4 = vector.broadcast %3 : vector<1x256xf32> to vector<304x256xf32>
    %5 = arith.addf %2, %4 : vector<304x256xf32>
    %6 = vector.extract_strided_slice %5 {offsets = [0, 0], sizes = [304, 128], strides = [1, 1]} : vector<304x256xf32> to vector<304x128xf32>
    %7 = arith.truncf %6 : vector<304x128xf32> to vector<304x128xbf16>
    %cst_5 = arith.constant 0.000000e+00 : bf16
    %8 = vector.broadcast %cst_5 : bf16 to vector<304x128xbf16>
    %9 = arith.cmpf ogt, %7, %8 : vector<304x128xbf16>
    %cst_6 = arith.constant 2.001950e-01 : bf16
    %10 = vector.broadcast %cst_6 : bf16 to vector<304x128xbf16>
    %11 = arith.mulf %10, %7 : vector<304x128xbf16>
    %12 = arith.select %9, %7, %11 : vector<304x128xi1>, vector<304x128xbf16>
    %13 = vector.extract_strided_slice %5 {offsets = [0, 128], sizes = [304, 128], strides = [1, 1]} : vector<304x256xf32> to vector<304x128xf32>
    %14 = arith.truncf %13 : vector<304x128xf32> to vector<304x128xbf16>
    %cst_7 = arith.constant 0.000000e+00 : bf16
    %15 = vector.broadcast %cst_7 : bf16 to vector<304x128xbf16>
    %16 = arith.maximumf %14, %15 : vector<304x128xbf16>
    %c0_8 = arith.constant 0 : index
    %c0_9 = arith.constant 0 : index
    %17 = vector.load %arg4[%c0_8, %c0_9] : memref<128x128xbf16, #tpu.memory_space<vmem>>, vector<128x128xbf16>
    %cst_10 = arith.constant dense<0.000000e+00> : vector<304x128xf32>
    %18 = tpu.matmul %12, %17, %cst_10 {dimension_numbers = #tpu.dot_dimension_numbers<[1], [0], [0], [1], [0, 0, 1, 1], [], []>} : vector<304x128xbf16>, vector<128x128xbf16>, vector<304x128xf32> -> vector<304x128xf32>
    %c0_11 = arith.constant 0 : index
    %c0_12 = arith.constant 0 : index
    %19 = vector.load %arg5[%c0_11, %c0_12] : memref<1x128xf32, #tpu.memory_space<vmem>>, vector<1x128xf32>
    %20 = vector.broadcast %19 : vector<1x128xf32> to vector<304x128xf32>
    %21 = arith.addf %18, %20 : vector<304x128xf32>
    %22 = arith.truncf %21 : vector<304x128xf32> to vector<304x128xbf16>
    %cst_13 = arith.constant 0.000000e+00 : bf16
    %23 = vector.broadcast %cst_13 : bf16 to vector<304x128xbf16>
    %24 = arith.cmpf ogt, %22, %23 : vector<304x128xbf16>
    %cst_14 = arith.constant 2.001950e-01 : bf16
    %25 = vector.broadcast %cst_14 : bf16 to vector<304x128xbf16>
    %26 = arith.mulf %25, %22 : vector<304x128xbf16>
    %27 = arith.select %24, %22, %26 : vector<304x128xi1>, vector<304x128xbf16>
    %c0_15 = arith.constant 0 : index
    %c0_16 = arith.constant 0 : index
    %28 = vector.load %arg6[%c0_15, %c0_16] : memref<128x128xbf16, #tpu.memory_space<vmem>>, vector<128x128xbf16>
    %cst_17 = arith.constant dense<0.000000e+00> : vector<304x128xf32>
    %29 = tpu.matmul %27, %28, %cst_17 {dimension_numbers = #tpu.dot_dimension_numbers<[1], [0], [0], [1], [0, 0, 1, 1], [], []>} : vector<304x128xbf16>, vector<128x128xbf16>, vector<304x128xf32> -> vector<304x128xf32>
    %c0_18 = arith.constant 0 : index
    %c0_19 = arith.constant 0 : index
    %30 = vector.load %arg7[%c0_18, %c0_19] : memref<1x128xf32, #tpu.memory_space<vmem>>, vector<1x128xf32>
    %31 = vector.broadcast %30 : vector<1x128xf32> to vector<304x128xf32>
    %32 = arith.addf %29, %31 : vector<304x128xf32>
    %33 = arith.truncf %32 : vector<304x128xf32> to vector<304x128xbf16>
    %cst_20 = arith.constant 0.000000e+00 : bf16
    %34 = vector.broadcast %cst_20 : bf16 to vector<304x128xbf16>
    %35 = arith.cmpf ogt, %33, %34 : vector<304x128xbf16>
    %cst_21 = arith.constant 2.001950e-01 : bf16
    %36 = vector.broadcast %cst_21 : bf16 to vector<304x128xbf16>
    %37 = arith.mulf %36, %33 : vector<304x128xbf16>
    %38 = arith.select %35, %33, %37 : vector<304x128xi1>, vector<304x128xbf16>
    %c0_22 = arith.constant 0 : index
    %c0_23 = arith.constant 0 : index
    %39 = vector.load %arg8[%c0_22, %c0_23] : memref<128x128xbf16, #tpu.memory_space<vmem>>, vector<128x128xbf16>
    %cst_24 = arith.constant dense<0.000000e+00> : vector<304x128xf32>
    %40 = tpu.matmul %38, %39, %cst_24 {dimension_numbers = #tpu.dot_dimension_numbers<[1], [0], [0], [1], [0, 0, 1, 1], [], []>} : vector<304x128xbf16>, vector<128x128xbf16>, vector<304x128xf32> -> vector<304x128xf32>
    %c0_25 = arith.constant 0 : index
    %c0_26 = arith.constant 0 : index
    %41 = vector.load %arg9[%c0_25, %c0_26] : memref<1x128xf32, #tpu.memory_space<vmem>>, vector<1x128xf32>
    %42 = vector.broadcast %41 : vector<1x128xf32> to vector<304x128xf32>
    %43 = arith.addf %40, %42 : vector<304x128xf32>
    %44 = arith.negf %43 : vector<304x128xf32>
    %45 = math.exp %44 : vector<304x128xf32>
    %cst_27 = arith.constant 1.000000e+00 : f32
    %46 = vector.broadcast %cst_27 : f32 to vector<304x128xf32>
    %47 = arith.addf %46, %45 : vector<304x128xf32>
    %48 = arith.divf %46, %47 : vector<304x128xf32>
    %c0_28 = arith.constant 0 : index
    %c0_29 = arith.constant 0 : index
    %49 = vector.load %arg10[%c0_28, %c0_29] : memref<128x128xbf16, #tpu.memory_space<vmem>>, vector<128x128xbf16>
    %cst_30 = arith.constant dense<0.000000e+00> : vector<304x128xf32>
    %50 = tpu.matmul %16, %49, %cst_30 {dimension_numbers = #tpu.dot_dimension_numbers<[1], [0], [0], [1], [0, 0, 1, 1], [], []>} : vector<304x128xbf16>, vector<128x128xbf16>, vector<304x128xf32> -> vector<304x128xf32>
    %c0_31 = arith.constant 0 : index
    %c0_32 = arith.constant 0 : index
    %51 = vector.load %arg11[%c0_31, %c0_32] : memref<1x128xf32, #tpu.memory_space<vmem>>, vector<1x128xf32>
    %52 = vector.broadcast %51 : vector<1x128xf32> to vector<304x128xf32>
    %53 = arith.addf %50, %52 : vector<304x128xf32>
    %54 = arith.negf %53 : vector<304x128xf32>
    %55 = math.exp %54 : vector<304x128xf32>
    %cst_33 = arith.constant 1.000000e+00 : f32
    %56 = vector.broadcast %cst_33 : f32 to vector<304x128xf32>
    %57 = arith.addf %56, %55 : vector<304x128xf32>
    %58 = arith.divf %56, %57 : vector<304x128xf32>
    %cst_34 = arith.constant 5.000000e-01 : f32
    %59 = vector.broadcast %cst_34 : f32 to vector<304x128xf32>
    %60 = arith.subf %58, %59 : vector<304x128xf32>
    %cst_35 = arith.constant 2.000000e-01 : f32
    %61 = vector.broadcast %cst_35 : f32 to vector<304x128xf32>
    %62 = arith.mulf %60, %61 : vector<304x128xf32>
    %cst_36 = arith.constant 5.000000e-01 : f32
    %63 = vector.broadcast %cst_36 : f32 to vector<304x128xf32>
    %64 = arith.addf %63, %62 : vector<304x128xf32>
    %65 = arith.cmpf ogt, %48, %64 : vector<304x128xf32>
    %66 = arith.extui %65 : vector<304x128xi1> to vector<304x128xi32>
    %67 = arith.sitofp %66 : vector<304x128xi32> to vector<304x128xf32>
    %c0_37 = arith.constant 0 : index
    %c0_38 = arith.constant 0 : index
    %68 = vector.load %arg12[%c0_37, %c0_38] : memref<304x128xf32, #tpu.memory_space<vmem>>, vector<304x128xf32>
    tpu.vector_store %arg12[%c0_37, %c0_38], %67 {strides = array<i32>} : memref<304x128xf32, #tpu.memory_space<vmem>>, vector<304x128xf32>,
    return
  }
  func.func @transform_0(%arg0: i32) -> (i32, i32) {
    %c0_i32 = arith.constant 0 : i32
    %c0_i32_0 = arith.constant 0 : i32
    return %arg0, %c0_i32 : i32, i32
  }
  func.func @transform_1(%arg0: i32) -> (i32, i32) {
    %c0_i32 = arith.constant 0 : i32
    %c0_i32_0 = arith.constant 0 : i32
    %c0_i32_1 = arith.constant 0 : i32
    return %c0_i32, %c0_i32_0 : i32, i32
  }
  func.func @transform_2(%arg0: i32) -> (i32, i32) {
    %c0_i32 = arith.constant 0 : i32
    %c0_i32_0 = arith.constant 0 : i32
    %c0_i32_1 = arith.constant 0 : i32
    return %c0_i32, %c0_i32_0 : i32, i32
  }
  func.func @transform_3(%arg0: i32) -> (i32, i32) {
    %c0_i32 = arith.constant 0 : i32
    %c0_i32_0 = arith.constant 0 : i32
    %c0_i32_1 = arith.constant 0 : i32
    return %c0_i32, %c0_i32_0 : i32, i32
  }
  func.func @transform_4(%arg0: i32) -> (i32, i32) {
    %c0_i32 = arith.constant 0 : i32
    %c0_i32_0 = arith.constant 0 : i32
    %c0_i32_1 = arith.constant 0 : i32
    return %c0_i32, %c0_i32_0 : i32, i32
  }
  func.func @transform_5(%arg0: i32) -> (i32, i32) {
    %c0_i32 = arith.constant 0 : i32
    %c0_i32_0 = arith.constant 0 : i32
    %c0_i32_1 = arith.constant 0 : i32
    return %c0_i32, %c0_i32_0 : i32, i32
  }
  func.func @transform_6(%arg0: i32) -> (i32, i32) {
    %c0_i32 = arith.constant 0 : i32
    %c0_i32_0 = arith.constant 0 : i32
    %c0_i32_1 = arith.constant 0 : i32
    return %c0_i32, %c0_i32_0 : i32, i32
  }
  func.func @transform_7(%arg0: i32) -> (i32, i32) {
    %c0_i32 = arith.constant 0 : i32
    %c0_i32_0 = arith.constant 0 : i32
    %c0_i32_1 = arith.constant 0 : i32
    return %c0_i32, %c0_i32_0 : i32, i32
  }
  func.func @transform_8(%arg0: i32) -> (i32, i32) {
    %c0_i32 = arith.constant 0 : i32
    %c0_i32_0 = arith.constant 0 : i32
    %c0_i32_1 = arith.constant 0 : i32
    return %c0_i32, %c0_i32_0 : i32, i32
  }
  func.func @transform_9(%arg0: i32) -> (i32, i32) {
    %c0_i32 = arith.constant 0 : i32
    %c0_i32_0 = arith.constant 0 : i32
    %c0_i32_1 = arith.constant 0 : i32
    return %c0_i32, %c0_i32_0 : i32, i32
  }
  func.func @transform_10(%arg0: i32) -> (i32, i32) {
    %c0_i32 = arith.constant 0 : i32
    %c0_i32_0 = arith.constant 0 : i32
    %c0_i32_1 = arith.constant 0 : i32
    return %c0_i32, %c0_i32_0 : i32, i32
  }
  func.func @transform_11(%arg0: i32) -> (i32, i32) {
    %c0_i32 = arith.constant 0 : i32
    %c0_i32_0 = arith.constant 0 : i32
    return %arg0, %c0_i32 : i32, i32
  }
}

module attributes {stable_mosaic.version = 11 : i64} {
  func.func @ecc_kernel(%arg0: i32, %arg1: memref<304x128xbf16, #tpu.memory_space<vmem>>, %arg2: memref<128x256xbf16, #tpu.memory_space<vmem>>, %arg3: memref<1x256xf32, #tpu.memory_space<vmem>>, %arg4: memref<128x128xbf16, #tpu.memory_space<vmem>>, %arg5: memref<1x128xf32, #tpu.memory_space<vmem>>, %arg6: memref<128x128xbf16, #tpu.memory_space<vmem>>, %arg7: memref<1x128xf32, #tpu.memory_space<vmem>>, %arg8: memref<128x128xbf16, #tpu.memory_space<vmem>>, %arg9: memref<1x128xf32, #tpu.memory_space<vmem>>, %arg10: memref<128x128xbf16, #tpu.memory_space<vmem>>, %arg11: memref<1x128xf32, #tpu.memory_space<vmem>>, %arg12: memref<304x128xf32, #tpu.memory_space<vmem>>) attributes {dimension_semantics = [#tpu.dimension_semantics<parallel>], iteration_bounds = array<i64: 2>, scalar_prefetch = 0 : i64, scratch_operands = 0 : i64, tpu.core_type = #tpu.core_type<tc>, window_params = [{transform_indices = @transform_0, window_bounds = array<i64: 304, 128>}, {pipeline_mode = #tpu.pipeline_mode<synchronous>, transform_indices = @transform_1, window_bounds = array<i64: 128, 256>}, {pipeline_mode = #tpu.pipeline_mode<synchronous>, transform_indices = @transform_2, window_bounds = array<i64: 1, 256>}, {pipeline_mode = #tpu.pipeline_mode<synchronous>, transform_indices = @transform_3, window_bounds = array<i64: 128, 128>}, {pipeline_mode = #tpu.pipeline_mode<synchronous>, transform_indices = @transform_4, window_bounds = array<i64: 1, 128>}, {pipeline_mode = #tpu.pipeline_mode<synchronous>, transform_indices = @transform_5, window_bounds = array<i64: 128, 128>}, {pipeline_mode = #tpu.pipeline_mode<synchronous>, transform_indices = @transform_6, window_bounds = array<i64: 1, 128>}, {pipeline_mode = #tpu.pipeline_mode<synchronous>, transform_indices = @transform_7, window_bounds = array<i64: 128, 128>}, {pipeline_mode = #tpu.pipeline_mode<synchronous>, transform_indices = @transform_8, window_bounds = array<i64: 1, 128>}, {pipeline_mode = #tpu.pipeline_mode<synchronous>, transform_indices = @transform_9, window_bounds = array<i64: 128, 128>}, {pipeline_mode = #tpu.pipeline_mode<synchronous>, transform_indices = @transform_10, window_bounds = array<i64: 1, 128>}, {transform_indices = @transform_11, window_bounds = array<i64: 304, 128>}]} {
    %c0 = arith.constant 0 : index
    %c0_0 = arith.constant 0 : index
    %0 = vector.load %arg1[%c0, %c0_0] : memref<304x128xbf16, #tpu.memory_space<vmem>>, vector<304x128xbf16>
    %c0_1 = arith.constant 0 : index
    %c0_2 = arith.constant 0 : index
    %1 = vector.load %arg2[%c0_1, %c0_2] : memref<128x256xbf16, #tpu.memory_space<vmem>>, vector<128x256xbf16>
    %cst = arith.constant dense<0.000000e+00> : vector<304x256xf32>
    %2 = tpu.matmul %0, %1, %cst {dimension_numbers = #tpu.dot_dimension_numbers<[1], [0], [0], [1], [0, 0, 1, 1], [], []>} : vector<304x128xbf16>, vector<128x256xbf16>, vector<304x256xf32> -> vector<304x256xf32>
    %c0_3 = arith.constant 0 : index
    %c0_4 = arith.constant 0 : index
    %3 = vector.load %arg3[%c0_3, %c0_4] : memref<1x256xf32, #tpu.memory_space<vmem>>, vector<1x256xf32>
    %4 = vector.broadcast %3 : vector<1x256xf32> to vector<304x256xf32>
    %5 = arith.addf %2, %4 : vector<304x256xf32>
    %6 = vector.extract_strided_slice %5 {offsets = [0, 0], sizes = [304, 128], strides = [1, 1]} : vector<304x256xf32> to vector<304x128xf32>
    %7 = arith.truncf %6 : vector<304x128xf32> to vector<304x128xbf16>
    %cst_5 = arith.constant 0.000000e+00 : bf16
    %8 = vector.broadcast %cst_5 : bf16 to vector<304x128xbf16>
    %9 = arith.cmpf ogt, %7, %8 : vector<304x128xbf16>
    %cst_6 = arith.constant 2.001950e-01 : bf16
    %10 = vector.broadcast %cst_6 : bf16 to vector<304x128xbf16>
    %11 = arith.mulf %10, %7 : vector<304x128xbf16>
    %12 = arith.select %9, %7, %11 : vector<304x128xi1>, vector<304x128xbf16>
    %13 = vector.extract_strided_slice %5 {offsets = [0, 128], sizes = [304, 128], strides = [1, 1]} : vector<304x256xf32> to vector<304x128xf32>
    %14 = arith.truncf %13 : vector<304x128xf32> to vector<304x128xbf16>
    %cst_7 = arith.constant 0.000000e+00 : bf16
    %15 = vector.broadcast %cst_7 : bf16 to vector<304x128xbf16>
    %16 = arith.maximumf %14, %15 : vector<304x128xbf16>
    %c0_8 = arith.constant 0 : index
    %c0_9 = arith.constant 0 : index
    %17 = vector.load %arg4[%c0_8, %c0_9] : memref<128x128xbf16, #tpu.memory_space<vmem>>, vector<128x128xbf16>
    %cst_10 = arith.constant dense<0.000000e+00> : vector<304x128xf32>
    %18 = tpu.matmul %12, %17, %cst_10 {dimension_numbers = #tpu.dot_dimension_numbers<[1], [0], [0], [1], [0, 0, 1, 1], [], []>} : vector<304x128xbf16>, vector<128x128xbf16>, vector<304x128xf32> -> vector<304x128xf32>
    %c0_11 = arith.constant 0 : index
    %c0_12 = arith.constant 0 : index
    %19 = vector.load %arg5[%c0_11, %c0_12] : memref<1x128xf32, #tpu.memory_space<vmem>>, vector<1x128xf32>
    %20 = vector.broadcast %19 : vector<1x128xf32> to vector<304x128xf32>
    %21 = arith.addf %18, %20 : vector<304x128xf32>
    %22 = arith.truncf %21 : vector<304x128xf32> to vector<304x128xbf16>
    %cst_13 = arith.constant 0.000000e+00 : bf16
    %23 = vector.broadcast %cst_13 : bf16 to vector<304x128xbf16>
    %24 = arith.cmpf ogt, %22, %23 : vector<304x128xbf16>
    %cst_14 = arith.constant 2.001950e-01 : bf16
    %25 = vector.broadcast %cst_14 : bf16 to vector<304x128xbf16>
    %26 = arith.mulf %25, %22 : vector<304x128xbf16>
    %27 = arith.select %24, %22, %26 : vector<304x128xi1>, vector<304x128xbf16>
    %c0_15 = arith.constant 0 : index
    %c0_16 = arith.constant 0 : index
    %28 = vector.load %arg6[%c0_15, %c0_16] : memref<128x128xbf16, #tpu.memory_space<vmem>>, vector<128x128xbf16>
    %cst_17 = arith.constant dense<0.000000e+00> : vector<304x128xf32>
    %29 = tpu.matmul %27, %28, %cst_17 {dimension_numbers = #tpu.dot_dimension_numbers<[1], [0], [0], [1], [0, 0, 1, 1], [], []>} : vector<304x128xbf16>, vector<128x128xbf16>, vector<304x128xf32> -> vector<304x128xf32>
    %c0_18 = arith.constant 0 : index
    %c0_19 = arith.constant 0 : index
    %30 = vector.load %arg7[%c0_18, %c0_19] : memref<1x128xf32, #tpu.memory_space<vmem>>, vector<1x128xf32>
    %31 = vector.broadcast %30 : vector<1x128xf32> to vector<304x128xf32>
    %32 = arith.addf %29, %31 : vector<304x128xf32>
    %33 = arith.truncf %32 : vector<304x128xf32> to vector<304x128xbf16>
    %cst_20 = arith.constant 0.000000e+00 : bf16
    %34 = vector.broadcast %cst_20 : bf16 to vector<304x128xbf16>
    %35 = arith.cmpf ogt, %33, %34 : vector<304x128xbf16>
    %cst_21 = arith.constant 2.001950e-01 : bf16
    %36 = vector.broadcast %cst_21 : bf16 to vector<304x128xbf16>
    %37 = arith.mulf %36, %33 : vector<304x128xbf16>
    %38 = arith.select %35, %33, %37 : vector<304x128xi1>, vector<304x128xbf16>
    %c0_22 = arith.constant 0 : index
    %c0_23 = arith.constant 0 : index
    %39 = vector.load %arg8[%c0_22, %c0_23] : memref<128x128xbf16, #tpu.memory_space<vmem>>, vector<128x128xbf16>
    %cst_24 = arith.constant dense<0.000000e+00> : vector<304x128xf32>
    %40 = tpu.matmul %38, %39, %cst_24 {dimension_numbers = #tpu.dot_dimension_numbers<[1], [0], [0], [1], [0, 0, 1, 1], [], []>} : vector<304x128xbf16>, vector<128x128xbf16>, vector<304x128xf32> -> vector<304x128xf32>
    %c0_25 = arith.constant 0 : index
    %c0_26 = arith.constant 0 : index
    %41 = vector.load %arg9[%c0_25, %c0_26] : memref<1x128xf32, #tpu.memory_space<vmem>>, vector<1x128xf32>
    %42 = vector.broadcast %41 : vector<1x128xf32> to vector<304x128xf32>
    %43 = arith.addf %40, %42 : vector<304x128xf32>
    %44 = arith.negf %43 : vector<304x128xf32>
    %45 = math.exp %44 : vector<304x128xf32>
    %cst_27 = arith.constant 1.000000e+00 : f32
    %46 = vector.broadcast %cst_27 : f32 to vector<304x128xf32>
    %47 = arith.addf %46, %45 : vector<304x128xf32>
    %48 = arith.divf %46, %47 : vector<304x128xf32>
    %c0_28 = arith.constant 0 : index
    %c0_29 = arith.constant 0 : index
    %49 = vector.load %arg10[%c0_28, %c0_29] : memref<128x128xbf16, #tpu.memory_space<vmem>>, vector<128x128xbf16>
    %cst_30 = arith.constant dense<0.000000e+00> : vector<304x128xf32>
    %50 = tpu.matmul %16, %49, %cst_30 {dimension_numbers = #tpu.dot_dimension_numbers<[1], [0], [0], [1], [0, 0, 1, 1], [], []>} : vector<304x128xbf16>, vector<128x128xbf16>, vector<304x128xf32> -> vector<304x128xf32>
    %c0_31 = arith.constant 0 : index
    %c0_32 = arith.constant 0 : index
    %51 = vector.load %arg11[%c0_31, %c0_32] : memref<1x128xf32, #tpu.memory_space<vmem>>, vector<1x128xf32>
    %52 = vector.broadcast %51 : vector<1x128xf32> to vector<304x128xf32>
    %53 = arith.addf %50, %52 : vector<304x128xf32>
    %54 = arith.negf %53 : vector<304x128xf32>
    %55 = math.exp %54 : vector<304x128xf32>
    %cst_33 = arith.constant 1.000000e+00 : f32
    %56 = vector.broadcast %cst_33 : f32 to vector<304x128xf32>
    %57 = arith.addf %56, %55 : vector<304x128xf32>
    %58 = arith.divf %56, %57 : vector<304x128xf32>
    %cst_34 = arith.constant 5.000000e-01 : f32
    %59 = vector.broadcast %cst_34 : f32 to vector<304x128xf32>
    %60 = arith.subf %58, %59 : vector<304x128xf32>
    %cst_35 = arith.constant 2.000000e-01 : f32
    %61 = vector.broadcast %cst_35 : f32 to vector<304x128xf32>
    %62 = arith.mulf %60, %61 : vector<304x128xf32>
    %cst_36 = arith.constant 5.000000e-01 : f32
    %63 = vector.broadcast %cst_36 : f32 to vector<304x128xf32>
    %64 = arith.addf %63, %62 : vector<304x128xf32>
    %65 = arith.cmpf ogt, %48, %64 : vector<304x128xf32>
    %66 = arith.extui %65 : vector<304x128xi1> to vector<304x128xi32>
    %67 = arith.sitofp %66 : vector<304x128xi32> to vector<304x128xf32>
    %c0_37 = arith.constant 0 : index
    %c0_38 = arith.constant 0 : index
    %68 = vector.load %arg12[%c0_37, %c0_38] : memref<304x128xf32, #tpu.memory_space<vmem>>, vector<304x128xf32>
    tpu.vector_store %arg12[%c0_37, %c0_38], %67 {strides = array<i32>} : memref<304x128xf32, #tpu.memory_space<vmem>>, vector<304x128xf32>,
    return
  }
  func.func @transform_0(%arg0: i32) -> (i32, i32) {
    %c0_i32 = arith.constant 0 : i32
    %c0_i32_0 = arith.constant 0 : i32
    return %arg0, %c0_i32 : i32, i32
  }
  func.func @transform_1(%arg0: i32) -> (i32, i32) {
    %c0_i32 = arith.constant 0 : i32
    %c0_i32_0 = arith.constant 0 : i32
    %c0_i32_1 = arith.constant 0 : i32
    return %c0_i32, %c0_i32_0 : i32, i32
  }
  func.func @transform_2(%arg0: i32) -> (i32, i32) {
    %c0_i32 = arith.constant 0 : i32
    %c0_i32_0 = arith.constant 0 : i32
    %c0_i32_1 = arith.constant 0 : i32
    return %c0_i32, %c0_i32_0 : i32, i32
  }
  func.func @transform_3(%arg0: i32) -> (i32, i32) {
    %c0_i32 = arith.constant 0 : i32
    %c0_i32_0 = arith.constant 0 : i32
    %c0_i32_1 = arith.constant 0 : i32
    return %c0_i32, %c0_i32_0 : i32, i32
  }
  func.func @transform_4(%arg0: i32) -> (i32, i32) {
    %c0_i32 = arith.constant 0 : i32
    %c0_i32_0 = arith.constant 0 : i32
    %c0_i32_1 = arith.constant 0 : i32
    return %c0_i32, %c0_i32_0 : i32, i32
  }
  func.func @transform_5(%arg0: i32) -> (i32, i32) {
    %c0_i32 = arith.constant 0 : i32
    %c0_i32_0 = arith.constant 0 : i32
    %c0_i32_1 = arith.constant 0 : i32
    return %c0_i32, %c0_i32_0 : i32, i32
  }
  func.func @transform_6(%arg0: i32) -> (i32, i32) {
    %c0_i32 = arith.constant 0 : i32
    %c0_i32_0 = arith.constant 0 : i32
    %c0_i32_1 = arith.constant 0 : i32
    return %c0_i32, %c0_i32_0 : i32, i32
  }
  func.func @transform_7(%arg0: i32) -> (i32, i32) {
    %c0_i32 = arith.constant 0 : i32
    %c0_i32_0 = arith.constant 0 : i32
    %c0_i32_1 = arith.constant 0 : i32
    return %c0_i32, %c0_i32_0 : i32, i32
  }
  func.func @transform_8(%arg0: i32) -> (i32, i32) {
    %c0_i32 = arith.constant 0 : i32
    %c0_i32_0 = arith.constant 0 : i32
    %c0_i32_1 = arith.constant 0 : i32
    return %c0_i32, %c0_i32_0 : i32, i32
  }
  func.func @transform_9(%arg0: i32) -> (i32, i32) {
    %c0_i32 = arith.constant 0 : i32
    %c0_i32_0 = arith.constant 0 : i32
    %c0_i32_1 = arith.constant 0 : i32
    return %c0_i32, %c0_i32_0 : i32, i32
  }
  func.func @transform_10(%arg0: i32) -> (i32, i32) {
    %c0_i32 = arith.constant 0 : i32
    %c0_i32_0 = arith.constant 0 : i32
    %c0_i32_1 = arith.constant 0 : i32
    return %c0_i32, %c0_i32_0 : i32, i32
  }
  func.func @transform_11(%arg0: i32) -> (i32, i32) {
    %c0_i32 = arith.constant 0 : i32
    %c0_i32_0 = arith.constant 0 : i32
    return %arg0, %c0_i32 : i32, i32
  }
}

</mosaic_0001>

<llo_original>
// kernel: _ecc_impl.1
$region0: #{_ecc_impl.1}
  #allocation0 [shape = 'u32[]', space=smem, size = 0x4, offset = 0x4, fixed_abs, tag = 'smem constant byte address 0x4 - core index']
  #allocation1 [shape = 'u32[144,128]{1,0:T(1,128)}', space=vmem, size = 0x12000, scoped, tag = 'internal scratch']
  %s0 = inlined_call_operand.vmem [shape: bf16[608,128], index: 0, kind: input, shape index: {}]
  %s1 = inlined_call_operand.vmem [shape: bf16[128,256], index: 1, kind: input, shape index: {}]
  %s2 = inlined_call_operand.vmem [shape: f32[1,256], index: 2, kind: input, shape index: {}]
  %s3 = inlined_call_operand.vmem [shape: bf16[128,128], index: 3, kind: input, shape index: {}]
  %s4 = inlined_call_operand.vmem [shape: f32[1,128], index: 4, kind: input, shape index: {}]
  %s5 = inlined_call_operand.vmem [shape: bf16[128,128], index: 5, kind: input, shape index: {}]
  %s6 = inlined_call_operand.vmem [shape: f32[1,128], index: 6, kind: input, shape index: {}]
  %s7 = inlined_call_operand.vmem [shape: bf16[128,128], index: 7, kind: input, shape index: {}]
  %s8 = inlined_call_operand.vmem [shape: f32[1,128], index: 8, kind: input, shape index: {}]
  %s9 = inlined_call_operand.vmem [shape: bf16[128,128], index: 9, kind: input, shape index: {}]
  %s10 = inlined_call_operand.vmem [shape: f32[1,128], index: 10, kind: input, shape index: {}]
  %s11 = inlined_call_operand.vmem [shape: f32[608,128], index: 11, kind: output, shape index: {}]
  %s12 = sld [smem:[#allocation0]]
  $region77: #{_ecc_impl.1} parent=0
    _
  %s14 = ssub.s32 1, %s12
  %s15 = scalar_select 0, %s14, %s12
  loop: start=0, step=1, limit=4
  $region2: #{_ecc_impl.1} parent=0 // loop_pre_header
    _
  $region3: #{_ecc_impl.1} parent=0 // loop_header
    %s17 = sphi 0, %s21
    %p18 = scmp.ge.s32.totalorder %s17, 4
    %s27 = sphi 0, %s29
    %s30 = sphi 0, %s27
    %s31 = sphi 0, %s30
    %s47 = sphi 0, %s31
    %s51 = sphi 0, %s51
    %s53 = sphi 0, %s51
    %s54 = sphi 0, %s53
    %s68 = sphi 0, %s54
    %s72 = sphi 0, %s72
    %s74 = sphi 0, %s72
    %s75 = sphi 0, %s74
    %s89 = sphi 0, %s75
    %s93 = sphi 0, %s93
    %s95 = sphi 0, %s93
    %s96 = sphi 0, %s95
    %s110 = sphi 0, %s96
    %s114 = sphi 0, %s114
    %s116 = sphi 0, %s114
    %s117 = sphi 0, %s116
    %s131 = sphi 0, %s117
    %s135 = sphi 0, %s135
    %s137 = sphi 0, %s135
    %s138 = sphi 0, %s137
    %s152 = sphi 0, %s138
    %s156 = sphi 0, %s156
    %s158 = sphi 0, %s156
    %s159 = sphi 0, %s158
    %s173 = sphi 0, %s159
    %s177 = sphi 0, %s177
    %s179 = sphi 0, %s177
    %s180 = sphi 0, %s179
    %s194 = sphi 0, %s180
    %s198 = sphi 0, %s198
    %s200 = sphi 0, %s198
    %s201 = sphi 0, %s200
    %s215 = sphi 0, %s201
    %s219 = sphi 0, %s219
    %s221 = sphi 0, %s219
    %s222 = sphi 0, %s221
    %s236 = sphi 0, %s222
    %s240 = sphi 0, %s240
    %s242 = sphi 0, %s240
    %s243 = sphi 0, %s242
    %s257 = sphi 0, %s243
    %s263 = sphi 0, %s265
    %s266 = sphi 0, %s263
    %s267 = sphi 0, %s266
    %s283 = sphi 0, %s267
  $region4: #{_ecc_impl.1} parent=0 // loop_header_branch
    %20 = sbr.rel (%p18) target = $region8
  $region5: #{_ecc_impl.1} parent=0 // loop_body
    %s22 = ssub.s32 %s17, 1
    %s23 = ssub.s32 %s17, 2
    %s24 = sadd.s32 %s17, 1
    %s25 = ssub.s32 %s17, %s24
    %p26 = scmp.eq.s32.totalorder %s25, 0
    %s28 = sadd.s32 %s27, 1
    %s29 = scalar_select %p26, %s27, %s28
    %p32 = pneg %p26
    %p33 = scmp.eq.s32.totalorder %s17, 1
    %p34 = por %p32, %p33
    %p35 = scmp.ne.s32.totalorder %s27, %s30
    %p36 = scmp.eq.s32.totalorder %s17, 0
    %p37 = por %p35, %p36
    %p38 = scmp.ne.s32.totalorder %s27, %s30
    %p39 = scmp.eq.s32.totalorder %s22, 1
    %p40 = por %p38, %p39
    %p41 = scmp.ne.s32.totalorder %s30, %s31
    %p42 = scmp.eq.s32.totalorder %s22, 0
    %p43 = por %p41, %p42
    %p44 = scmp.ne.s32.totalorder %s30, %s31
    %p45 = scmp.eq.s32.totalorder %s23, 1
    %p46 = por %p44, %p45
    %p48 = scmp.ne.s32.totalorder %s31, %s47
    %p49 = scmp.eq.s32.totalorder %s23, 0
    %p50 = por %p48, %p49
    %s52 = sadd.s32 %s51, 1
    %p55 = scmp.eq.s32.totalorder %s17, 1
    %p56 = scmp.ne.s32.totalorder %s51, %s53
    %p57 = scmp.eq.s32.totalorder %s17, 0
    %p58 = por %p56, %p57
    %p59 = scmp.ne.s32.totalorder %s51, %s53
    %p60 = scmp.eq.s32.totalorder %s22, 1
    %p61 = por %p59, %p60
    %p62 = scmp.ne.s32.totalorder %s53, %s54
    %p63 = scmp.eq.s32.totalorder %s22, 0
    %p64 = por %p62, %p63
    %p65 = scmp.ne.s32.totalorder %s53, %s54
    %p66 = scmp.eq.s32.totalorder %s23, 1
    %p67 = por %p65, %p66
    %p69 = scmp.ne.s32.totalorder %s54, %s68
    %p70 = scmp.eq.s32.totalorder %s23, 0
    %p71 = por %p69, %p70
    %s73 = sadd.s32 %s72, 1
    %p76 = scmp.eq.s32.totalorder %s17, 1
    %p77 = scmp.ne.s32.totalorder %s72, %s74
    %p78 = scmp.eq.s32.totalorder %s17, 0
    %p79 = por %p77, %p78
    %p80 = scmp.ne.s32.totalorder %s72, %s74
    %p81 = scmp.eq.s32.totalorder %s22, 1
    %p82 = por %p80, %p81
    %p83 = scmp.ne.s32.totalorder %s74, %s75
    %p84 = scmp.eq.s32.totalorder %s22, 0
    %p85 = por %p83, %p84
    %p86 = scmp.ne.s32.totalorder %s74, %s75
    %p87 = scmp.eq.s32.totalorder %s23, 1
    %p88 = por %p86, %p87
    %p90 = scmp.ne.s32.totalorder %s75, %s89
    %p91 = scmp.eq.s32.totalorder %s23, 0
    %p92 = por %p90, %p91
    %s94 = sadd.s32 %s93, 1
    %p97 = scmp.eq.s32.totalorder %s17, 1
    %p98 = scmp.ne.s32.totalorder %s93, %s95
    %p99 = scmp.eq.s32.totalorder %s17, 0
    %p100 = por %p98, %p99
    %p101 = scmp.ne.s32.totalorder %s93, %s95
    %p102 = scmp.eq.s32.totalorder %s22, 1
    %p103 = por %p101, %p102
    %p104 = scmp.ne.s32.totalorder %s95, %s96
    %p105 = scmp.eq.s32.totalorder %s22, 0
    %p106 = por %p104, %p105
    %p107 = scmp.ne.s32.totalorder %s95, %s96
    %p108 = scmp.eq.s32.totalorder %s23, 1
    %p109 = por %p107, %p108
    %p111 = scmp.ne.s32.totalorder %s96, %s110
    %p112 = scmp.eq.s32.totalorder %s23, 0
    %p113 = por %p111, %p112
    %s115 = sadd.s32 %s114, 1
    %p118 = scmp.eq.s32.totalorder %s17, 1
    %p119 = scmp.ne.s32.totalorder %s114, %s116
    %p120 = scmp.eq.s32.totalorder %s17, 0
    %p121 = por %p119, %p120
    %p122 = scmp.ne.s32.totalorder %s114, %s116
    %p123 = scmp.eq.s32.totalorder %s22, 1
    %p124 = por %p122, %p123
    %p125 = scmp.ne.s32.totalorder %s116, %s117
    %p126 = scmp.eq.s32.totalorder %s22, 0
    %p127 = por %p125, %p126
    %p128 = scmp.ne.s32.totalorder %s116, %s117
    %p129 = scmp.eq.s32.totalorder %s23, 1
    %p130 = por %p128, %p129
    %p132 = scmp.ne.s32.totalorder %s117, %s131
    %p133 = scmp.eq.s32.totalorder %s23, 0
    %p134 = por %p132, %p133
    %s136 = sadd.s32 %s135, 1
    %p139 = scmp.eq.s32.totalorder %s17, 1
    %p140 = scmp.ne.s32.totalorder %s135, %s137
    %p141 = scmp.eq.s32.totalorder %s17, 0
    %p142 = por %p140, %p141
    %p143 = scmp.ne.s32.totalorder %s135, %s137
    %p144 = scmp.eq.s32.totalorder %s22, 1
    %p145 = por %p143, %p144
    %p146 = scmp.ne.s32.totalorder %s137, %s138
    %p147 = scmp.eq.s32.totalorder %s22, 0
    %p148 = por %p146, %p147
    %p149 = scmp.ne.s32.totalorder %s137, %s138
    %p150 = scmp.eq.s32.totalorder %s23, 1
    %p151 = por %p149, %p150
    %p153 = scmp.ne.s32.totalorder %s138, %s152
    %p154 = scmp.eq.s32.totalorder %s23, 0
    %p155 = por %p153, %p154
    %s157 = sadd.s32 %s156, 1
    %p160 = scmp.eq.s32.totalorder %s17, 1
    %p161 = scmp.ne.s32.totalorder %s156, %s158
    %p162 = scmp.eq.s32.totalorder %s17, 0
    %p163 = por %p161, %p162
    %p164 = scmp.ne.s32.totalorder %s156, %s158
    %p165 = scmp.eq.s32.totalorder %s22, 1
    %p166 = por %p164, %p165
    %p167 = scmp.ne.s32.totalorder %s158, %s159
    %p168 = scmp.eq.s32.totalorder %s22, 0
    %p169 = por %p167, %p168
    %p170 = scmp.ne.s32.totalorder %s158, %s159
    %p171 = scmp.eq.s32.totalorder %s23, 1
    %p172 = por %p170, %p171
    %p174 = scmp.ne.s32.totalorder %s159, %s173
    %p175 = scmp.eq.s32.totalorder %s23, 0
    %p176 = por %p174, %p175
    %s178 = sadd.s32 %s177, 1
    %p181 = scmp.eq.s32.totalorder %s17, 1
    %p182 = scmp.ne.s32.totalorder %s177, %s179
    %p183 = scmp.eq.s32.totalorder %s17, 0
    %p184 = por %p182, %p183
    %p185 = scmp.ne.s32.totalorder %s177, %s179
    %p186 = scmp.eq.s32.totalorder %s22, 1
    %p187 = por %p185, %p186
    %p188 = scmp.ne.s32.totalorder %s179, %s180
    %p189 = scmp.eq.s32.totalorder %s22, 0
    %p190 = por %p188, %p189
    %p191 = scmp.ne.s32.totalorder %s179, %s180
    %p192 = scmp.eq.s32.totalorder %s23, 1
    %p193 = por %p191, %p192
    %p195 = scmp.ne.s32.totalorder %s180, %s194
    %p196 = scmp.eq.s32.totalorder %s23, 0
    %p197 = por %p195, %p196
    %s199 = sadd.s32 %s198, 1
    %p202 = scmp.eq.s32.totalorder %s17, 1
    %p203 = scmp.ne.s32.totalorder %s198, %s200
    %p204 = scmp.eq.s32.totalorder %s17, 0
    %p205 = por %p203, %p204
    %p206 = scmp.ne.s32.totalorder %s198, %s200
    %p207 = scmp.eq.s32.totalorder %s22, 1
    %p208 = por %p206, %p207
    %p209 = scmp.ne.s32.totalorder %s200, %s201
    %p210 = scmp.eq.s32.totalorder %s22, 0
    %p211 = por %p209, %p210
    %p212 = scmp.ne.s32.totalorder %s200, %s201
    %p213 = scmp.eq.s32.totalorder %s23, 1
    %p214 = por %p212, %p213
    %p216 = scmp.ne.s32.totalorder %s201, %s215
    %p217 = scmp.eq.s32.totalorder %s23, 0
    %p218 = por %p216, %p217
    %s220 = sadd.s32 %s219, 1
    %p223 = scmp.eq.s32.totalorder %s17, 1
    %p224 = scmp.ne.s32.totalorder %s219, %s221
    %p225 = scmp.eq.s32.totalorder %s17, 0
    %p226 = por %p224, %p225
    %p227 = scmp.ne.s32.totalorder %s219, %s221
    %p228 = scmp.eq.s32.totalorder %s22, 1
    %p229 = por %p227, %p228
    %p230 = scmp.ne.s32.totalorder %s221, %s222
    %p231 = scmp.eq.s32.totalorder %s22, 0
    %p232 = por %p230, %p231
    %p233 = scmp.ne.s32.totalorder %s221, %s222
    %p234 = scmp.eq.s32.totalorder %s23, 1
    %p235 = por %p233, %p234
    %p237 = scmp.ne.s32.totalorder %s222, %s236
    %p238 = scmp.eq.s32.totalorder %s23, 0
    %p239 = por %p237, %p238
    %s241 = sadd.s32 %s240, 1
    %p244 = scmp.eq.s32.totalorder %s17, 1
    %p245 = scmp.ne.s32.totalorder %s240, %s242
    %p246 = scmp.eq.s32.totalorder %s17, 0
    %p247 = por %p245, %p246
    %p248 = scmp.ne.s32.totalorder %s240, %s242
    %p249 = scmp.eq.s32.totalorder %s22, 1
    %p250 = por %p248, %p249
    %p251 = scmp.ne.s32.totalorder %s242, %s243
    %p252 = scmp.eq.s32.totalorder %s22, 0
    %p253 = por %p251, %p252
    %p254 = scmp.ne.s32.totalorder %s242, %s243
    %p255 = scmp.eq.s32.totalorder %s23, 1
    %p256 = por %p254, %p255
    %p258 = scmp.ne.s32.totalorder %s243, %s257
    %p259 = scmp.eq.s32.totalorder %s23, 0
    %p260 = por %p258, %p259
    %s261 = ssub.s32 %s17, %s24
    %p262 = scmp.eq.s32.totalorder %s261, 0
    %s264 = sadd.s32 %s263, 1
    %s265 = scalar_select %p262, %s263, %s264
    %p268 = pneg %p262
    %p269 = scmp.eq.s32.totalorder %s17, 1
    %p270 = por %p268, %p269
    %p271 = scmp.ne.s32.totalorder %s263, %s266
    %p272 = scmp.eq.s32.totalorder %s17, 0
    %p273 = por %p271, %p272
    %p274 = scmp.ne.s32.totalorder %s263, %s266
    %p275 = scmp.eq.s32.totalorder %s22, 1
    %p276 = por %p274, %p275
    %p277 = scmp.ne.s32.totalorder %s266, %s267
    %p278 = scmp.eq.s32.totalorder %s22, 0
    %p279 = por %p277, %p278
    %p280 = scmp.ne.s32.totalorder %s266, %s267
    %p281 = scmp.eq.s32.totalorder %s23, 1
    %p282 = por %p280, %p281
    %p284 = scmp.ne.s32.totalorder %s267, %s283
    %p285 = scmp.eq.s32.totalorder %s23, 0
    %p286 = por %p284, %p285
    %p287 = scmp.le.s32.totalorder 1, %s17
    %p288 = scmp.lt.s32.totalorder %s17, 3
    %p289 = pnand %p287, %p288
    %p290 = pneg %p289
    // Predicated region
    $region9: #{_ecc_impl.1} parent=5 // pred_check
      _
    $region10: #{_ecc_impl.1} parent=5 // pred_check_branch
      %292 = sbr.rel (%p289) target = $region12
    $region11: #{_ecc_impl.1} parent=5 // pred_region
      %s293 = ssub.s32 %s17, 1
      // Predicated region
      $region13: #{_ecc_impl.1} parent=11 // pred_check
        %p294 = pneg %p64
      $region14: #{_ecc_impl.1} parent=11 // pred_check_branch
        %296 = sbr.rel (%p294) target = $region16
      $region15: #{_ecc_impl.1} parent=11 // pred_region
        _
      $region16: #{_ecc_impl.1} parent=11 // pred_fallthru
        _
      // Predicated region
      $region17: #{_ecc_impl.1} parent=11 // pred_check
        %p297 = pneg %p85
      $region18: #{_ecc_impl.1} parent=11 // pred_check_branch
        %299 = sbr.rel (%p297) target = $region20
      $region19: #{_ecc_impl.1} parent=11 // pred_region
        _
      $region20: #{_ecc_impl.1} parent=11 // pred_fallthru
        _
      // Predicated region
      $region21: #{_ecc_impl.1} parent=11 // pred_check
        %p300 = pneg %p106
      $region22: #{_ecc_impl.1} parent=11 // pred_check_branch
        %302 = sbr.rel (%p300) target = $region24
      $region23: #{_ecc_impl.1} parent=11 // pred_region
        _
      $region24: #{_ecc_impl.1} parent=11 // pred_fallthru
        _
      // Predicated region
      $region25: #{_ecc_impl.1} parent=11 // pred_check
        %p303 = pneg %p127
      $region26: #{_ecc_impl.1} parent=11 // pred_check_branch
        %305 = sbr.rel (%p303) target = $region28
      $region27: #{_ecc_impl.1} parent=11 // pred_region
        _
      $region28: #{_ecc_impl.1} parent=11 // pred_fallthru
        _
      // Predicated region
      $region29: #{_ecc_impl.1} parent=11 // pred_check
        %p306 = pneg %p148
      $region30: #{_ecc_impl.1} parent=11 // pred_check_branch
        %308 = sbr.rel (%p306) target = $region32
      $region31: #{_ecc_impl.1} parent=11 // pred_region
        _
      $region32: #{_ecc_impl.1} parent=11 // pred_fallthru
        _
      // Predicated region
      $region33: #{_ecc_impl.1} parent=11 // pred_check
        %p309 = pneg %p169
      $region34: #{_ecc_impl.1} parent=11 // pred_check_branch
        %311 = sbr.rel (%p309) target = $region36
      $region35: #{_ecc_impl.1} parent=11 // pred_region
        _
      $region36: #{_ecc_impl.1} parent=11 // pred_fallthru
        _
      // Predicated region
      $region37: #{_ecc_impl.1} parent=11 // pred_check
        %p312 = pneg %p190
      $region38: #{_ecc_impl.1} parent=11 // pred_check_branch
        %314 = sbr.rel (%p312) target = $region40
      $region39: #{_ecc_impl.1} parent=11 // pred_region
        _
      $region40: #{_ecc_impl.1} parent=11 // pred_fallthru
        _
      // Predicated region
      $region41: #{_ecc_impl.1} parent=11 // pred_check
        %p315 = pneg %p211
      $region42: #{_ecc_impl.1} parent=11 // pred_check_branch
        %317 = sbr.rel (%p315) target = $region44
      $region43: #{_ecc_impl.1} parent=11 // pred_region
        _
      $region44: #{_ecc_impl.1} parent=11 // pred_fallthru
        _
      // Predicated region
      $region45: #{_ecc_impl.1} parent=11 // pred_check
        %p318 = pneg %p232
      $region46: #{_ecc_impl.1} parent=11 // pred_check_branch
        %320 = sbr.rel (%p318) target = $region48
      $region47: #{_ecc_impl.1} parent=11 // pred_region
        _
      $region48: #{_ecc_impl.1} parent=11 // pred_fallthru
        _
      // Predicated region
      $region49: #{_ecc_impl.1} parent=11 // pred_check
        %p321 = pneg %p253
      $region50: #{_ecc_impl.1} parent=11 // pred_check_branch
        %323 = sbr.rel (%p321) target = $region52
      $region51: #{_ecc_impl.1} parent=11 // pred_region
        _
      $region52: #{_ecc_impl.1} parent=11 // pred_fallthru
        _
    $region12: #{_ecc_impl.1} parent=5 // pred_fallthru
      _
    %p324 = scmp.lt.s32.totalorder %s17, 2
    // Predicated region
    $region53: #{_ecc_impl.1} parent=5 // pred_check
      %p325 = pneg %p324
    $region54: #{_ecc_impl.1} parent=5 // pred_check_branch
      %327 = sbr.rel (%p325) target = $region56
    $region55: #{_ecc_impl.1} parent=5 // pred_region
      // Predicated region
      $region57: #{_ecc_impl.1} parent=55 // pred_check
        %p328 = pneg %p37
      $region58: #{_ecc_impl.1} parent=55 // pred_check_branch
        %330 = sbr.rel (%p328) target = $region60
      $region59: #{_ecc_impl.1} parent=55 // pred_region
        %s331 = smul.u32 38, %s17
        %p332 = scmp.lt.s32.totalorder %s331, 75
        %s333 = scalar_select %p332, %s331, 75
        %s334 = smul.addr %s333, 4
        %s335 = scalar_lea.vmem %s0, %s334
        %s336 = smul.u32 38, %s17
      $region60: #{_ecc_impl.1} parent=55 // pred_fallthru
        _
    $region56: #{_ecc_impl.1} parent=5 // pred_fallthru
      _
    %p337 = scmp.le.s32.totalorder 1, %s17
    %p338 = scmp.lt.s32.totalorder %s17, 3
    %p339 = pnand %p337, %p338
    %p340 = pneg %p339
    // Predicated region
    $region61: #{_ecc_impl.1} parent=5 // pred_check
      _
    $region62: #{_ecc_impl.1} parent=5 // pred_check_branch
      %342 = sbr.rel (%p339) target = $region64
    $region63: #{_ecc_impl.1} parent=5 // pred_region
      %s343 = ssub.s32 %s17, 1
      %s344 = smul.u32 38, %s22
      %p345 = scmp.lt.s32.totalorder %s344, 75
      %s346 = scalar_select %p345, %s344, 75
      %s347 = smul.addr %s346, 4
      %s348 = scalar_lea.vmem %s0, %s347
      %p349 = pneg %p43
      %p350 = pneg %p40
      %p351 = pneg %p64
      %p352 = pneg %p61
      %p353 = pneg %p85
      %p354 = pneg %p82
      %p355 = pneg %p106
      %p356 = pneg %p103
      %p357 = pneg %p127
      %p358 = pneg %p124
      %p359 = pneg %p148
      %p360 = pneg %p145
      %p361 = pneg %p169
      %p362 = pneg %p166
      %p363 = pneg %p190
      %p364 = pneg %p187
      %p365 = pneg %p211
      %p366 = pneg %p208
      %p367 = pneg %p232
      %p368 = pneg %p229
      %p369 = pneg %p253
      %p370 = pneg %p250
      %p371 = pneg %p279
      %p372 = pneg %p276
      %s373 = smul.u32 38, %s22
      %p374 = scmp.lt.s32.totalorder %s373, 75
      %s375 = scalar_select %p374, %s373, 75
      %s376 = smul.addr %s375, 8
      %s377 = scalar_lea.vmem %s11, %s376
      %s378 = smul.u32 38, %s22
      %p379 = scmp.lt.s32.totalorder %s378, 75
      %s380 = scalar_select %p379, %s378, 75
      %s381 = smul.addr %s380, 4
      %s382 = scalar_lea.vmem %s0, %s381
      %s383 = smul.u32 38, %s22
      %s384 = smul.u32 38, %s22
      %p385 = scmp.lt.s32.totalorder %s384, 75
      %s386 = scalar_select %p385, %s384, 75
      %s387 = smul.addr %s386, 8
      %s388 = scalar_lea.vmem %s11, %s387
      %s389 = smul.u32 38, %s22
      %v392 = vld [vmem:[%s382] sm:$0xf]
      %v393 = vld [vmem:[%s382 + $0x4] sm:$0xf]
      %v394 = vld [vmem:[%s382 + $0x8] sm:$0xf]
      %v395 = vld [vmem:[%s382 + $0xc] sm:$0xf]
      %v396 = vld [vmem:[%s382 + $0x10] sm:$0xf]
      %v397 = vld [vmem:[%s382 + $0x14] sm:$0xf]
      %v398 = vld [vmem:[%s382 + $0x18] sm:$0xf]
      %v399 = vld [vmem:[%s382 + $0x1c] sm:$0xf]
      %v400 = vld [vmem:[%s382 + $0x20] sm:$0xf]
      %v401 = vld [vmem:[%s382 + $0x24] sm:$0xf]
      %v402 = vld [vmem:[%s382 + $0x28] sm:$0xf]
      %v403 = vld [vmem:[%s382 + $0x2c] sm:$0xf]
      %v404 = vld [vmem:[%s382 + $0x30] sm:$0xf]
      %v405 = vld [vmem:[%s382 + $0x34] sm:$0xf]
      %v406 = vld [vmem:[%s382 + $0x38] sm:$0xf]
      %v407 = vld [vmem:[%s382 + $0x3c] sm:$0xf]
      %v408 = vld [vmem:[%s382 + $0x40] sm:$0xf]
      %v409 = vld [vmem:[%s382 + $0x44] sm:$0xf]
      %v410 = vld [vmem:[%s382 + $0x48] sm:$0xf]
      %v411 = vld [vmem:[%s382 + $0x4c] sm:$0xf]
      %v412 = vld [vmem:[%s382 + $0x50] sm:$0xf]
      %v413 = vld [vmem:[%s382 + $0x54] sm:$0xf]
      %v414 = vld [vmem:[%s382 + $0x58] sm:$0xf]
      %v415 = vld [vmem:[%s382 + $0x5c] sm:$0xf]
      %v416 = vld [vmem:[%s382 + $0x60] sm:$0xf]
      %v417 = vld [vmem:[%s382 + $0x64] sm:$0xf]
      %v418 = vld [vmem:[%s382 + $0x68] sm:$0xf]
      %v419 = vld [vmem:[%s382 + $0x6c] sm:$0xf]
      %v420 = vld [vmem:[%s382 + $0x70] sm:$0xf]
      %v421 = vld [vmem:[%s382 + $0x74] sm:$0xf]
      %v422 = vld [vmem:[%s382 + $0x78] sm:$0xf]
      %v423 = vld [vmem:[%s382 + $0x7c] sm:$0xf]
      %v424 = vld [vmem:[%s382 + $0x80] sm:$0xf]
      %v425 = vld [vmem:[%s382 + $0x84] sm:$0xf]
      %v426 = vld [vmem:[%s382 + $0x88] sm:$0xf]
      %v427 = vld [vmem:[%s382 + $0x8c] sm:$0xf]
      %v428 = vld [vmem:[%s382 + $0x90] sm:$0xf]
      %v429 = vld [vmem:[%s382 + $0x94] sm:$0xf]
      %v430 = vld [vmem:[%s1] sm:$0xff]
      %v431 = vld [vmem:[%s1 + $0x8] sm:$0xff]
      %v432 = vld [vmem:[%s1 + $0x10] sm:$0xff]
      %v433 = vld [vmem:[%s1 + $0x18] sm:$0xff]
      %v434 = vld [vmem:[%s1 + $0x20] sm:$0xff]
      %v435 = vld [vmem:[%s1 + $0x28] sm:$0xff]
      %v436 = vld [vmem:[%s1 + $0x30] sm:$0xff]
      %v437 = vld [vmem:[%s1 + $0x38] sm:$0xff]
      %v438 = vld [vmem:[%s1 + $0x40] sm:$0xff]
      %v439 = vld [vmem:[%s1 + $0x48] sm:$0xff]
      %v440 = vld [vmem:[%s1 + $0x50] sm:$0xff]
      %v441 = vld [vmem:[%s1 + $0x58] sm:$0xff]
      %v442 = vld [vmem:[%s1 + $0x60] sm:$0xff]
      %v443 = vld [vmem:[%s1 + $0x68] sm:$0xff]
      %v444 = vld [vmem:[%s1 + $0x70] sm:$0xff]
      %v445 = vld [vmem:[%s1 + $0x78] sm:$0xff]
      %v446 = vld [vmem:[%s2] sm:$0x3]
      %v448 = vlaneseq
      %v449 = vshrl.u32 %v448, 7
      %v450 = vsub.s32 0, %v449
      %v451 = vrot.slane %v446, %v450
      %v452 = vlaneseq
      %v453 = vshrl.u32 %v452, 7
      %v454 = vsub.s32 1, %v453
      %v455 = vrot.slane %v446, %v454
      %v496 = vunpack.c.l.b16 %v392
      %v497 = vunpack.c.l.b16 %v393
      %v498 = vunpack.c.l.b16 %v394
      %v499 = vunpack.c.l.b16 %v395
      %v500 = vunpack.c.l.b16 %v396
      %v501 = vunpack.c.l.b16 %v397
      %v502 = vunpack.c.l.b16 %v398
      %v503 = vunpack.c.l.b16 %v399
      %v504 = vunpack.c.l.b16 %v400
      %v505 = vunpack.c.l.b16 %v401
      %v506 = vunpack.c.l.b16 %v402
      %v507 = vunpack.c.l.b16 %v403
      %v508 = vunpack.c.l.b16 %v404
      %v509 = vunpack.c.l.b16 %v405
      %v510 = vunpack.c.l.b16 %v406
      %v511 = vunpack.c.l.b16 %v407
      %v512 = vunpack.c.l.b16 %v408
      %v513 = vunpack.c.l.b16 %v409
      %v514 = vunpack.c.l.b16 %v410
      %v515 = vunpack.c.l.b16 %v411
      %v516 = vunpack.c.l.b16 %v412
      %v517 = vunpack.c.l.b16 %v413
      %v518 = vunpack.c.l.b16 %v414
      %v519 = vunpack.c.l.b16 %v415
      %v520 = vunpack.c.l.b16 %v416
      %v521 = vunpack.c.l.b16 %v417
      %v522 = vunpack.c.l.b16 %v418
      %v523 = vunpack.c.l.b16 %v419
      %v524 = vunpack.c.l.b16 %v420
      %v525 = vunpack.c.l.b16 %v421
      %v526 = vunpack.c.l.b16 %v422
      %v527 = vunpack.c.l.b16 %v423
      %v528 = vunpack.c.l.b16 %v424
      %v529 = vunpack.c.l.b16 %v425
      %v530 = vunpack.c.l.b16 %v426
      %v531 = vunpack.c.l.b16 %v427
      %v532 = vunpack.c.l.b16 %v428
      %v533 = vunpack.c.l.b16 %v429
      %v534 = vpack.c.b16 %v497, %v496
      %v535 = vpack.c.b16 %v499, %v498
      %v536 = vpack.c.b16 %v501, %v500
      %v537 = vpack.c.b16 %v503, %v502
      %v538 = vpack.c.b16 %v505, %v504
      %v539 = vpack.c.b16 %v507, %v506
      %v540 = vpack.c.b16 %v509, %v508
      %v541 = vpack.c.b16 %v511, %v510
      %v542 = vpack.c.b16 %v513, %v512
      %v543 = vpack.c.b16 %v515, %v514
      %v544 = vpack.c.b16 %v517, %v516
      %v545 = vpack.c.b16 %v519, %v518
      %v546 = vpack.c.b16 %v521, %v520
      %v547 = vpack.c.b16 %v523, %v522
      %v548 = vpack.c.b16 %v525, %v524
      %v549 = vpack.c.b16 %v527, %v526
      %v550 = vpack.c.b16 %v529, %v528
      %v551 = vpack.c.b16 %v531, %v530
      %v552 = vpack.c.b16 %v533, %v532
      %v588 = vunpack.c.l.b16 %v430
      %v589 = vunpack.c.h.b16 %v430
      %v590 = vunpack.c.l.b16 %v431
      %v591 = vunpack.c.h.b16 %v431
      %v592 = vunpack.c.l.b16 %v432
      %v593 = vunpack.c.h.b16 %v432
      %v594 = vunpack.c.l.b16 %v433
      %v595 = vunpack.c.h.b16 %v433
      %v596 = vunpack.c.l.b16 %v434
      %v597 = vunpack.c.h.b16 %v434
      %v598 = vunpack.c.l.b16 %v435
      %v599 = vunpack.c.h.b16 %v435
      %v600 = vunpack.c.l.b16 %v436
      %v601 = vunpack.c.h.b16 %v436
      %v602 = vunpack.c.l.b16 %v437
      %v603 = vunpack.c.h.b16 %v437
      %v604 = vunpack.c.l.b16 %v438
      %v605 = vunpack.c.h.b16 %v438
      %v606 = vunpack.c.l.b16 %v439
      %v607 = vunpack.c.h.b16 %v439
      %v608 = vunpack.c.l.b16 %v440
      %v609 = vunpack.c.h.b16 %v440
      %v610 = vunpack.c.l.b16 %v441
      %v611 = vunpack.c.h.b16 %v441
      %v612 = vunpack.c.l.b16 %v442
      %v613 = vunpack.c.h.b16 %v442
      %v614 = vunpack.c.l.b16 %v443
      %v615 = vunpack.c.h.b16 %v443
      %v616 = vunpack.c.l.b16 %v444
      %v617 = vunpack.c.h.b16 %v444
      %v618 = vunpack.c.l.b16 %v445
      %v619 = vunpack.c.h.b16 %v445
      %v620 = vpack.c.b16 %v590, %v588
      %v621 = vpack.c.b16 %v591, %v589
      %v622 = vpack.c.b16 %v594, %v592
      %v623 = vpack.c.b16 %v595, %v593
      %v624 = vpack.c.b16 %v598, %v596
      %v625 = vpack.c.b16 %v599, %v597
      %v626 = vpack.c.b16 %v602, %v600
      %v627 = vpack.c.b16 %v603, %v601
      %v628 = vpack.c.b16 %v606, %v604
      %v629 = vpack.c.b16 %v607, %v605
      %v630 = vpack.c.b16 %v610, %v608
      %v631 = vpack.c.b16 %v611, %v609
      %v632 = vpack.c.b16 %v614, %v612
      %v633 = vpack.c.b16 %v615, %v613
      %v634 = vpack.c.b16 %v618, %v616
      %v635 = vpack.c.b16 %v619, %v617
      %652 = vmatprep.subr.bf16.mxu0 %v621
      %653 = vmatpush1.bf16.msra.mxu0 %v620
      %654 = vmatprep.subr.bf16.mxu0 %v623
      %655 = vmatpush1.bf16.msra.mxu0 %v622
      %656 = vmatprep.subr.bf16.mxu0 %v625
      %657 = vmatpush1.bf16.msra.mxu0 %v624
      %658 = vmatprep.subr.bf16.mxu0 %v627
      %659 = vmatpush1.bf16.msra.mxu0 %v626
      %660 = vmatprep.subr.bf16.mxu0 %v629
      %661 = vmatpush1.bf16.msra.mxu0 %v628
      %662 = vmatprep.subr.bf16.mxu0 %v631
      %663 = vmatpush1.bf16.msra.mxu0 %v630
      %664 = vmatprep.subr.bf16.mxu0 %v633
      %665 = vmatpush1.bf16.msra.mxu0 %v632
      %666 = vmatprep.subr.bf16.mxu0 %v635
      %667 = vmatpush1.bf16.msra.mxu0 %v634
      %668 = vmatprep.subr.bf16.mxu0 0
      %669 = vmatpush1.bf16.msra.mxu0 0
      %670 = vmatprep.subr.bf16.mxu0 0
      %671 = vmatpush1.bf16.msra.mxu0 0
      %672 = vmatprep.subr.bf16.mxu0 0
      %673 = vmatpush1.bf16.msra.mxu0 0
      %674 = vmatprep.subr.bf16.mxu0 0
      %675 = vmatpush1.bf16.msra.mxu0 0
      %676 = vmatprep.subr.bf16.mxu0 0
      %677 = vmatpush1.bf16.msra.mxu0 0
      %678 = vmatprep.subr.bf16.mxu0 0
      %679 = vmatpush1.bf16.msra.mxu0 0
      %680 = vmatprep.subr.bf16.mxu0 0
      %681 = vmatpush1.bf16.msra.mxu0 0
      %682 = vmatprep.subr.bf16.mxu0 0
      %683 = vmatpush1.bf16.msra.mxu0 0
      %684 = vmatprep.mubr.bf16.mxu0 0
      %685 = vmatmul.mubr.bf16.gmra.mrb[0].mxu0 %v534
      %v686 = vpop.f32.mrb[0].mxu0
      %v687 = vadd.f32 %v451, %v686
      %v688 = vpop.f32.mrb[0].mxu0
      %v689 = vadd.f32 %v455, %v688
      %v690 = vpop.f32.mrb[0].mxu0
      %v691 = vadd.f32 %v451, %v690
      %v692 = vpop.f32.mrb[0].mxu0
      %v693 = vadd.f32 %v455, %v692
      %694 = vmatprep.mubr.bf16.mxu0 0
      %695 = vmatmul.mubr.bf16.gmra.mrb[0].mxu0 %v535
      %v696 = vpop.f32.mrb[0].mxu0
      %v697 = vadd.f32 %v451, %v696
      %v698 = vpop.f32.mrb[0].mxu0
      %v699 = vadd.f32 %v455, %v698
      %v700 = vpop.f32.mrb[0].mxu0
      %v701 = vadd.f32 %v451, %v700
      %v702 = vpop.f32.mrb[0].mxu0
      %v703 = vadd.f32 %v455, %v702
      %704 = vmatprep.mubr.bf16.mxu0 0
      %705 = vmatmul.mubr.bf16.gmra.mrb[0].mxu0 %v536
      %v706 = vpop.f32.mrb[0].mxu0
      %v707 = vadd.f32 %v451, %v706
      %v708 = vpop.f32.mrb[0].mxu0
      %v709 = vadd.f32 %v455, %v708
      %v710 = vpop.f32.mrb[0].mxu0
      %v711 = vadd.f32 %v451, %v710
      %v712 = vpop.f32.mrb[0].mxu0
      %v713 = vadd.f32 %v455, %v712
      %714 = vmatprep.mubr.bf16.mxu0 0
      %715 = vmatmul.mubr.bf16.gmra.mrb[0].mxu0 %v537
      %v716 = vpop.f32.mrb[0].mxu0
      %v717 = vadd.f32 %v451, %v716
      %v718 = vpop.f32.mrb[0].mxu0
      %v719 = vadd.f32 %v455, %v718
      %v720 = vpop.f32.mrb[0].mxu0
      %v721 = vadd.f32 %v451, %v720
      %v722 = vpop.f32.mrb[0].mxu0
      %v723 = vadd.f32 %v455, %v722
      %724 = vmatprep.mubr.bf16.mxu0 0
      %725 = vmatmul.mubr.bf16.gmra.mrb[0].mxu0 %v538
      %v726 = vpop.f32.mrb[0].mxu0
      %v727 = vadd.f32 %v451, %v726
      %v728 = vpop.f32.mrb[0].mxu0
      %v729 = vadd.f32 %v455, %v728
      %v730 = vpop.f32.mrb[0].mxu0
      %v731 = vadd.f32 %v451, %v730
      %v732 = vpop.f32.mrb[0].mxu0
      %v733 = vadd.f32 %v455, %v732
      %734 = vmatprep.mubr.bf16.mxu0 0
      %735 = vmatmul.mubr.bf16.gmra.mrb[0].mxu0 %v539
      %v736 = vpop.f32.mrb[0].mxu0
      %v737 = vadd.f32 %v451, %v736
      %v738 = vpop.f32.mrb[0].mxu0
      %v739 = vadd.f32 %v455, %v738
      %v740 = vpop.f32.mrb[0].mxu0
      %v741 = vadd.f32 %v451, %v740
      %v742 = vpop.f32.mrb[0].mxu0
      %v743 = vadd.f32 %v455, %v742
      %744 = vmatprep.mubr.bf16.mxu0 0
      %745 = vmatmul.mubr.bf16.gmra.mrb[0].mxu0 %v540
      %v746 = vpop.f32.mrb[0].mxu0
      %v747 = vadd.f32 %v451, %v746
      %v748 = vpop.f32.mrb[0].mxu0
      %v749 = vadd.f32 %v455, %v748
      %v750 = vpop.f32.mrb[0].mxu0
      %v751 = vadd.f32 %v451, %v750
      %v752 = vpop.f32.mrb[0].mxu0
      %v753 = vadd.f32 %v455, %v752
      %754 = vmatprep.mubr.bf16.mxu0 0
      %755 = vmatmul.mubr.bf16.gmra.mrb[0].mxu0 %v541
      %v756 = vpop.f32.mrb[0].mxu0
      %v757 = vadd.f32 %v451, %v756
      %v758 = vpop.f32.mrb[0].mxu0
      %v759 = vadd.f32 %v455, %v758
      %v760 = vpop.f32.mrb[0].mxu0
      %v761 = vadd.f32 %v451, %v760
      %v762 = vpop.f32.mrb[0].mxu0
      %v763 = vadd.f32 %v455, %v762
      %764 = vmatprep.mubr.bf16.mxu0 0
      %765 = vmatmul.mubr.bf16.gmra.mrb[0].mxu0 %v542
      %v766 = vpop.f32.mrb[0].mxu0
      %v767 = vadd.f32 %v451, %v766
      %v768 = vpop.f32.mrb[0].mxu0
      %v769 = vadd.f32 %v455, %v768
      %v770 = vpop.f32.mrb[0].mxu0
      %v771 = vadd.f32 %v451, %v770
      %v772 = vpop.f32.mrb[0].mxu0
      %v773 = vadd.f32 %v455, %v772
      %774 = vmatprep.mubr.bf16.mxu0 0
      %775 = vmatmul.mubr.bf16.gmra.mrb[0].mxu0 %v543
      %v776 = vpop.f32.mrb[0].mxu0
      %v777 = vadd.f32 %v451, %v776
      %v778 = vpop.f32.mrb[0].mxu0
      %v779 = vadd.f32 %v455, %v778
      %v780 = vpop.f32.mrb[0].mxu0
      %v781 = vadd.f32 %v451, %v780
      %v782 = vpop.f32.mrb[0].mxu0
      %v783 = vadd.f32 %v455, %v782
      %784 = vmatprep.mubr.bf16.mxu0 0
      %785 = vmatmul.mubr.bf16.gmra.mrb[0].mxu0 %v544
      %v786 = vpop.f32.mrb[0].mxu0
      %v787 = vadd.f32 %v451, %v786
      %v788 = vpop.f32.mrb[0].mxu0
      %v789 = vadd.f32 %v455, %v788
      %v790 = vpop.f32.mrb[0].mxu0
      %v791 = vadd.f32 %v451, %v790
      %v792 = vpop.f32.mrb[0].mxu0
      %v793 = vadd.f32 %v455, %v792
      %794 = vmatprep.mubr.bf16.mxu0 0
      %795 = vmatmul.mubr.bf16.gmra.mrb[0].mxu0 %v545
      %v796 = vpop.f32.mrb[0].mxu0
      %v797 = vadd.f32 %v451, %v796
      %v798 = vpop.f32.mrb[0].mxu0
      %v799 = vadd.f32 %v455, %v798
      %v800 = vpop.f32.mrb[0].mxu0
      %v801 = vadd.f32 %v451, %v800
      %v802 = vpop.f32.mrb[0].mxu0
      %v803 = vadd.f32 %v455, %v802
      %804 = vmatprep.mubr.bf16.mxu0 0
      %805 = vmatmul.mubr.bf16.gmra.mrb[0].mxu0 %v546
      %v806 = vpop.f32.mrb[0].mxu0
      %v807 = vadd.f32 %v451, %v806
      %v808 = vpop.f32.mrb[0].mxu0
      %v809 = vadd.f32 %v455, %v808
      %v810 = vpop.f32.mrb[0].mxu0
      %v811 = vadd.f32 %v451, %v810
      %v812 = vpop.f32.mrb[0].mxu0
      %v813 = vadd.f32 %v455, %v812
      %814 = vmatprep.mubr.bf16.mxu0 0
      %815 = vmatmul.mubr.bf16.gmra.mrb[0].mxu0 %v547
      %v816 = vpop.f32.mrb[0].mxu0
      %v817 = vadd.f32 %v451, %v816
      %v818 = vpop.f32.mrb[0].mxu0
      %v819 = vadd.f32 %v455, %v818
      %v820 = vpop.f32.mrb[0].mxu0
      %v821 = vadd.f32 %v451, %v820
      %v822 = vpop.f32.mrb[0].mxu0
      %v823 = vadd.f32 %v455, %v822
      %824 = vmatprep.mubr.bf16.mxu0 0
      %825 = vmatmul.mubr.bf16.gmra.mrb[0].mxu0 %v548
      %v826 = vpop.f32.mrb[0].mxu0
      %v827 = vadd.f32 %v451, %v826
      %v828 = vpop.f32.mrb[0].mxu0
      %v829 = vadd.f32 %v455, %v828
      %v830 = vpop.f32.mrb[0].mxu0
      %v831 = vadd.f32 %v451, %v830
      %v832 = vpop.f32.mrb[0].mxu0
      %v833 = vadd.f32 %v455, %v832
      %834 = vmatprep.mubr.bf16.mxu0 0
      %835 = vmatmul.mubr.bf16.gmra.mrb[0].mxu0 %v549
      %v836 = vpop.f32.mrb[0].mxu0
      %v837 = vadd.f32 %v451, %v836
      %v838 = vpop.f32.mrb[0].mxu0
      %v839 = vadd.f32 %v455, %v838
      %v840 = vpop.f32.mrb[0].mxu0
      %v841 = vadd.f32 %v451, %v840
      %v842 = vpop.f32.mrb[0].mxu0
      %v843 = vadd.f32 %v455, %v842
      %844 = vmatprep.mubr.bf16.mxu0 0
      %845 = vmatmul.mubr.bf16.gmra.mrb[0].mxu0 %v550
      %v846 = vpop.f32.mrb[0].mxu0
      %v847 = vadd.f32 %v451, %v846
      %v848 = vpop.f32.mrb[0].mxu0
      %v849 = vadd.f32 %v455, %v848
      %v850 = vpop.f32.mrb[0].mxu0
      %v851 = vadd.f32 %v451, %v850
      %v852 = vpop.f32.mrb[0].mxu0
      %v853 = vadd.f32 %v455, %v852
      %854 = vmatprep.mubr.bf16.mxu0 0
      %855 = vmatmul.mubr.bf16.gmra.mrb[0].mxu0 %v551
      %v856 = vpop.f32.mrb[0].mxu0
      %v857 = vadd.f32 %v451, %v856
      %v858 = vpop.f32.mrb[0].mxu0
      %v859 = vadd.f32 %v455, %v858
      %v860 = vpop.f32.mrb[0].mxu0
      %v861 = vadd.f32 %v451, %v860
      %v862 = vpop.f32.mrb[0].mxu0
      %v863 = vadd.f32 %v455, %v862
      %864 = vmatprep.mubr.bf16.mxu0 0
      %865 = vmatmul.mubr.bf16.gmra.mrb[0].mxu0 %v552
      %v866 = vpop.f32.mrb[0].mxu0
      %v867 = vadd.f32 %v451, %v866
      %v868 = vpop.f32.mrb[0].mxu0
      %v869 = vadd.f32 %v455, %v868
      %v870 = vpop.f32.mrb[0].mxu0
      %v871 = vadd.f32 %v451, %v870
      %v872 = vpop.f32.mrb[0].mxu0
      %v873 = vadd.f32 %v455, %v872
      %874 = vdwg.mxu0
      %v875 = vpack.c.bf16 %v691, %v687
      %v876 = vpack.c.bf16 %v701, %v697
      %v877 = vpack.c.bf16 %v711, %v707
      %v878 = vpack.c.bf16 %v721, %v717
      %v879 = vpack.c.bf16 %v731, %v727
      %v880 = vpack.c.bf16 %v741, %v737
      %v881 = vpack.c.bf16 %v751, %v747
      %v882 = vpack.c.bf16 %v761, %v757
      %v883 = vpack.c.bf16 %v771, %v767
      %v884 = vpack.c.bf16 %v781, %v777
      %v885 = vpack.c.bf16 %v791, %v787
      %v886 = vpack.c.bf16 %v801, %v797
      %v887 = vpack.c.bf16 %v811, %v807
      %v888 = vpack.c.bf16 %v821, %v817
      %v889 = vpack.c.bf16 %v831, %v827
      %v890 = vpack.c.bf16 %v841, %v837
      %v891 = vpack.c.bf16 %v851, %v847
      %v892 = vpack.c.bf16 %v861, %v857
      %v893 = vpack.c.bf16 %v871, %v867
      %vm894 = vcmp.gt.bf16.partialorder %v875, 0
      %vm895 = vcmp.gt.bf16.partialorder %v876, 0
      %vm896 = vcmp.gt.bf16.partialorder %v877, 0
      %vm897 = vcmp.gt.bf16.partialorder %v878, 0
      %vm898 = vcmp.gt.bf16.partialorder %v879, 0
      %vm899 = vcmp.gt.bf16.partialorder %v880, 0
      %vm900 = vcmp.gt.bf16.partialorder %v881, 0
      %vm901 = vcmp.gt.bf16.partialorder %v882, 0
      %vm902 = vcmp.gt.bf16.partialorder %v883, 0
      %vm903 = vcmp.gt.bf16.partialorder %v884, 0
      %vm904 = vcmp.gt.bf16.partialorder %v885, 0
      %vm905 = vcmp.gt.bf16.partialorder %v886, 0
      %vm906 = vcmp.gt.bf16.partialorder %v887, 0
      %vm907 = vcmp.gt.bf16.partialorder %v888, 0
      %vm908 = vcmp.gt.bf16.partialorder %v889, 0
      %vm909 = vcmp.gt.bf16.partialorder %v890, 0
      %vm910 = vcmp.gt.bf16.partialorder %v891, 0
      %vm911 = vcmp.gt.bf16.partialorder %v892, 0
      %vm912 = vcmp.gt.bf16.partialorder %v893, 0
      %v913 = vmul.bf16 %v875, 1045249613
      %v914 = vmul.bf16 %v876, 1045249613
      %v915 = vmul.bf16 %v877, 1045249613
      %v916 = vmul.bf16 %v878, 1045249613
      %v917 = vmul.bf16 %v879, 1045249613
      %v918 = vmul.bf16 %v880, 1045249613
      %v919 = vmul.bf16 %v881, 1045249613
      %v920 = vmul.bf16 %v882, 1045249613
      %v921 = vmul.bf16 %v883, 1045249613
      %v922 = vmul.bf16 %v884, 1045249613
      %v923 = vmul.bf16 %v885, 1045249613
      %v924 = vmul.bf16 %v886, 1045249613
      %v925 = vmul.bf16 %v887, 1045249613
      %v926 = vmul.bf16 %v888, 1045249613
      %v927 = vmul.bf16 %v889, 1045249613
      %v928 = vmul.bf16 %v890, 1045249613
      %v929 = vmul.bf16 %v891, 1045249613
      %v930 = vmul.bf16 %v892, 1045249613
      %v931 = vmul.bf16 %v893, 1045249613
      %v932 = vsel %vm894, %v875, %v913
      %v933 = vsel %vm895, %v876, %v914
      %v934 = vsel %vm896, %v877, %v915
      %v935 = vsel %vm897, %v878, %v916
      %v936 = vsel %vm898, %v879, %v917
      %v937 = vsel %vm899, %v880, %v918
      %v938 = vsel %vm900, %v881, %v919
      %v939 = vsel %vm901, %v882, %v920
      %v940 = vsel %vm902, %v883, %v921
      %v941 = vsel %vm903, %v884, %v922
      %v942 = vsel %vm904, %v885, %v923
      %v943 = vsel %vm905, %v886, %v924
      %v944 = vsel %vm906, %v887, %v925
      %v945 = vsel %vm907, %v888, %v926
      %v946 = vsel %vm908, %v889, %v927
      %v947 = vsel %vm909, %v890, %v928
      %v948 = vsel %vm910, %v891, %v929
      %v949 = vsel %vm911, %v892, %v930
      %v950 = vsel %vm912, %v893, %v931
      %v951 = vpack.c.bf16 %v693, %v689
      %v952 = vpack.c.bf16 %v703, %v699
      %v953 = vpack.c.bf16 %v713, %v709
      %v954 = vpack.c.bf16 %v723, %v719
      %v955 = vpack.c.bf16 %v733, %v729
      %v956 = vpack.c.bf16 %v743, %v739
      %v957 = vpack.c.bf16 %v753, %v749
      %v958 = vpack.c.bf16 %v763, %v759
      %v959 = vpack.c.bf16 %v773, %v769
      %v960 = vpack.c.bf16 %v783, %v779
      %v961 = vpack.c.bf16 %v793, %v789
      %v962 = vpack.c.bf16 %v803, %v799
      %v963 = vpack.c.bf16 %v813, %v809
      %v964 = vpack.c.bf16 %v823, %v819
      %v965 = vpack.c.bf16 %v833, %v829
      %v966 = vpack.c.bf16 %v843, %v839
      %v967 = vpack.c.bf16 %v853, %v849
      %v968 = vpack.c.bf16 %v863, %v859
      %v969 = vpack.c.bf16 %v873, %v869
      %v970 = vmax.bf16 %v951, 0
      %v971 = vmax.bf16 %v952, 0
      %v972 = vmax.bf16 %v953, 0
      %v973 = vmax.bf16 %v954, 0
      %v974 = vmax.bf16 %v955, 0
      %v975 = vmax.bf16 %v956, 0
      %v976 = vmax.bf16 %v957, 0
      %v977 = vmax.bf16 %v958, 0
      %v978 = vmax.bf16 %v959, 0
      %v979 = vmax.bf16 %v960, 0
      %v980 = vmax.bf16 %v961, 0
      %v981 = vmax.bf16 %v962, 0
      %v982 = vmax.bf16 %v963, 0
      %v983 = vmax.bf16 %v964, 0
      %v984 = vmax.bf16 %v965, 0
      %v985 = vmax.bf16 %v966, 0
      %v986 = vmax.bf16 %v967, 0
      %v987 = vmax.bf16 %v968, 0
      %v988 = vmax.bf16 %v969, 0
      %v989 = vld [vmem:[%s3] sm:$0xf]
      %v990 = vld [vmem:[%s3 + $0x4] sm:$0xf]
      %v991 = vld [vmem:[%s3 + $0x8] sm:$0xf]
      %v992 = vld [vmem:[%s3 + $0xc] sm:$0xf]
      %v993 = vld [vmem:[%s3 + $0x10] sm:$0xf]
      %v994 = vld [vmem:[%s3 + $0x14] sm:$0xf]
      %v995 = vld [vmem:[%s3 + $0x18] sm:$0xf]
      %v996 = vld [vmem:[%s3 + $0x1c] sm:$0xf]
      %v997 = vld [vmem:[%s3 + $0x20] sm:$0xf]
      %v998 = vld [vmem:[%s3 + $0x24] sm:$0xf]
      %v999 = vld [vmem:[%s3 + $0x28] sm:$0xf]
      %v1000 = vld [vmem:[%s3 + $0x2c] sm:$0xf]
      %v1001 = vld [vmem:[%s3 + $0x30] sm:$0xf]
      %v1002 = vld [vmem:[%s3 + $0x34] sm:$0xf]
      %v1003 = vld [vmem:[%s3 + $0x38] sm:$0xf]
      %v1004 = vld [vmem:[%s3 + $0x3c] sm:$0xf]
      %v1005 = vld [vmem:[%s4] sm:$0x1]
      %v1007 = vlaneseq
      %v1008 = vshrl.u32 %v1007, 7
      %v1009 = vsub.s32 0, %v1008
      %v1010 = vrot.slane %v1005, %v1009
      %v1028 = vunpack.c.l.b16 %v989
      %v1029 = vunpack.c.l.b16 %v990
      %v1030 = vunpack.c.l.b16 %v991
      %v1031 = vunpack.c.l.b16 %v992
      %v1032 = vunpack.c.l.b16 %v993
      %v1033 = vunpack.c.l.b16 %v994
      %v1034 = vunpack.c.l.b16 %v995
      %v1035 = vunpack.c.l.b16 %v996
      %v1036 = vunpack.c.l.b16 %v997
      %v1037 = vunpack.c.l.b16 %v998
      %v1038 = vunpack.c.l.b16 %v999
      %v1039 = vunpack.c.l.b16 %v1000
      %v1040 = vunpack.c.l.b16 %v1001
      %v1041 = vunpack.c.l.b16 %v1002
      %v1042 = vunpack.c.l.b16 %v1003
      %v1043 = vunpack.c.l.b16 %v1004
      %v1044 = vpack.c.b16 %v1029, %v1028
      %v1045 = vpack.c.b16 %v1031, %v1030
      %v1046 = vpack.c.b16 %v1033, %v1032
      %v1047 = vpack.c.b16 %v1035, %v1034
      %v1048 = vpack.c.b16 %v1037, %v1036
      %v1049 = vpack.c.b16 %v1039, %v1038
      %v1050 = vpack.c.b16 %v1041, %v1040
      %v1051 = vpack.c.b16 %v1043, %v1042
      %1060 = vmatprep.subr.bf16.mxu0 0
      %1061 = vmatpush1.bf16.msra.mxu0 %v1044
      %1062 = vmatprep.subr.bf16.mxu0 0
      %1063 = vmatpush1.bf16.msra.mxu0 %v1045
      %1064 = vmatprep.subr.bf16.mxu0 0
      %1065 = vmatpush1.bf16.msra.mxu0 %v1046
      %1066 = vmatprep.subr.bf16.mxu0 0
      %1067 = vmatpush1.bf16.msra.mxu0 %v1047
      %1068 = vmatprep.subr.bf16.mxu0 0
      %1069 = vmatpush1.bf16.msra.mxu0 %v1048
      %1070 = vmatprep.subr.bf16.mxu0 0
      %1071 = vmatpush1.bf16.msra.mxu0 %v1049
      %1072 = vmatprep.subr.bf16.mxu0 0
      %1073 = vmatpush1.bf16.msra.mxu0 %v1050
      %1074 = vmatprep.subr.bf16.mxu0 0
      %1075 = vmatpush1.bf16.msra.mxu0 %v1051
      %1076 = vmatprep.subr.bf16.mxu0 0
      %1077 = vmatpush1.bf16.msra.mxu0 0
      %1078 = vmatprep.subr.bf16.mxu0 0
      %1079 = vmatpush1.bf16.msra.mxu0 0
      %1080 = vmatprep.subr.bf16.mxu0 0
      %1081 = vmatpush1.bf16.msra.mxu0 0
      %1082 = vmatprep.subr.bf16.mxu0 0
      %1083 = vmatpush1.bf16.msra.mxu0 0
      %1084 = vmatprep.subr.bf16.mxu0 0
      %1085 = vmatpush1.bf16.msra.mxu0 0
      %1086 = vmatprep.subr.bf16.mxu0 0
      %1087 = vmatpush1.bf16.msra.mxu0 0
      %1088 = vmatprep.subr.bf16.mxu0 0
      %1089 = vmatpush1.bf16.msra.mxu0 0
      %1090 = vmatprep.subr.bf16.mxu0 0
      %1091 = vmatpush1.bf16.msra.mxu0 0
      %1092 = vmatprep.mubr.bf16.mxu0 0
      %1093 = vmatmul.mubr.bf16.gmra.mrb[0].mxu0 %v932
      %v1094 = vpop.f32.mrb[0].mxu0
      %v1095 = vadd.f32 %v1010, %v1094
      %v1096 = vpop.f32.mrb[0].mxu0
      %v1097 = vpop.f32.mrb[0].mxu0
      %v1098 = vadd.f32 %v1010, %v1097
      %v1099 = vpop.f32.mrb[0].mxu0
      %1100 = vmatprep.mubr.bf16.mxu0 0
      %1101 = vmatmul.mubr.bf16.gmra.mrb[0].mxu0 %v933
      %v1102 = vpop.f32.mrb[0].mxu0
      %v1103 = vadd.f32 %v1010, %v1102
      %v1104 = vpop.f32.mrb[0].mxu0
      %v1105 = vpop.f32.mrb[0].mxu0
      %v1106 = vadd.f32 %v1010, %v1105
      %v1107 = vpop.f32.mrb[0].mxu0
      %1108 = vmatprep.mubr.bf16.mxu0 0
      %1109 = vmatmul.mubr.bf16.gmra.mrb[0].mxu0 %v934
      %v1110 = vpop.f32.mrb[0].mxu0
      %v1111 = vadd.f32 %v1010, %v1110
      %v1112 = vpop.f32.mrb[0].mxu0
      %v1113 = vpop.f32.mrb[0].mxu0
      %v1114 = vadd.f32 %v1010, %v1113
      %v1115 = vpop.f32.mrb[0].mxu0
      %1116 = vmatprep.mubr.bf16.mxu0 0
      %1117 = vmatmul.mubr.bf16.gmra.mrb[0].mxu0 %v935
      %v1118 = vpop.f32.mrb[0].mxu0
      %v1119 = vadd.f32 %v1010, %v1118
      %v1120 = vpop.f32.mrb[0].mxu0
      %v1121 = vpop.f32.mrb[0].mxu0
      %v1122 = vadd.f32 %v1010, %v1121
      %v1123 = vpop.f32.mrb[0].mxu0
      %1124 = vmatprep.mubr.bf16.mxu0 0
      %1125 = vmatmul.mubr.bf16.gmra.mrb[0].mxu0 %v936
      %v1126 = vpop.f32.mrb[0].mxu0
      %v1127 = vadd.f32 %v1010, %v1126
      %v1128 = vpop.f32.mrb[0].mxu0
      %v1129 = vpop.f32.mrb[0].mxu0
      %v1130 = vadd.f32 %v1010, %v1129
      %v1131 = vpop.f32.mrb[0].mxu0
      %1132 = vmatprep.mubr.bf16.mxu0 0
      %1133 = vmatmul.mubr.bf16.gmra.mrb[0].mxu0 %v937
      %v1134 = vpop.f32.mrb[0].mxu0
      %v1135 = vadd.f32 %v1010, %v1134
      %v1136 = vpop.f32.mrb[0].mxu0
      %v1137 = vpop.f32.mrb[0].mxu0
      %v1138 = vadd.f32 %v1010, %v1137
      %v1139 = vpop.f32.mrb[0].mxu0
      %1140 = vmatprep.mubr.bf16.mxu0 0
      %1141 = vmatmul.mubr.bf16.gmra.mrb[0].mxu0 %v938
      %v1142 = vpop.f32.mrb[0].mxu0
      %v1143 = vadd.f32 %v1010, %v1142
      %v1144 = vpop.f32.mrb[0].mxu0
      %v1145 = vpop.f32.mrb[0].mxu0
      %v1146 = vadd.f32 %v1010, %v1145
      %v1147 = vpop.f32.mrb[0].mxu0
      %1148 = vmatprep.mubr.bf16.mxu0 0
      %1149 = vmatmul.mubr.bf16.gmra.mrb[0].mxu0 %v939
      %v1150 = vpop.f32.mrb[0].mxu0
      %v1151 = vadd.f32 %v1010, %v1150
      %v1152 = vpop.f32.mrb[0].mxu0
      %v1153 = vpop.f32.mrb[0].mxu0
      %v1154 = vadd.f32 %v1010, %v1153
      %v1155 = vpop.f32.mrb[0].mxu0
      %1156 = vmatprep.mubr.bf16.mxu0 0
      %1157 = vmatmul.mubr.bf16.gmra.mrb[0].mxu0 %v940
      %v1158 = vpop.f32.mrb[0].mxu0
      %v1159 = vadd.f32 %v1010, %v1158
      %v1160 = vpop.f32.mrb[0].mxu0
      %v1161 = vpop.f32.mrb[0].mxu0
      %v1162 = vadd.f32 %v1010, %v1161
      %v1163 = vpop.f32.mrb[0].mxu0
      %1164 = vmatprep.mubr.bf16.mxu0 0
      %1165 = vmatmul.mubr.bf16.gmra.mrb[0].mxu0 %v941
      %v1166 = vpop.f32.mrb[0].mxu0
      %v1167 = vadd.f32 %v1010, %v1166
      %v1168 = vpop.f32.mrb[0].mxu0
      %v1169 = vpop.f32.mrb[0].mxu0
      %v1170 = vadd.f32 %v1010, %v1169
      %v1171 = vpop.f32.mrb[0].mxu0
      %1172 = vmatprep.mubr.bf16.mxu0 0
      %1173 = vmatmul.mubr.bf16.gmra.mrb[0].mxu0 %v942
      %v1174 = vpop.f32.mrb[0].mxu0
      %v1175 = vadd.f32 %v1010, %v1174
      %v1176 = vpop.f32.mrb[0].mxu0
      %v1177 = vpop.f32.mrb[0].mxu0
      %v1178 = vadd.f32 %v1010, %v1177
      %v1179 = vpop.f32.mrb[0].mxu0
      %1180 = vmatprep.mubr.bf16.mxu0 0
      %1181 = vmatmul.mubr.bf16.gmra.mrb[0].mxu0 %v943
      %v1182 = vpop.f32.mrb[0].mxu0
      %v1183 = vadd.f32 %v1010, %v1182
      %v1184 = vpop.f32.mrb[0].mxu0
      %v1185 = vpop.f32.mrb[0].mxu0
      %v1186 = vadd.f32 %v1010, %v1185
      %v1187 = vpop.f32.mrb[0].mxu0
      %1188 = vmatprep.mubr.bf16.mxu0 0
      %1189 = vmatmul.mubr.bf16.gmra.mrb[0].mxu0 %v944
      %v1190 = vpop.f32.mrb[0].mxu0
      %v1191 = vadd.f32 %v1010, %v1190
      %v1192 = vpop.f32.mrb[0].mxu0
      %v1193 = vpop.f32.mrb[0].mxu0
      %v1194 = vadd.f32 %v1010, %v1193
      %v1195 = vpop.f32.mrb[0].mxu0
      %1196 = vmatprep.mubr.bf16.mxu0 0
      %1197 = vmatmul.mubr.bf16.gmra.mrb[0].mxu0 %v945
      %v1198 = vpop.f32.mrb[0].mxu0
      %v1199 = vadd.f32 %v1010, %v1198
      %v1200 = vpop.f32.mrb[0].mxu0
      %v1201 = vpop.f32.mrb[0].mxu0
      %v1202 = vadd.f32 %v1010, %v1201
      %v1203 = vpop.f32.mrb[0].mxu0
      %1204 = vmatprep.mubr.bf16.mxu0 0
      %1205 = vmatmul.mubr.bf16.gmra.mrb[0].mxu0 %v946
      %v1206 = vpop.f32.mrb[0].mxu0
      %v1207 = vadd.f32 %v1010, %v1206
      %v1208 = vpop.f32.mrb[0].mxu0
      %v1209 = vpop.f32.mrb[0].mxu0
      %v1210 = vadd.f32 %v1010, %v1209
      %v1211 = vpop.f32.mrb[0].mxu0
      %1212 = vmatprep.mubr.bf16.mxu0 0
      %1213 = vmatmul.mubr.bf16.gmra.mrb[0].mxu0 %v947
      %v1214 = vpop.f32.mrb[0].mxu0
      %v1215 = vadd.f32 %v1010, %v1214
      %v1216 = vpop.f32.mrb[0].mxu0
      %v1217 = vpop.f32.mrb[0].mxu0
      %v1218 = vadd.f32 %v1010, %v1217
      %v1219 = vpop.f32.mrb[0].mxu0
      %1220 = vmatprep.mubr.bf16.mxu0 0
      %1221 = vmatmul.mubr.bf16.gmra.mrb[0].mxu0 %v948
      %v1222 = vpop.f32.mrb[0].mxu0
      %v1223 = vadd.f32 %v1010, %v1222
      %v1224 = vpop.f32.mrb[0].mxu0
      %v1225 = vpop.f32.mrb[0].mxu0
      %v1226 = vadd.f32 %v1010, %v1225
      %v1227 = vpop.f32.mrb[0].mxu0
      %1228 = vmatprep.mubr.bf16.mxu0 0
      %1229 = vmatmul.mubr.bf16.gmra.mrb[0].mxu0 %v949
      %v1230 = vpop.f32.mrb[0].mxu0
      %v1231 = vadd.f32 %v1010, %v1230
      %v1232 = vpop.f32.mrb[0].mxu0
      %v1233 = vpop.f32.mrb[0].mxu0
      %v1234 = vadd.f32 %v1010, %v1233
      %v1235 = vpop.f32.mrb[0].mxu0
      %1236 = vmatprep.mubr.bf16.mxu0 0
      %1237 = vmatmul.mubr.bf16.gmra.mrb[0].mxu0 %v950
      %v1238 = vpop.f32.mrb[0].mxu0
      %v1239 = vadd.f32 %v1010, %v1238
      %v1240 = vpop.f32.mrb[0].mxu0
      %v1241 = vpop.f32.mrb[0].mxu0
      %v1242 = vadd.f32 %v1010, %v1241
      %v1243 = vpop.f32.mrb[0].mxu0
      %1244 = vdwg.mxu0
      %v1245 = vpack.c.bf16 %v1098, %v1095
      %v1246 = vpack.c.bf16 %v1106, %v1103
      %v1247 = vpack.c.bf16 %v1114, %v1111
      %v1248 = vpack.c.bf16 %v1122, %v1119
      %v1249 = vpack.c.bf16 %v1130, %v1127
      %v1250 = vpack.c.bf16 %v1138, %v1135
      %v1251 = vpack.c.bf16 %v1146, %v1143
      %v1252 = vpack.c.bf16 %v1154, %v1151
      %v1253 = vpack.c.bf16 %v1162, %v1159
      %v1254 = vpack.c.bf16 %v1170, %v1167
      %v1255 = vpack.c.bf16 %v1178, %v1175
      %v1256 = vpack.c.bf16 %v1186, %v1183
      %v1257 = vpack.c.bf16 %v1194, %v1191
      %v1258 = vpack.c.bf16 %v1202, %v1199
      %v1259 = vpack.c.bf16 %v1210, %v1207
      %v1260 = vpack.c.bf16 %v1218, %v1215
      %v1261 = vpack.c.bf16 %v1226, %v1223
      %v1262 = vpack.c.bf16 %v1234, %v1231
      %v1263 = vpack.c.bf16 %v1242, %v1239
      %vm1264 = vcmp.gt.bf16.partialorder %v1245, 0
      %vm1265 = vcmp.gt.bf16.partialorder %v1246, 0
      %vm1266 = vcmp.gt.bf16.partialorder %v1247, 0
      %vm1267 = vcmp.gt.bf16.partialorder %v1248, 0
      %vm1268 = vcmp.gt.bf16.partialorder %v1249, 0
      %vm1269 = vcmp.gt.bf16.partialorder %v1250, 0
      %vm1270 = vcmp.gt.bf16.partialorder %v1251, 0
      %vm1271 = vcmp.gt.bf16.partialorder %v1252, 0
      %vm1272 = vcmp.gt.bf16.partialorder %v1253, 0
      %vm1273 = vcmp.gt.bf16.partialorder %v1254, 0
      %vm1274 = vcmp.gt.bf16.partialorder %v1255, 0
      %vm1275 = vcmp.gt.bf16.partialorder %v1256, 0
      %vm1276 = vcmp.gt.bf16.partialorder %v1257, 0
      %vm1277 = vcmp.gt.bf16.partialorder %v1258, 0
      %vm1278 = vcmp.gt.bf16.partialorder %v1259, 0
      %vm1279 = vcmp.gt.bf16.partialorder %v1260, 0
      %vm1280 = vcmp.gt.bf16.partialorder %v1261, 0
      %vm1281 = vcmp.gt.bf16.partialorder %v1262, 0
      %vm1282 = vcmp.gt.bf16.partialorder %v1263, 0
      %v1283 = vmul.bf16 %v1245, 1045249613
      %v1284 = vmul.bf16 %v1246, 1045249613
      %v1285 = vmul.bf16 %v1247, 1045249613
      %v1286 = vmul.bf16 %v1248, 1045249613
      %v1287 = vmul.bf16 %v1249, 1045249613
      %v1288 = vmul.bf16 %v1250, 1045249613
      %v1289 = vmul.bf16 %v1251, 1045249613
      %v1290 = vmul.bf16 %v1252, 1045249613
      %v1291 = vmul.bf16 %v1253, 1045249613
      %v1292 = vmul.bf16 %v1254, 1045249613
      %v1293 = vmul.bf16 %v1255, 1045249613
      %v1294 = vmul.bf16 %v1256, 1045249613
      %v1295 = vmul.bf16 %v1257, 1045249613
      %v1296 = vmul.bf16 %v1258, 1045249613
      %v1297 = vmul.bf16 %v1259, 1045249613
      %v1298 = vmul.bf16 %v1260, 1045249613
      %v1299 = vmul.bf16 %v1261, 1045249613
      %v1300 = vmul.bf16 %v1262, 1045249613
      %v1301 = vmul.bf16 %v1263, 1045249613
      %v1302 = vsel %vm1264, %v1245, %v1283
      %v1303 = vsel %vm1265, %v1246, %v1284
      %v1304 = vsel %vm1266, %v1247, %v1285
      %v1305 = vsel %vm1267, %v1248, %v1286
      %v1306 = vsel %vm1268, %v1249, %v1287
      %v1307 = vsel %vm1269, %v1250, %v1288
      %v1308 = vsel %vm1270, %v1251, %v1289
      %v1309 = vsel %vm1271, %v1252, %v1290
      %v1310 = vsel %vm1272, %v1253, %v1291
      %v1311 = vsel %vm1273, %v1254, %v1292
      %v1312 = vsel %vm1274, %v1255, %v1293
      %v1313 = vsel %vm1275, %v1256, %v1294
      %v1314 = vsel %vm1276, %v1257, %v1295
      %v1315 = vsel %vm1277, %v1258, %v1296
      %v1316 = vsel %vm1278, %v1259, %v1297
      %v1317 = vsel %vm1279, %v1260, %v1298
      %v1318 = vsel %vm1280, %v1261, %v1299
      %v1319 = vsel %vm1281, %v1262, %v1300
      %v1320 = vsel %vm1282, %v1263, %v1301
      %v1321 = vld [vmem:[%s5] sm:$0xf]
      %v1322 = vld [vmem:[%s5 + $0x4] sm:$0xf]
      %v1323 = vld [vmem:[%s5 + $0x8] sm:$0xf]
      %v1324 = vld [vmem:[%s5 + $0xc] sm:$0xf]
      %v1325 = vld [vmem:[%s5 + $0x10] sm:$0xf]
      %v1326 = vld [vmem:[%s5 + $0x14] sm:$0xf]
      %v1327 = vld [vmem:[%s5 + $0x18] sm:$0xf]
      %v1328 = vld [vmem:[%s5 + $0x1c] sm:$0xf]
      %v1329 = vld [vmem:[%s5 + $0x20] sm:$0xf]
      %v1330 = vld [vmem:[%s5 + $0x24] sm:$0xf]
      %v1331 = vld [vmem:[%s5 + $0x28] sm:$0xf]
      %v1332 = vld [vmem:[%s5 + $0x2c] sm:$0xf]
      %v1333 = vld [vmem:[%s5 + $0x30] sm:$0xf]
      %v1334 = vld [vmem:[%s5 + $0x34] sm:$0xf]
      %v1335 = vld [vmem:[%s5 + $0x38] sm:$0xf]
      %v1336 = vld [vmem:[%s5 + $0x3c] sm:$0xf]
      %v1337 = vld [vmem:[%s6] sm:$0x1]
      %v1339 = vlaneseq
      %v1340 = vshrl.u32 %v1339, 7
      %v1341 = vsub.s32 0, %v1340
      %v1342 = vrot.slane %v1337, %v1341
      %v1360 = vunpack.c.l.b16 %v1321
      %v1361 = vunpack.c.l.b16 %v1322
      %v1362 = vunpack.c.l.b16 %v1323
      %v1363 = vunpack.c.l.b16 %v1324
      %v1364 = vunpack.c.l.b16 %v1325
      %v1365 = vunpack.c.l.b16 %v1326
      %v1366 = vunpack.c.l.b16 %v1327
      %v1367 = vunpack.c.l.b16 %v1328
      %v1368 = vunpack.c.l.b16 %v1329
      %v1369 = vunpack.c.l.b16 %v1330
      %v1370 = vunpack.c.l.b16 %v1331
      %v1371 = vunpack.c.l.b16 %v1332
      %v1372 = vunpack.c.l.b16 %v1333
      %v1373 = vunpack.c.l.b16 %v1334
      %v1374 = vunpack.c.l.b16 %v1335
      %v1375 = vunpack.c.l.b16 %v1336
      %v1376 = vpack.c.b16 %v1361, %v1360
      %v1377 = vpack.c.b16 %v1363, %v1362
      %v1378 = vpack.c.b16 %v1365, %v1364
      %v1379 = vpack.c.b16 %v1367, %v1366
      %v1380 = vpack.c.b16 %v1369, %v1368
      %v1381 = vpack.c.b16 %v1371, %v1370
      %v1382 = vpack.c.b16 %v1373, %v1372
      %v1383 = vpack.c.b16 %v1375, %v1374
      %1392 = vmatprep.subr.bf16.mxu0 0
      %1393 = vmatpush1.bf16.msra.mxu0 %v1376
      %1394 = vmatprep.subr.bf16.mxu0 0
      %1395 = vmatpush1.bf16.msra.mxu0 %v1377
      %1396 = vmatprep.subr.bf16.mxu0 0
      %1397 = vmatpush1.bf16.msra.mxu0 %v1378
      %1398 = vmatprep.subr.bf16.mxu0 0
      %1399 = vmatpush1.bf16.msra.mxu0 %v1379
      %1400 = vmatprep.subr.bf16.mxu0 0
      %1401 = vmatpush1.bf16.msra.mxu0 %v1380
      %1402 = vmatprep.subr.bf16.mxu0 0
      %1403 = vmatpush1.bf16.msra.mxu0 %v1381
      %1404 = vmatprep.subr.bf16.mxu0 0
      %1405 = vmatpush1.bf16.msra.mxu0 %v1382
      %1406 = vmatprep.subr.bf16.mxu0 0
      %1407 = vmatpush1.bf16.msra.mxu0 %v1383
      %1408 = vmatprep.subr.bf16.mxu0 0
      %1409 = vmatpush1.bf16.msra.mxu0 0
      %1410 = vmatprep.subr.bf16.mxu0 0
      %1411 = vmatpush1.bf16.msra.mxu0 0
      %1412 = vmatprep.subr.bf16.mxu0 0
      %1413 = vmatpush1.bf16.msra.mxu0 0
      %1414 = vmatprep.subr.bf16.mxu0 0
      %1415 = vmatpush1.bf16.msra.mxu0 0
      %1416 = vmatprep.subr.bf16.mxu0 0
      %1417 = vmatpush1.bf16.msra.mxu0 0
      %1418 = vmatprep.subr.bf16.mxu0 0
      %1419 = vmatpush1.bf16.msra.mxu0 0
      %1420 = vmatprep.subr.bf16.mxu0 0
      %1421 = vmatpush1.bf16.msra.mxu0 0
      %1422 = vmatprep.subr.bf16.mxu0 0
      %1423 = vmatpush1.bf16.msra.mxu0 0
      %1424 = vmatprep.mubr.bf16.mxu0 0
      %1425 = vmatmul.mubr.bf16.gmra.mrb[0].mxu0 %v1302
      %v1426 = vpop.f32.mrb[0].mxu0
      %v1427 = vadd.f32 %v1342, %v1426
      %v1428 = vpop.f32.mrb[0].mxu0
      %v1429 = vpop.f32.mrb[0].mxu0
      %v1430 = vadd.f32 %v1342, %v1429
      %v1431 = vpop.f32.mrb[0].mxu0
      %1432 = vmatprep.mubr.bf16.mxu0 0
      %1433 = vmatmul.mubr.bf16.gmra.mrb[0].mxu0 %v1303
      %v1434 = vpop.f32.mrb[0].mxu0
      %v1435 = vadd.f32 %v1342, %v1434
      %v1436 = vpop.f32.mrb[0].mxu0
      %v1437 = vpop.f32.mrb[0].mxu0
      %v1438 = vadd.f32 %v1342, %v1437
      %v1439 = vpop.f32.mrb[0].mxu0
      %1440 = vmatprep.mubr.bf16.mxu0 0
      %1441 = vmatmul.mubr.bf16.gmra.mrb[0].mxu0 %v1304
      %v1442 = vpop.f32.mrb[0].mxu0
      %v1443 = vadd.f32 %v1342, %v1442
      %v1444 = vpop.f32.mrb[0].mxu0
      %v1445 = vpop.f32.mrb[0].mxu0
      %v1446 = vadd.f32 %v1342, %v1445
      %v1447 = vpop.f32.mrb[0].mxu0
      %1448 = vmatprep.mubr.bf16.mxu0 0
      %1449 = vmatmul.mubr.bf16.gmra.mrb[0].mxu0 %v1305
      %v1450 = vpop.f32.mrb[0].mxu0
      %v1451 = vadd.f32 %v1342, %v1450
      %v1452 = vpop.f32.mrb[0].mxu0
      %v1453 = vpop.f32.mrb[0].mxu0
      %v1454 = vadd.f32 %v1342, %v1453
      %v1455 = vpop.f32.mrb[0].mxu0
      %1456 = vmatprep.mubr.bf16.mxu0 0
      %1457 = vmatmul.mubr.bf16.gmra.mrb[0].mxu0 %v1306
      %v1458 = vpop.f32.mrb[0].mxu0
      %v1459 = vadd.f32 %v1342, %v1458
      %v1460 = vpop.f32.mrb[0].mxu0
      %v1461 = vpop.f32.mrb[0].mxu0
      %v1462 = vadd.f32 %v1342, %v1461
      %v1463 = vpop.f32.mrb[0].mxu0
      %1464 = vmatprep.mubr.bf16.mxu0 0
      %1465 = vmatmul.mubr.bf16.gmra.mrb[0].mxu0 %v1307
      %v1466 = vpop.f32.mrb[0].mxu0
      %v1467 = vadd.f32 %v1342, %v1466
      %v1468 = vpop.f32.mrb[0].mxu0
      %v1469 = vpop.f32.mrb[0].mxu0
      %v1470 = vadd.f32 %v1342, %v1469
      %v1471 = vpop.f32.mrb[0].mxu0
      %1472 = vmatprep.mubr.bf16.mxu0 0
      %1473 = vmatmul.mubr.bf16.gmra.mrb[0].mxu0 %v1308
      %v1474 = vpop.f32.mrb[0].mxu0
      %v1475 = vadd.f32 %v1342, %v1474
      %v1476 = vpop.f32.mrb[0].mxu0
      %v1477 = vpop.f32.mrb[0].mxu0
      %v1478 = vadd.f32 %v1342, %v1477
      %v1479 = vpop.f32.mrb[0].mxu0
      %1480 = vmatprep.mubr.bf16.mxu0 0
      %1481 = vmatmul.mubr.bf16.gmra.mrb[0].mxu0 %v1309
      %v1482 = vpop.f32.mrb[0].mxu0
      %v1483 = vadd.f32 %v1342, %v1482
      %v1484 = vpop.f32.mrb[0].mxu0
      %v1485 = vpop.f32.mrb[0].mxu0
      %v1486 = vadd.f32 %v1342, %v1485
      %v1487 = vpop.f32.mrb[0].mxu0
      %1488 = vmatprep.mubr.bf16.mxu0 0
      %1489 = vmatmul.mubr.bf16.gmra.mrb[0].mxu0 %v1310
      %v1490 = vpop.f32.mrb[0].mxu0
      %v1491 = vadd.f32 %v1342, %v1490
      %v1492 = vpop.f32.mrb[0].mxu0
      %v1493 = vpop.f32.mrb[0].mxu0
      %v1494 = vadd.f32 %v1342, %v1493
      %v1495 = vpop.f32.mrb[0].mxu0
      %1496 = vmatprep.mubr.bf16.mxu0 0
      %1497 = vmatmul.mubr.bf16.gmra.mrb[0].mxu0 %v1311
      %v1498 = vpop.f32.mrb[0].mxu0
      %v1499 = vadd.f32 %v1342, %v1498
      %v1500 = vpop.f32.mrb[0].mxu0
      %v1501 = vpop.f32.mrb[0].mxu0
      %v1502 = vadd.f32 %v1342, %v1501
      %v1503 = vpop.f32.mrb[0].mxu0
      %1504 = vmatprep.mubr.bf16.mxu0 0
      %1505 = vmatmul.mubr.bf16.gmra.mrb[0].mxu0 %v1312
      %v1506 = vpop.f32.mrb[0].mxu0
      %v1507 = vadd.f32 %v1342, %v1506
      %v1508 = vpop.f32.mrb[0].mxu0
      %v1509 = vpop.f32.mrb[0].mxu0
      %v1510 = vadd.f32 %v1342, %v1509
      %v1511 = vpop.f32.mrb[0].mxu0
      %1512 = vmatprep.mubr.bf16.mxu0 0
      %1513 = vmatmul.mubr.bf16.gmra.mrb[0].mxu0 %v1313
      %v1514 = vpop.f32.mrb[0].mxu0
      %v1515 = vadd.f32 %v1342, %v1514
      %v1516 = vpop.f32.mrb[0].mxu0
      %v1517 = vpop.f32.mrb[0].mxu0
      %v1518 = vadd.f32 %v1342, %v1517
      %v1519 = vpop.f32.mrb[0].mxu0
      %1520 = vmatprep.mubr.bf16.mxu0 0
      %1521 = vmatmul.mubr.bf16.gmra.mrb[0].mxu0 %v1314
      %v1522 = vpop.f32.mrb[0].mxu0
      %v1523 = vadd.f32 %v1342, %v1522
      %v1524 = vpop.f32.mrb[0].mxu0
      %v1525 = vpop.f32.mrb[0].mxu0
      %v1526 = vadd.f32 %v1342, %v1525
      %v1527 = vpop.f32.mrb[0].mxu0
      %1528 = vmatprep.mubr.bf16.mxu0 0
      %1529 = vmatmul.mubr.bf16.gmra.mrb[0].mxu0 %v1315
      %v1530 = vpop.f32.mrb[0].mxu0
      %v1531 = vadd.f32 %v1342, %v1530
      %v1532 = vpop.f32.mrb[0].mxu0
      %v1533 = vpop.f32.mrb[0].mxu0
      %v1534 = vadd.f32 %v1342, %v1533
      %v1535 = vpop.f32.mrb[0].mxu0
      %1536 = vmatprep.mubr.bf16.mxu0 0
      %1537 = vmatmul.mubr.bf16.gmra.mrb[0].mxu0 %v1316
      %v1538 = vpop.f32.mrb[0].mxu0
      %v1539 = vadd.f32 %v1342, %v1538
      %v1540 = vpop.f32.mrb[0].mxu0
      %v1541 = vpop.f32.mrb[0].mxu0
      %v1542 = vadd.f32 %v1342, %v1541
      %v1543 = vpop.f32.mrb[0].mxu0
      %1544 = vmatprep.mubr.bf16.mxu0 0
      %1545 = vmatmul.mubr.bf16.gmra.mrb[0].mxu0 %v1317
      %v1546 = vpop.f32.mrb[0].mxu0
      %v1547 = vadd.f32 %v1342, %v1546
      %v1548 = vpop.f32.mrb[0].mxu0
      %v1549 = vpop.f32.mrb[0].mxu0
      %v1550 = vadd.f32 %v1342, %v1549
      %v1551 = vpop.f32.mrb[0].mxu0
      %1552 = vmatprep.mubr.bf16.mxu0 0
      %1553 = vmatmul.mubr.bf16.gmra.mrb[0].mxu0 %v1318
      %v1554 = vpop.f32.mrb[0].mxu0
      %v1555 = vadd.f32 %v1342, %v1554
      %v1556 = vpop.f32.mrb[0].mxu0
      %v1557 = vpop.f32.mrb[0].mxu0
      %v1558 = vadd.f32 %v1342, %v1557
      %v1559 = vpop.f32.mrb[0].mxu0
      %1560 = vmatprep.mubr.bf16.mxu0 0
      %1561 = vmatmul.mubr.bf16.gmra.mrb[0].mxu0 %v1319
      %v1562 = vpop.f32.mrb[0].mxu0
      %v1563 = vadd.f32 %v1342, %v1562
      %v1564 = vpop.f32.mrb[0].mxu0
      %v1565 = vpop.f32.mrb[0].mxu0
      %v1566 = vadd.f32 %v1342, %v1565
      %v1567 = vpop.f32.mrb[0].mxu0
      %1568 = vmatprep.mubr.bf16.mxu0 0
      %1569 = vmatmul.mubr.bf16.gmra.mrb[0].mxu0 %v1320
      %v1570 = vpop.f32.mrb[0].mxu0
      %v1571 = vadd.f32 %v1342, %v1570
      %v1572 = vpop.f32.mrb[0].mxu0
      %v1573 = vpop.f32.mrb[0].mxu0
      %v1574 = vadd.f32 %v1342, %v1573
      %v1575 = vpop.f32.mrb[0].mxu0
      %1576 = vdwg.mxu0
      %v1577 = vpack.c.bf16 %v1430, %v1427
      %v1578 = vpack.c.bf16 %v1438, %v1435
      %v1579 = vpack.c.bf16 %v1446, %v1443
      %v1580 = vpack.c.bf16 %v1454, %v1451
      %v1581 = vpack.c.bf16 %v1462, %v1459
      %v1582 = vpack.c.bf16 %v1470, %v1467
      %v1583 = vpack.c.bf16 %v1478, %v1475
      %v1584 = vpack.c.bf16 %v1486, %v1483
      %v1585 = vpack.c.bf16 %v1494, %v1491
      %v1586 = vpack.c.bf16 %v1502, %v1499
      %v1587 = vpack.c.bf16 %v1510, %v1507
      %v1588 = vpack.c.bf16 %v1518, %v1515
      %v1589 = vpack.c.bf16 %v1526, %v1523
      %v1590 = vpack.c.bf16 %v1534, %v1531
      %v1591 = vpack.c.bf16 %v1542, %v1539
      %v1592 = vpack.c.bf16 %v1550, %v1547
      %v1593 = vpack.c.bf16 %v1558, %v1555
      %v1594 = vpack.c.bf16 %v1566, %v1563
      %v1595 = vpack.c.bf16 %v1574, %v1571
      %vm1596 = vcmp.gt.bf16.partialorder %v1577, 0
      %vm1597 = vcmp.gt.bf16.partialorder %v1578, 0
      %vm1598 = vcmp.gt.bf16.partialorder %v1579, 0
      %vm1599 = vcmp.gt.bf16.partialorder %v1580, 0
      %vm1600 = vcmp.gt.bf16.partialorder %v1581, 0
      %vm1601 = vcmp.gt.bf16.partialorder %v1582, 0
      %vm1602 = vcmp.gt.bf16.partialorder %v1583, 0
      %vm1603 = vcmp.gt.bf16.partialorder %v1584, 0
      %vm1604 = vcmp.gt.bf16.partialorder %v1585, 0
      %vm1605 = vcmp.gt.bf16.partialorder %v1586, 0
      %vm1606 = vcmp.gt.bf16.partialorder %v1587, 0
      %vm1607 = vcmp.gt.bf16.partialorder %v1588, 0
      %vm1608 = vcmp.gt.bf16.partialorder %v1589, 0
      %vm1609 = vcmp.gt.bf16.partialorder %v1590, 0
      %vm1610 = vcmp.gt.bf16.partialorder %v1591, 0
      %vm1611 = vcmp.gt.bf16.partialorder %v1592, 0
      %vm1612 = vcmp.gt.bf16.partialorder %v1593, 0
      %vm1613 = vcmp.gt.bf16.partialorder %v1594, 0
      %vm1614 = vcmp.gt.bf16.partialorder %v1595, 0
      %v1615 = vmul.bf16 %v1577, 1045249613
      %v1616 = vmul.bf16 %v1578, 1045249613
      %v1617 = vmul.bf16 %v1579, 1045249613
      %v1618 = vmul.bf16 %v1580, 1045249613
      %v1619 = vmul.bf16 %v1581, 1045249613
      %v1620 = vmul.bf16 %v1582, 1045249613
      %v1621 = vmul.bf16 %v1583, 1045249613
      %v1622 = vmul.bf16 %v1584, 1045249613
      %v1623 = vmul.bf16 %v1585, 1045249613
      %v1624 = vmul.bf16 %v1586, 1045249613
      %v1625 = vmul.bf16 %v1587, 1045249613
      %v1626 = vmul.bf16 %v1588, 1045249613
      %v1627 = vmul.bf16 %v1589, 1045249613
      %v1628 = vmul.bf16 %v1590, 1045249613
      %v1629 = vmul.bf16 %v1591, 1045249613
      %v1630 = vmul.bf16 %v1592, 1045249613
      %v1631 = vmul.bf16 %v1593, 1045249613
      %v1632 = vmul.bf16 %v1594, 1045249613
      %v1633 = vmul.bf16 %v1595, 1045249613
      %v1634 = vsel %vm1596, %v1577, %v1615
      %v1635 = vsel %vm1597, %v1578, %v1616
      %v1636 = vsel %vm1598, %v1579, %v1617
      %v1637 = vsel %vm1599, %v1580, %v1618
      %v1638 = vsel %vm1600, %v1581, %v1619
      %v1639 = vsel %vm1601, %v1582, %v1620
      %v1640 = vsel %vm1602, %v1583, %v1621
      %v1641 = vsel %vm1603, %v1584, %v1622
      %v1642 = vsel %vm1604, %v1585, %v1623
      %v1643 = vsel %vm1605, %v1586, %v1624
      %v1644 = vsel %vm1606, %v1587, %v1625
      %v1645 = vsel %vm1607, %v1588, %v1626
      %v1646 = vsel %vm1608, %v1589, %v1627
      %v1647 = vsel %vm1609, %v1590, %v1628
      %v1648 = vsel %vm1610, %v1591, %v1629
      %v1649 = vsel %vm1611, %v1592, %v1630
      %v1650 = vsel %vm1612, %v1593, %v1631
      %v1651 = vsel %vm1613, %v1594, %v1632
      %v1652 = vsel %vm1614, %v1595, %v1633
      %v1653 = vld [vmem:[%s7] sm:$0xf]
      %v1654 = vld [vmem:[%s7 + $0x4] sm:$0xf]
      %v1655 = vld [vmem:[%s7 + $0x8] sm:$0xf]
      %v1656 = vld [vmem:[%s7 + $0xc] sm:$0xf]
      %v1657 = vld [vmem:[%s7 + $0x10] sm:$0xf]
      %v1658 = vld [vmem:[%s7 + $0x14] sm:$0xf]
      %v1659 = vld [vmem:[%s7 + $0x18] sm:$0xf]
      %v1660 = vld [vmem:[%s7 + $0x1c] sm:$0xf]
      %v1661 = vld [vmem:[%s7 + $0x20] sm:$0xf]
      %v1662 = vld [vmem:[%s7 + $0x24] sm:$0xf]
      %v1663 = vld [vmem:[%s7 + $0x28] sm:$0xf]
      %v1664 = vld [vmem:[%s7 + $0x2c] sm:$0xf]
      %v1665 = vld [vmem:[%s7 + $0x30] sm:$0xf]
      %v1666 = vld [vmem:[%s7 + $0x34] sm:$0xf]
      %v1667 = vld [vmem:[%s7 + $0x38] sm:$0xf]
      %v1668 = vld [vmem:[%s7 + $0x3c] sm:$0xf]
      %v1669 = vld [vmem:[%s8] sm:$0x1]
      %v1671 = vlaneseq
      %v1672 = vshrl.u32 %v1671, 7
      %v1673 = vsub.s32 0, %v1672
      %v1674 = vrot.slane %v1669, %v1673
      %v1692 = vunpack.c.l.b16 %v1653
      %v1693 = vunpack.c.l.b16 %v1654
      %v1694 = vunpack.c.l.b16 %v1655
      %v1695 = vunpack.c.l.b16 %v1656
      %v1696 = vunpack.c.l.b16 %v1657
      %v1697 = vunpack.c.l.b16 %v1658
      %v1698 = vunpack.c.l.b16 %v1659
      %v1699 = vunpack.c.l.b16 %v1660
      %v1700 = vunpack.c.l.b16 %v1661
      %v1701 = vunpack.c.l.b16 %v1662
      %v1702 = vunpack.c.l.b16 %v1663
      %v1703 = vunpack.c.l.b16 %v1664
      %v1704 = vunpack.c.l.b16 %v1665
      %v1705 = vunpack.c.l.b16 %v1666
      %v1706 = vunpack.c.l.b16 %v1667
      %v1707 = vunpack.c.l.b16 %v1668
      %v1708 = vpack.c.b16 %v1693, %v1692
      %v1709 = vpack.c.b16 %v1695, %v1694
      %v1710 = vpack.c.b16 %v1697, %v1696
      %v1711 = vpack.c.b16 %v1699, %v1698
      %v1712 = vpack.c.b16 %v1701, %v1700
      %v1713 = vpack.c.b16 %v1703, %v1702
      %v1714 = vpack.c.b16 %v1705, %v1704
      %v1715 = vpack.c.b16 %v1707, %v1706
      %1724 = vmatprep.subr.bf16.mxu0 0
      %1725 = vmatpush1.bf16.msra.mxu0 %v1708
      %1726 = vmatprep.subr.bf16.mxu0 0
      %1727 = vmatpush1.bf16.msra.mxu0 %v1709
      %1728 = vmatprep.subr.bf16.mxu0 0
      %1729 = vmatpush1.bf16.msra.mxu0 %v1710
      %1730 = vmatprep.subr.bf16.mxu0 0
      %1731 = vmatpush1.bf16.msra.mxu0 %v1711
      %1732 = vmatprep.subr.bf16.mxu0 0
      %1733 = vmatpush1.bf16.msra.mxu0 %v1712
      %1734 = vmatprep.subr.bf16.mxu0 0
      %1735 = vmatpush1.bf16.msra.mxu0 %v1713
      %1736 = vmatprep.subr.bf16.mxu0 0
      %1737 = vmatpush1.bf16.msra.mxu0 %v1714
      %1738 = vmatprep.subr.bf16.mxu0 0
      %1739 = vmatpush1.bf16.msra.mxu0 %v1715
      %1740 = vmatprep.subr.bf16.mxu0 0
      %1741 = vmatpush1.bf16.msra.mxu0 0
      %1742 = vmatprep.subr.bf16.mxu0 0
      %1743 = vmatpush1.bf16.msra.mxu0 0
      %1744 = vmatprep.subr.bf16.mxu0 0
      %1745 = vmatpush1.bf16.msra.mxu0 0
      %1746 = vmatprep.subr.bf16.mxu0 0
      %1747 = vmatpush1.bf16.msra.mxu0 0
      %1748 = vmatprep.subr.bf16.mxu0 0
      %1749 = vmatpush1.bf16.msra.mxu0 0
      %1750 = vmatprep.subr.bf16.mxu0 0
      %1751 = vmatpush1.bf16.msra.mxu0 0
      %1752 = vmatprep.subr.bf16.mxu0 0
      %1753 = vmatpush1.bf16.msra.mxu0 0
      %1754 = vmatprep.subr.bf16.mxu0 0
      %1755 = vmatpush1.bf16.msra.mxu0 0
      %1756 = vmatprep.mubr.bf16.mxu0 0
      %1757 = vmatmul.mubr.bf16.gmra.mrb[0].mxu0 %v1634
      %v1758 = vpop.f32.mrb[0].mxu0
      %v1759 = vadd.f32 %v1674, %v1758
      %v1760 = vpop.f32.mrb[0].mxu0
      %v1761 = vpop.f32.mrb[0].mxu0
      %v1762 = vadd.f32 %v1674, %v1761
      %v1763 = vpop.f32.mrb[0].mxu0
      %1764 = vmatprep.mubr.bf16.mxu0 0
      %1765 = vmatmul.mubr.bf16.gmra.mrb[0].mxu0 %v1635
      %v1766 = vpop.f32.mrb[0].mxu0
      %v1767 = vadd.f32 %v1674, %v1766
      %v1768 = vpop.f32.mrb[0].mxu0
      %v1769 = vpop.f32.mrb[0].mxu0
      %v1770 = vadd.f32 %v1674, %v1769
      %v1771 = vpop.f32.mrb[0].mxu0
      %1772 = vmatprep.mubr.bf16.mxu0 0
      %1773 = vmatmul.mubr.bf16.gmra.mrb[0].mxu0 %v1636
      %v1774 = vpop.f32.mrb[0].mxu0
      %v1775 = vadd.f32 %v1674, %v1774
      %v1776 = vpop.f32.mrb[0].mxu0
      %v1777 = vpop.f32.mrb[0].mxu0
      %v1778 = vadd.f32 %v1674, %v1777
      %v1779 = vpop.f32.mrb[0].mxu0
      %1780 = vmatprep.mubr.bf16.mxu0 0
      %1781 = vmatmul.mubr.bf16.gmra.mrb[0].mxu0 %v1637
      %v1782 = vpop.f32.mrb[0].mxu0
      %v1783 = vadd.f32 %v1674, %v1782
      %v1784 = vpop.f32.mrb[0].mxu0
      %v1785 = vpop.f32.mrb[0].mxu0
      %v1786 = vadd.f32 %v1674, %v1785
      %v1787 = vpop.f32.mrb[0].mxu0
      %1788 = vmatprep.mubr.bf16.mxu0 0
      %1789 = vmatmul.mubr.bf16.gmra.mrb[0].mxu0 %v1638
      %v1790 = vpop.f32.mrb[0].mxu0
      %v1791 = vadd.f32 %v1674, %v1790
      %v1792 = vpop.f32.mrb[0].mxu0
      %v1793 = vpop.f32.mrb[0].mxu0
      %v1794 = vadd.f32 %v1674, %v1793
      %v1795 = vpop.f32.mrb[0].mxu0
      %1796 = vmatprep.mubr.bf16.mxu0 0
      %1797 = vmatmul.mubr.bf16.gmra.mrb[0].mxu0 %v1639
      %v1798 = vpop.f32.mrb[0].mxu0
      %v1799 = vadd.f32 %v1674, %v1798
      %v1800 = vpop.f32.mrb[0].mxu0
      %v1801 = vpop.f32.mrb[0].mxu0
      %v1802 = vadd.f32 %v1674, %v1801
      %v1803 = vpop.f32.mrb[0].mxu0
      %1804 = vmatprep.mubr.bf16.mxu0 0
      %1805 = vmatmul.mubr.bf16.gmra.mrb[0].mxu0 %v1640
      %v1806 = vpop.f32.mrb[0].mxu0
      %v1807 = vadd.f32 %v1674, %v1806
      %v1808 = vpop.f32.mrb[0].mxu0
      %v1809 = vpop.f32.mrb[0].mxu0
      %v1810 = vadd.f32 %v1674, %v1809
      %v1811 = vpop.f32.mrb[0].mxu0
      %1812 = vmatprep.mubr.bf16.mxu0 0
      %1813 = vmatmul.mubr.bf16.gmra.mrb[0].mxu0 %v1641
      %v1814 = vpop.f32.mrb[0].mxu0
      %v1815 = vadd.f32 %v1674, %v1814
      %v1816 = vpop.f32.mrb[0].mxu0
      %v1817 = vpop.f32.mrb[0].mxu0
      %v1818 = vadd.f32 %v1674, %v1817
      %v1819 = vpop.f32.mrb[0].mxu0
      %1820 = vmatprep.mubr.bf16.mxu0 0
      %1821 = vmatmul.mubr.bf16.gmra.mrb[0].mxu0 %v1642
      %v1822 = vpop.f32.mrb[0].mxu0
      %v1823 = vadd.f32 %v1674, %v1822
      %v1824 = vpop.f32.mrb[0].mxu0
      %v1825 = vpop.f32.mrb[0].mxu0
      %v1826 = vadd.f32 %v1674, %v1825
      %v1827 = vpop.f32.mrb[0].mxu0
      %1828 = vmatprep.mubr.bf16.mxu0 0
      %1829 = vmatmul.mubr.bf16.gmra.mrb[0].mxu0 %v1643
      %v1830 = vpop.f32.mrb[0].mxu0
      %v1831 = vadd.f32 %v1674, %v1830
      %v1832 = vpop.f32.mrb[0].mxu0
      %v1833 = vpop.f32.mrb[0].mxu0
      %v1834 = vadd.f32 %v1674, %v1833
      %v1835 = vpop.f32.mrb[0].mxu0
      %1836 = vmatprep.mubr.bf16.mxu0 0
      %1837 = vmatmul.mubr.bf16.gmra.mrb[0].mxu0 %v1644
      %v1838 = vpop.f32.mrb[0].mxu0
      %v1839 = vadd.f32 %v1674, %v1838
      %v1840 = vpop.f32.mrb[0].mxu0
      %v1841 = vpop.f32.mrb[0].mxu0
      %v1842 = vadd.f32 %v1674, %v1841
      %v1843 = vpop.f32.mrb[0].mxu0
      %1844 = vmatprep.mubr.bf16.mxu0 0
      %1845 = vmatmul.mubr.bf16.gmra.mrb[0].mxu0 %v1645
      %v1846 = vpop.f32.mrb[0].mxu0
      %v1847 = vadd.f32 %v1674, %v1846
      %v1848 = vpop.f32.mrb[0].mxu0
      %v1849 = vpop.f32.mrb[0].mxu0
      %v1850 = vadd.f32 %v1674, %v1849
      %v1851 = vpop.f32.mrb[0].mxu0
      %1852 = vmatprep.mubr.bf16.mxu0 0
      %1853 = vmatmul.mubr.bf16.gmra.mrb[0].mxu0 %v1646
      %v1854 = vpop.f32.mrb[0].mxu0
      %v1855 = vadd.f32 %v1674, %v1854
      %v1856 = vpop.f32.mrb[0].mxu0
      %v1857 = vpop.f32.mrb[0].mxu0
      %v1858 = vadd.f32 %v1674, %v1857
      %v1859 = vpop.f32.mrb[0].mxu0
      %1860 = vmatprep.mubr.bf16.mxu0 0
      %1861 = vmatmul.mubr.bf16.gmra.mrb[0].mxu0 %v1647
      %v1862 = vpop.f32.mrb[0].mxu0
      %v1863 = vadd.f32 %v1674, %v1862
      %v1864 = vpop.f32.mrb[0].mxu0
      %v1865 = vpop.f32.mrb[0].mxu0
      %v1866 = vadd.f32 %v1674, %v1865
      %v1867 = vpop.f32.mrb[0].mxu0
      %1868 = vmatprep.mubr.bf16.mxu0 0
      %1869 = vmatmul.mubr.bf16.gmra.mrb[0].mxu0 %v1648
      %v1870 = vpop.f32.mrb[0].mxu0
      %v1871 = vadd.f32 %v1674, %v1870
      %v1872 = vpop.f32.mrb[0].mxu0
      %v1873 = vpop.f32.mrb[0].mxu0
      %v1874 = vadd.f32 %v1674, %v1873
      %v1875 = vpop.f32.mrb[0].mxu0
      %1876 = vmatprep.mubr.bf16.mxu0 0
      %1877 = vmatmul.mubr.bf16.gmra.mrb[0].mxu0 %v1649
      %v1878 = vpop.f32.mrb[0].mxu0
      %v1879 = vadd.f32 %v1674, %v1878
      %v1880 = vpop.f32.mrb[0].mxu0
      %v1881 = vpop.f32.mrb[0].mxu0
      %v1882 = vadd.f32 %v1674, %v1881
      %v1883 = vpop.f32.mrb[0].mxu0
      %1884 = vmatprep.mubr.bf16.mxu0 0
      %1885 = vmatmul.mubr.bf16.gmra.mrb[0].mxu0 %v1650
      %v1886 = vpop.f32.mrb[0].mxu0
      %v1887 = vadd.f32 %v1674, %v1886
      %v1888 = vpop.f32.mrb[0].mxu0
      %v1889 = vpop.f32.mrb[0].mxu0
      %v1890 = vadd.f32 %v1674, %v1889
      %v1891 = vpop.f32.mrb[0].mxu0
      %1892 = vmatprep.mubr.bf16.mxu0 0
      %1893 = vmatmul.mubr.bf16.gmra.mrb[0].mxu0 %v1651
      %v1894 = vpop.f32.mrb[0].mxu0
      %v1895 = vadd.f32 %v1674, %v1894
      %v1896 = vpop.f32.mrb[0].mxu0
      %v1897 = vpop.f32.mrb[0].mxu0
      %v1898 = vadd.f32 %v1674, %v1897
      %v1899 = vpop.f32.mrb[0].mxu0
      %1900 = vmatprep.mubr.bf16.mxu0 0
      %1901 = vmatmul.mubr.bf16.gmra.mrb[0].mxu0 %v1652
      %v1902 = vpop.f32.mrb[0].mxu0
      %v1903 = vadd.f32 %v1674, %v1902
      %v1904 = vpop.f32.mrb[0].mxu0
      %v1905 = vpop.f32.mrb[0].mxu0
      %v1906 = vadd.f32 %v1674, %v1905
      %v1907 = vpop.f32.mrb[0].mxu0
      %1908 = vdwg.mxu0
      %v1909 = vxor.u32 %v1759, 2147483648
      %v1910 = vxor.u32 %v1762, 2147483648
      %v1911 = vxor.u32 %v1767, 2147483648
      %v1912 = vxor.u32 %v1770, 2147483648
      %v1913 = vxor.u32 %v1775, 2147483648
      %v1914 = vxor.u32 %v1778, 2147483648
      %v1915 = vxor.u32 %v1783, 2147483648
      %v1916 = vxor.u32 %v1786, 2147483648
      %v1917 = vxor.u32 %v1791, 2147483648
      %v1918 = vxor.u32 %v1794, 2147483648
      %v1919 = vxor.u32 %v1799, 2147483648
      %v1920 = vxor.u32 %v1802, 2147483648
      %v1921 = vxor.u32 %v1807, 2147483648
      %v1922 = vxor.u32 %v1810, 2147483648
      %v1923 = vxor.u32 %v1815, 2147483648
      %v1924 = vxor.u32 %v1818, 2147483648
      %v1925 = vxor.u32 %v1823, 2147483648
      %v1926 = vxor.u32 %v1826, 2147483648
      %v1927 = vxor.u32 %v1831, 2147483648
      %v1928 = vxor.u32 %v1834, 2147483648
      %v1929 = vxor.u32 %v1839, 2147483648
      %v1930 = vxor.u32 %v1842, 2147483648
      %v1931 = vxor.u32 %v1847, 2147483648
      %v1932 = vxor.u32 %v1850, 2147483648
      %v1933 = vxor.u32 %v1855, 2147483648
      %v1934 = vxor.u32 %v1858, 2147483648
      %v1935 = vxor.u32 %v1863, 2147483648
      %v1936 = vxor.u32 %v1866, 2147483648
      %v1937 = vxor.u32 %v1871, 2147483648
      %v1938 = vxor.u32 %v1874, 2147483648
      %v1939 = vxor.u32 %v1879, 2147483648
      %v1940 = vxor.u32 %v1882, 2147483648
      %v1941 = vxor.u32 %v1887, 2147483648
      %v1942 = vxor.u32 %v1890, 2147483648
      %v1943 = vxor.u32 %v1895, 2147483648
      %v1944 = vxor.u32 %v1898, 2147483648
      %v1945 = vxor.u32 %v1903, 2147483648
      %v1946 = vxor.u32 %v1906, 2147483648
      %v1947 = vmul.f32 %v1909, 1.442695
      %v1948 = vpow.pop %v1947
      %v1949 = vmul.f32 %v1910, 1.442695
      %v1950 = vpow.pop %v1949
      %v1951 = vmul.f32 %v1911, 1.442695
      %v1952 = vpow.pop %v1951
      %v1953 = vmul.f32 %v1912, 1.442695
      %v1954 = vpow.pop %v1953
      %v1955 = vmul.f32 %v1913, 1.442695
      %v1956 = vpow.pop %v1955
      %v1957 = vmul.f32 %v1914, 1.442695
      %v1958 = vpow.pop %v1957
      %v1959 = vmul.f32 %v1915, 1.442695
      %v1960 = vpow.pop %v1959
      %v1961 = vmul.f32 %v1916, 1.442695
      %v1962 = vpow.pop %v1961
      %v1963 = vmul.f32 %v1917, 1.442695
      %v1964 = vpow.pop %v1963
      %v1965 = vmul.f32 %v1918, 1.442695
      %v1966 = vpow.pop %v1965
      %v1967 = vmul.f32 %v1919, 1.442695
      %v1968 = vpow.pop %v1967
      %v1969 = vmul.f32 %v1920, 1.442695
      %v1970 = vpow.pop %v1969
      %v1971 = vmul.f32 %v1921, 1.442695
      %v1972 = vpow.pop %v1971
      %v1973 = vmul.f32 %v1922, 1.442695
      %v1974 = vpow.pop %v1973
      %v1975 = vmul.f32 %v1923, 1.442695
      %v1976 = vpow.pop %v1975
      %v1977 = vmul.f32 %v1924, 1.442695
      %v1978 = vpow.pop %v1977
      %v1979 = vmul.f32 %v1925, 1.442695
      %v1980 = vpow.pop %v1979
      %v1981 = vmul.f32 %v1926, 1.442695
      %v1982 = vpow.pop %v1981
      %v1983 = vmul.f32 %v1927, 1.442695
      %v1984 = vpow.pop %v1983
      %v1985 = vmul.f32 %v1928, 1.442695
      %v1986 = vpow.pop %v1985
      %v1987 = vmul.f32 %v1929, 1.442695
      %v1988 = vpow.pop %v1987
      %v1989 = vmul.f32 %v1930, 1.442695
      %v1990 = vpow.pop %v1989
      %v1991 = vmul.f32 %v1931, 1.442695
      %v1992 = vpow.pop %v1991
      %v1993 = vmul.f32 %v1932, 1.442695
      %v1994 = vpow.pop %v1993
      %v1995 = vmul.f32 %v1933, 1.442695
      %v1996 = vpow.pop %v1995
      %v1997 = vmul.f32 %v1934, 1.442695
      %v1998 = vpow.pop %v1997
      %v1999 = vmul.f32 %v1935, 1.442695
      %v2000 = vpow.pop %v1999
      %v2001 = vmul.f32 %v1936, 1.442695
      %v2002 = vpow.pop %v2001
      %v2003 = vmul.f32 %v1937, 1.442695
      %v2004 = vpow.pop %v2003
      %v2005 = vmul.f32 %v1938, 1.442695
      %v2006 = vpow.pop %v2005
      %v2007 = vmul.f32 %v1939, 1.442695
      %v2008 = vpow.pop %v2007
      %v2009 = vmul.f32 %v1940, 1.442695
      %v2010 = vpow.pop %v2009
      %v2011 = vmul.f32 %v1941, 1.442695
      %v2012 = vpow.pop %v2011
      %v2013 = vmul.f32 %v1942, 1.442695
      %v2014 = vpow.pop %v2013
      %v2015 = vmul.f32 %v1943, 1.442695
      %v2016 = vpow.pop %v2015
      %v2017 = vmul.f32 %v1944, 1.442695
      %v2018 = vpow.pop %v2017
      %v2019 = vmul.f32 %v1945, 1.442695
      %v2020 = vpow.pop %v2019
      %v2021 = vmul.f32 %v1946, 1.442695
      %v2022 = vpow.pop %v2021
      %v2023 = vadd.f32 %v1948, 1.0
      %v2024 = vadd.f32 %v1950, 1.0
      %v2025 = vadd.f32 %v1952, 1.0
      %v2026 = vadd.f32 %v1954, 1.0
      %v2027 = vadd.f32 %v1956, 1.0
      %v2028 = vadd.f32 %v1958, 1.0
      %v2029 = vadd.f32 %v1960, 1.0
      %v2030 = vadd.f32 %v1962, 1.0
      %v2031 = vadd.f32 %v1964, 1.0
      %v2032 = vadd.f32 %v1966, 1.0
      %v2033 = vadd.f32 %v1968, 1.0
      %v2034 = vadd.f32 %v1970, 1.0
      %v2035 = vadd.f32 %v1972, 1.0
      %v2036 = vadd.f32 %v1974, 1.0
      %v2037 = vadd.f32 %v1976, 1.0
      %v2038 = vadd.f32 %v1978, 1.0
      %v2039 = vadd.f32 %v1980, 1.0
      %v2040 = vadd.f32 %v1982, 1.0
      %v2041 = vadd.f32 %v1984, 1.0
      %v2042 = vadd.f32 %v1986, 1.0
      %v2043 = vadd.f32 %v1988, 1.0
      %v2044 = vadd.f32 %v1990, 1.0
      %v2045 = vadd.f32 %v1992, 1.0
      %v2046 = vadd.f32 %v1994, 1.0
      %v2047 = vadd.f32 %v1996, 1.0
      %v2048 = vadd.f32 %v1998, 1.0
      %v2049 = vadd.f32 %v2000, 1.0
      %v2050 = vadd.f32 %v2002, 1.0
      %v2051 = vadd.f32 %v2004, 1.0
      %v2052 = vadd.f32 %v2006, 1.0
      %v2053 = vadd.f32 %v2008, 1.0
      %v2054 = vadd.f32 %v2010, 1.0
      %v2055 = vadd.f32 %v2012, 1.0
      %v2056 = vadd.f32 %v2014, 1.0
      %v2057 = vadd.f32 %v2016, 1.0
      %v2058 = vadd.f32 %v2018, 1.0
      %v2059 = vadd.f32 %v2020, 1.0
      %v2060 = vadd.f32 %v2022, 1.0
      %v2061 = vrcp.pop %v2023
      %v2062 = vmul.f32 1.0, %v2061
      %v2063 = vrcp.pop %v2024
      %v2064 = vmul.f32 1.0, %v2063
      %v2065 = vrcp.pop %v2025
      %v2066 = vmul.f32 1.0, %v2065
      %v2067 = vrcp.pop %v2026
      %v2068 = vmul.f32 1.0, %v2067
      %v2069 = vrcp.pop %v2027
      %v2070 = vmul.f32 1.0, %v2069
      %v2071 = vrcp.pop %v2028
      %v2072 = vmul.f32 1.0, %v2071
      %v2073 = vrcp.pop %v2029
      %v2074 = vmul.f32 1.0, %v2073
      %v2075 = vrcp.pop %v2030
      %v2076 = vmul.f32 1.0, %v2075
      %v2077 = vrcp.pop %v2031
      %v2078 = vmul.f32 1.0, %v2077
      %v2079 = vrcp.pop %v2032
      %v2080 = vmul.f32 1.0, %v2079
      %v2081 = vrcp.pop %v2033
      %v2082 = vmul.f32 1.0, %v2081
      %v2083 = vrcp.pop %v2034
      %v2084 = vmul.f32 1.0, %v2083
      %v2085 = vrcp.pop %v2035
      %v2086 = vmul.f32 1.0, %v2085
      %v2087 = vrcp.pop %v2036
      %v2088 = vmul.f32 1.0, %v2087
      %v2089 = vrcp.pop %v2037
      %v2090 = vmul.f32 1.0, %v2089
      %v2091 = vrcp.pop %v2038
      %v2092 = vmul.f32 1.0, %v2091
      %v2093 = vrcp.pop %v2039
      %v2094 = vmul.f32 1.0, %v2093
      %v2095 = vrcp.pop %v2040
      %v2096 = vmul.f32 1.0, %v2095
      %v2097 = vrcp.pop %v2041
      %v2098 = vmul.f32 1.0, %v2097
      %v2099 = vrcp.pop %v2042
      %v2100 = vmul.f32 1.0, %v2099
      %v2101 = vrcp.pop %v2043
      %v2102 = vmul.f32 1.0, %v2101
      %v2103 = vrcp.pop %v2044
      %v2104 = vmul.f32 1.0, %v2103
      %v2105 = vrcp.pop %v2045
      %v2106 = vmul.f32 1.0, %v2105
      %v2107 = vrcp.pop %v2046
      %v2108 = vmul.f32 1.0, %v2107
      %v2109 = vrcp.pop %v2047
      %v2110 = vmul.f32 1.0, %v2109
      %v2111 = vrcp.pop %v2048
      %v2112 = vmul.f32 1.0, %v2111
      %v2113 = vrcp.pop %v2049
      %v2114 = vmul.f32 1.0, %v2113
      %v2115 = vrcp.pop %v2050
      %v2116 = vmul.f32 1.0, %v2115
      %v2117 = vrcp.pop %v2051
      %v2118 = vmul.f32 1.0, %v2117
      %v2119 = vrcp.pop %v2052
      %v2120 = vmul.f32 1.0, %v2119
      %v2121 = vrcp.pop %v2053
      %v2122 = vmul.f32 1.0, %v2121
      %v2123 = vrcp.pop %v2054
      %v2124 = vmul.f32 1.0, %v2123
      %v2125 = vrcp.pop %v2055
      %v2126 = vmul.f32 1.0, %v2125
      %v2127 = vrcp.pop %v2056
      %v2128 = vmul.f32 1.0, %v2127
      %v2129 = vrcp.pop %v2057
      %v2130 = vmul.f32 1.0, %v2129
      %v2131 = vrcp.pop %v2058
      %v2132 = vmul.f32 1.0, %v2131
      %v2133 = vrcp.pop %v2059
      %v2134 = vmul.f32 1.0, %v2133
      %v2135 = vrcp.pop %v2060
      %v2136 = vmul.f32 1.0, %v2135
      %v2137 = vld [vmem:[%s9] sm:$0xf]
      %v2138 = vld [vmem:[%s9 + $0x4] sm:$0xf]
      %v2139 = vld [vmem:[%s9 + $0x8] sm:$0xf]
      %v2140 = vld [vmem:[%s9 + $0xc] sm:$0xf]
      %v2141 = vld [vmem:[%s9 + $0x10] sm:$0xf]
      %v2142 = vld [vmem:[%s9 + $0x14] sm:$0xf]
      %v2143 = vld [vmem:[%s9 + $0x18] sm:$0xf]
      %v2144 = vld [vmem:[%s9 + $0x1c] sm:$0xf]
      %v2145 = vld [vmem:[%s9 + $0x20] sm:$0xf]
      %v2146 = vld [vmem:[%s9 + $0x24] sm:$0xf]
      %v2147 = vld [vmem:[%s9 + $0x28] sm:$0xf]
      %v2148 = vld [vmem:[%s9 + $0x2c] sm:$0xf]
      %v2149 = vld [vmem:[%s9 + $0x30] sm:$0xf]
      %v2150 = vld [vmem:[%s9 + $0x34] sm:$0xf]
      %v2151 = vld [vmem:[%s9 + $0x38] sm:$0xf]
      %v2152 = vld [vmem:[%s9 + $0x3c] sm:$0xf]
      %v2153 = vld [vmem:[%s10] sm:$0x1]
      %v2155 = vlaneseq
      %v2156 = vshrl.u32 %v2155, 7
      %v2157 = vsub.s32 0, %v2156
      %v2158 = vrot.slane %v2153, %v2157
      %v2176 = vunpack.c.l.b16 %v2137
      %v2177 = vunpack.c.l.b16 %v2138
      %v2178 = vunpack.c.l.b16 %v2139
      %v2179 = vunpack.c.l.b16 %v2140
      %v2180 = vunpack.c.l.b16 %v2141
      %v2181 = vunpack.c.l.b16 %v2142
      %v2182 = vunpack.c.l.b16 %v2143
      %v2183 = vunpack.c.l.b16 %v2144
      %v2184 = vunpack.c.l.b16 %v2145
      %v2185 = vunpack.c.l.b16 %v2146
      %v2186 = vunpack.c.l.b16 %v2147
      %v2187 = vunpack.c.l.b16 %v2148
      %v2188 = vunpack.c.l.b16 %v2149
      %v2189 = vunpack.c.l.b16 %v2150
      %v2190 = vunpack.c.l.b16 %v2151
      %v2191 = vunpack.c.l.b16 %v2152
      %v2192 = vpack.c.b16 %v2177, %v2176
      %v2193 = vpack.c.b16 %v2179, %v2178
      %v2194 = vpack.c.b16 %v2181, %v2180
      %v2195 = vpack.c.b16 %v2183, %v2182
      %v2196 = vpack.c.b16 %v2185, %v2184
      %v2197 = vpack.c.b16 %v2187, %v2186
      %v2198 = vpack.c.b16 %v2189, %v2188
      %v2199 = vpack.c.b16 %v2191, %v2190
      %2208 = vmatprep.subr.bf16.mxu0 0
      %2209 = vmatpush1.bf16.msra.mxu0 %v2192
      %2210 = vmatprep.subr.bf16.mxu0 0
      %2211 = vmatpush1.bf16.msra.mxu0 %v2193
      %2212 = vmatprep.subr.bf16.mxu0 0
      %2213 = vmatpush1.bf16.msra.mxu0 %v2194
      %2214 = vmatprep.subr.bf16.mxu0 0
      %2215 = vmatpush1.bf16.msra.mxu0 %v2195
      %2216 = vmatprep.subr.bf16.mxu0 0
      %2217 = vmatpush1.bf16.msra.mxu0 %v2196
      %2218 = vmatprep.subr.bf16.mxu0 0
      %2219 = vmatpush1.bf16.msra.mxu0 %v2197
      %2220 = vmatprep.subr.bf16.mxu0 0
      %2221 = vmatpush1.bf16.msra.mxu0 %v2198
      %2222 = vmatprep.subr.bf16.mxu0 0
      %2223 = vmatpush1.bf16.msra.mxu0 %v2199
      %2224 = vmatprep.subr.bf16.mxu0 0
      %2225 = vmatpush1.bf16.msra.mxu0 0
      %2226 = vmatprep.subr.bf16.mxu0 0
      %2227 = vmatpush1.bf16.msra.mxu0 0
      %2228 = vmatprep.subr.bf16.mxu0 0
      %2229 = vmatpush1.bf16.msra.mxu0 0
      %2230 = vmatprep.subr.bf16.mxu0 0
      %2231 = vmatpush1.bf16.msra.mxu0 0
      %2232 = vmatprep.subr.bf16.mxu0 0
      %2233 = vmatpush1.bf16.msra.mxu0 0
      %2234 = vmatprep.subr.bf16.mxu0 0
      %2235 = vmatpush1.bf16.msra.mxu0 0
      %2236 = vmatprep.subr.bf16.mxu0 0
      %2237 = vmatpush1.bf16.msra.mxu0 0
      %2238 = vmatprep.subr.bf16.mxu0 0
      %2239 = vmatpush1.bf16.msra.mxu0 0
      %2240 = vmatprep.mubr.bf16.mxu0 0
      %2241 = vmatmul.mubr.bf16.gmra.mrb[0].mxu0 %v970
      %v2242 = vpop.f32.mrb[0].mxu0
      %v2243 = vadd.f32 %v2158, %v2242
      %v2244 = vpop.f32.mrb[0].mxu0
      %v2245 = vpop.f32.mrb[0].mxu0
      %v2246 = vadd.f32 %v2158, %v2245
      %v2247 = vpop.f32.mrb[0].mxu0
      %2248 = vmatprep.mubr.bf16.mxu0 0
      %2249 = vmatmul.mubr.bf16.gmra.mrb[0].mxu0 %v971
      %v2250 = vpop.f32.mrb[0].mxu0
      %v2251 = vadd.f32 %v2158, %v2250
      %v2252 = vpop.f32.mrb[0].mxu0
      %v2253 = vpop.f32.mrb[0].mxu0
      %v2254 = vadd.f32 %v2158, %v2253
      %v2255 = vpop.f32.mrb[0].mxu0
      %2256 = vmatprep.mubr.bf16.mxu0 0
      %2257 = vmatmul.mubr.bf16.gmra.mrb[0].mxu0 %v972
      %v2258 = vpop.f32.mrb[0].mxu0
      %v2259 = vadd.f32 %v2158, %v2258
      %v2260 = vpop.f32.mrb[0].mxu0
      %v2261 = vpop.f32.mrb[0].mxu0
      %v2262 = vadd.f32 %v2158, %v2261
      %v2263 = vpop.f32.mrb[0].mxu0
      %2264 = vmatprep.mubr.bf16.mxu0 0
      %2265 = vmatmul.mubr.bf16.gmra.mrb[0].mxu0 %v973
      %v2266 = vpop.f32.mrb[0].mxu0
      %v2267 = vadd.f32 %v2158, %v2266
      %v2268 = vpop.f32.mrb[0].mxu0
      %v2269 = vpop.f32.mrb[0].mxu0
      %v2270 = vadd.f32 %v2158, %v2269
      %v2271 = vpop.f32.mrb[0].mxu0
      %2272 = vmatprep.mubr.bf16.mxu0 0
      %2273 = vmatmul.mubr.bf16.gmra.mrb[0].mxu0 %v974
      %v2274 = vpop.f32.mrb[0].mxu0
      %v2275 = vadd.f32 %v2158, %v2274
      %v2276 = vpop.f32.mrb[0].mxu0
      %v2277 = vpop.f32.mrb[0].mxu0
      %v2278 = vadd.f32 %v2158, %v2277
      %v2279 = vpop.f32.mrb[0].mxu0
      %2280 = vmatprep.mubr.bf16.mxu0 0
      %2281 = vmatmul.mubr.bf16.gmra.mrb[0].mxu0 %v975
      %v2282 = vpop.f32.mrb[0].mxu0
      %v2283 = vadd.f32 %v2158, %v2282
      %v2284 = vpop.f32.mrb[0].mxu0
      %v2285 = vpop.f32.mrb[0].mxu0
      %v2286 = vadd.f32 %v2158, %v2285
      %v2287 = vpop.f32.mrb[0].mxu0
      %2288 = vmatprep.mubr.bf16.mxu0 0
      %2289 = vmatmul.mubr.bf16.gmra.mrb[0].mxu0 %v976
      %v2290 = vpop.f32.mrb[0].mxu0
      %v2291 = vadd.f32 %v2158, %v2290
      %v2292 = vpop.f32.mrb[0].mxu0
      %v2293 = vpop.f32.mrb[0].mxu0
      %v2294 = vadd.f32 %v2158, %v2293
      %v2295 = vpop.f32.mrb[0].mxu0
      %2296 = vmatprep.mubr.bf16.mxu0 0
      %2297 = vmatmul.mubr.bf16.gmra.mrb[0].mxu0 %v977
      %v2298 = vpop.f32.mrb[0].mxu0
      %v2299 = vadd.f32 %v2158, %v2298
      %v2300 = vpop.f32.mrb[0].mxu0
      %v2301 = vpop.f32.mrb[0].mxu0
      %v2302 = vadd.f32 %v2158, %v2301
      %v2303 = vpop.f32.mrb[0].mxu0
      %2304 = vmatprep.mubr.bf16.mxu0 0
      %2305 = vmatmul.mubr.bf16.gmra.mrb[0].mxu0 %v978
      %v2306 = vpop.f32.mrb[0].mxu0
      %v2307 = vadd.f32 %v2158, %v2306
      %v2308 = vpop.f32.mrb[0].mxu0
      %v2309 = vpop.f32.mrb[0].mxu0
      %v2310 = vadd.f32 %v2158, %v2309
      %v2311 = vpop.f32.mrb[0].mxu0
      %2312 = vmatprep.mubr.bf16.mxu0 0
      %2313 = vmatmul.mubr.bf16.gmra.mrb[0].mxu0 %v979
      %v2314 = vpop.f32.mrb[0].mxu0
      %v2315 = vadd.f32 %v2158, %v2314
      %v2316 = vpop.f32.mrb[0].mxu0
      %v2317 = vpop.f32.mrb[0].mxu0
      %v2318 = vadd.f32 %v2158, %v2317
      %v2319 = vpop.f32.mrb[0].mxu0
      %2320 = vmatprep.mubr.bf16.mxu0 0
      %2321 = vmatmul.mubr.bf16.gmra.mrb[0].mxu0 %v980
      %v2322 = vpop.f32.mrb[0].mxu0
      %v2323 = vadd.f32 %v2158, %v2322
      %v2324 = vpop.f32.mrb[0].mxu0
      %v2325 = vpop.f32.mrb[0].mxu0
      %v2326 = vadd.f32 %v2158, %v2325
      %v2327 = vpop.f32.mrb[0].mxu0
      %2328 = vmatprep.mubr.bf16.mxu0 0
      %2329 = vmatmul.mubr.bf16.gmra.mrb[0].mxu0 %v981
      %v2330 = vpop.f32.mrb[0].mxu0
      %v2331 = vadd.f32 %v2158, %v2330
      %v2332 = vpop.f32.mrb[0].mxu0
      %v2333 = vpop.f32.mrb[0].mxu0
      %v2334 = vadd.f32 %v2158, %v2333
      %v2335 = vpop.f32.mrb[0].mxu0
      %2336 = vmatprep.mubr.bf16.mxu0 0
      %2337 = vmatmul.mubr.bf16.gmra.mrb[0].mxu0 %v982
      %v2338 = vpop.f32.mrb[0].mxu0
      %v2339 = vadd.f32 %v2158, %v2338
      %v2340 = vpop.f32.mrb[0].mxu0
      %v2341 = vpop.f32.mrb[0].mxu0
      %v2342 = vadd.f32 %v2158, %v2341
      %v2343 = vpop.f32.mrb[0].mxu0
      %2344 = vmatprep.mubr.bf16.mxu0 0
      %2345 = vmatmul.mubr.bf16.gmra.mrb[0].mxu0 %v983
      %v2346 = vpop.f32.mrb[0].mxu0
      %v2347 = vadd.f32 %v2158, %v2346
      %v2348 = vpop.f32.mrb[0].mxu0
      %v2349 = vpop.f32.mrb[0].mxu0
      %v2350 = vadd.f32 %v2158, %v2349
      %v2351 = vpop.f32.mrb[0].mxu0
      %2352 = vmatprep.mubr.bf16.mxu0 0
      %2353 = vmatmul.mubr.bf16.gmra.mrb[0].mxu0 %v984
      %v2354 = vpop.f32.mrb[0].mxu0
      %v2355 = vadd.f32 %v2158, %v2354
      %v2356 = vpop.f32.mrb[0].mxu0
      %v2357 = vpop.f32.mrb[0].mxu0
      %v2358 = vadd.f32 %v2158, %v2357
      %v2359 = vpop.f32.mrb[0].mxu0
      %2360 = vmatprep.mubr.bf16.mxu0 0
      %2361 = vmatmul.mubr.bf16.gmra.mrb[0].mxu0 %v985
      %v2362 = vpop.f32.mrb[0].mxu0
      %v2363 = vadd.f32 %v2158, %v2362
      %v2364 = vpop.f32.mrb[0].mxu0
      %v2365 = vpop.f32.mrb[0].mxu0
      %v2366 = vadd.f32 %v2158, %v2365
      %v2367 = vpop.f32.mrb[0].mxu0
      %2368 = vmatprep.mubr.bf16.mxu0 0
      %2369 = vmatmul.mubr.bf16.gmra.mrb[0].mxu0 %v986
      %v2370 = vpop.f32.mrb[0].mxu0
      %v2371 = vadd.f32 %v2158, %v2370
      %v2372 = vpop.f32.mrb[0].mxu0
      %v2373 = vpop.f32.mrb[0].mxu0
      %v2374 = vadd.f32 %v2158, %v2373
      %v2375 = vpop.f32.mrb[0].mxu0
      %2376 = vmatprep.mubr.bf16.mxu0 0
      %2377 = vmatmul.mubr.bf16.gmra.mrb[0].mxu0 %v987
      %v2378 = vpop.f32.mrb[0].mxu0
      %v2379 = vadd.f32 %v2158, %v2378
      %v2380 = vpop.f32.mrb[0].mxu0
      %v2381 = vpop.f32.mrb[0].mxu0
      %v2382 = vadd.f32 %v2158, %v2381
      %v2383 = vpop.f32.mrb[0].mxu0
      %2384 = vmatprep.mubr.bf16.mxu0 0
      %2385 = vmatmul.mubr.bf16.gmra.mrb[0].mxu0 %v988
      %v2386 = vpop.f32.mrb[0].mxu0
      %v2387 = vadd.f32 %v2158, %v2386
      %v2388 = vpop.f32.mrb[0].mxu0
      %v2389 = vpop.f32.mrb[0].mxu0
      %v2390 = vadd.f32 %v2158, %v2389
      %v2391 = vpop.f32.mrb[0].mxu0
      %2392 = vdwg.mxu0
      %v2393 = vxor.u32 %v2243, 2147483648
      %v2394 = vxor.u32 %v2246, 2147483648
      %v2395 = vxor.u32 %v2251, 2147483648
      %v2396 = vxor.u32 %v2254, 2147483648
      %v2397 = vxor.u32 %v2259, 2147483648
      %v2398 = vxor.u32 %v2262, 2147483648
      %v2399 = vxor.u32 %v2267, 2147483648
      %v2400 = vxor.u32 %v2270, 2147483648
      %v2401 = vxor.u32 %v2275, 2147483648
      %v2402 = vxor.u32 %v2278, 2147483648
      %v2403 = vxor.u32 %v2283, 2147483648
      %v2404 = vxor.u32 %v2286, 2147483648
      %v2405 = vxor.u32 %v2291, 2147483648
      %v2406 = vxor.u32 %v2294, 2147483648
      %v2407 = vxor.u32 %v2299, 2147483648
      %v2408 = vxor.u32 %v2302, 2147483648
      %v2409 = vxor.u32 %v2307, 2147483648
      %v2410 = vxor.u32 %v2310, 2147483648
      %v2411 = vxor.u32 %v2315, 2147483648
      %v2412 = vxor.u32 %v2318, 2147483648
      %v2413 = vxor.u32 %v2323, 2147483648
      %v2414 = vxor.u32 %v2326, 2147483648
      %v2415 = vxor.u32 %v2331, 2147483648
      %v2416 = vxor.u32 %v2334, 2147483648
      %v2417 = vxor.u32 %v2339, 2147483648
      %v2418 = vxor.u32 %v2342, 2147483648
      %v2419 = vxor.u32 %v2347, 2147483648
      %v2420 = vxor.u32 %v2350, 2147483648
      %v2421 = vxor.u32 %v2355, 2147483648
      %v2422 = vxor.u32 %v2358, 2147483648
      %v2423 = vxor.u32 %v2363, 2147483648
      %v2424 = vxor.u32 %v2366, 2147483648
      %v2425 = vxor.u32 %v2371, 2147483648
      %v2426 = vxor.u32 %v2374, 2147483648
      %v2427 = vxor.u32 %v2379, 2147483648
      %v2428 = vxor.u32 %v2382, 2147483648
      %v2429 = vxor.u32 %v2387, 2147483648
      %v2430 = vxor.u32 %v2390, 2147483648
      %v2431 = vmul.f32 %v2393, 1.442695
      %v2432 = vpow.pop %v2431
      %v2433 = vmul.f32 %v2394, 1.442695
      %v2434 = vpow.pop %v2433
      %v2435 = vmul.f32 %v2395, 1.442695
      %v2436 = vpow.pop %v2435
      %v2437 = vmul.f32 %v2396, 1.442695
      %v2438 = vpow.pop %v2437
      %v2439 = vmul.f32 %v2397, 1.442695
      %v2440 = vpow.pop %v2439
      %v2441 = vmul.f32 %v2398, 1.442695
      %v2442 = vpow.pop %v2441
      %v2443 = vmul.f32 %v2399, 1.442695
      %v2444 = vpow.pop %v2443
      %v2445 = vmul.f32 %v2400, 1.442695
      %v2446 = vpow.pop %v2445
      %v2447 = vmul.f32 %v2401, 1.442695
      %v2448 = vpow.pop %v2447
      %v2449 = vmul.f32 %v2402, 1.442695
      %v2450 = vpow.pop %v2449
      %v2451 = vmul.f32 %v2403, 1.442695
      %v2452 = vpow.pop %v2451
      %v2453 = vmul.f32 %v2404, 1.442695
      %v2454 = vpow.pop %v2453
      %v2455 = vmul.f32 %v2405, 1.442695
      %v2456 = vpow.pop %v2455
      %v2457 = vmul.f32 %v2406, 1.442695
      %v2458 = vpow.pop %v2457
      %v2459 = vmul.f32 %v2407, 1.442695
      %v2460 = vpow.pop %v2459
      %v2461 = vmul.f32 %v2408, 1.442695
      %v2462 = vpow.pop %v2461
      %v2463 = vmul.f32 %v2409, 1.442695
      %v2464 = vpow.pop %v2463
      %v2465 = vmul.f32 %v2410, 1.442695
      %v2466 = vpow.pop %v2465
      %v2467 = vmul.f32 %v2411, 1.442695
      %v2468 = vpow.pop %v2467
      %v2469 = vmul.f32 %v2412, 1.442695
      %v2470 = vpow.pop %v2469
      %v2471 = vmul.f32 %v2413, 1.442695
      %v2472 = vpow.pop %v2471
      %v2473 = vmul.f32 %v2414, 1.442695
      %v2474 = vpow.pop %v2473
      %v2475 = vmul.f32 %v2415, 1.442695
      %v2476 = vpow.pop %v2475
      %v2477 = vmul.f32 %v2416, 1.442695
      %v2478 = vpow.pop %v2477
      %v2479 = vmul.f32 %v2417, 1.442695
      %v2480 = vpow.pop %v2479
      %v2481 = vmul.f32 %v2418, 1.442695
      %v2482 = vpow.pop %v2481
      %v2483 = vmul.f32 %v2419, 1.442695
      %v2484 = vpow.pop %v2483
      %v2485 = vmul.f32 %v2420, 1.442695
      %v2486 = vpow.pop %v2485
      %v2487 = vmul.f32 %v2421, 1.442695
      %v2488 = vpow.pop %v2487
      %v2489 = vmul.f32 %v2422, 1.442695
      %v2490 = vpow.pop %v2489
      %v2491 = vmul.f32 %v2423, 1.442695
      %v2492 = vpow.pop %v2491
      %v2493 = vmul.f32 %v2424, 1.442695
      %v2494 = vpow.pop %v2493
      %v2495 = vmul.f32 %v2425, 1.442695
      %v2496 = vpow.pop %v2495
      %v2497 = vmul.f32 %v2426, 1.442695
      %v2498 = vpow.pop %v2497
      %v2499 = vmul.f32 %v2427, 1.442695
      %v2500 = vpow.pop %v2499
      %v2501 = vmul.f32 %v2428, 1.442695
      %v2502 = vpow.pop %v2501
      %v2503 = vmul.f32 %v2429, 1.442695
      %v2504 = vpow.pop %v2503
      %v2505 = vmul.f32 %v2430, 1.442695
      %v2506 = vpow.pop %v2505
      %v2507 = vadd.f32 %v2432, 1.0
      %v2508 = vadd.f32 %v2434, 1.0
      %v2509 = vadd.f32 %v2436, 1.0
      %v2510 = vadd.f32 %v2438, 1.0
      %v2511 = vadd.f32 %v2440, 1.0
      %v2512 = vadd.f32 %v2442, 1.0
      %v2513 = vadd.f32 %v2444, 1.0
      %v2514 = vadd.f32 %v2446, 1.0
      %v2515 = vadd.f32 %v2448, 1.0
      %v2516 = vadd.f32 %v2450, 1.0
      %v2517 = vadd.f32 %v2452, 1.0
      %v2518 = vadd.f32 %v2454, 1.0
      %v2519 = vadd.f32 %v2456, 1.0
      %v2520 = vadd.f32 %v2458, 1.0
      %v2521 = vadd.f32 %v2460, 1.0
      %v2522 = vadd.f32 %v2462, 1.0
      %v2523 = vadd.f32 %v2464, 1.0
      %v2524 = vadd.f32 %v2466, 1.0
      %v2525 = vadd.f32 %v2468, 1.0
      %v2526 = vadd.f32 %v2470, 1.0
      %v2527 = vadd.f32 %v2472, 1.0
      %v2528 = vadd.f32 %v2474, 1.0
      %v2529 = vadd.f32 %v2476, 1.0
      %v2530 = vadd.f32 %v2478, 1.0
      %v2531 = vadd.f32 %v2480, 1.0
      %v2532 = vadd.f32 %v2482, 1.0
      %v2533 = vadd.f32 %v2484, 1.0
      %v2534 = vadd.f32 %v2486, 1.0
      %v2535 = vadd.f32 %v2488, 1.0
      %v2536 = vadd.f32 %v2490, 1.0
      %v2537 = vadd.f32 %v2492, 1.0
      %v2538 = vadd.f32 %v2494, 1.0
      %v2539 = vadd.f32 %v2496, 1.0
      %v2540 = vadd.f32 %v2498, 1.0
      %v2541 = vadd.f32 %v2500, 1.0
      %v2542 = vadd.f32 %v2502, 1.0
      %v2543 = vadd.f32 %v2504, 1.0
      %v2544 = vadd.f32 %v2506, 1.0
      %v2545 = vrcp.pop %v2507
      %v2546 = vmul.f32 1.0, %v2545
      %v2547 = vrcp.pop %v2508
      %v2548 = vmul.f32 1.0, %v2547
      %v2549 = vrcp.pop %v2509
      %v2550 = vmul.f32 1.0, %v2549
      %v2551 = vrcp.pop %v2510
      %v2552 = vmul.f32 1.0, %v2551
      %v2553 = vrcp.pop %v2511
      %v2554 = vmul.f32 1.0, %v2553
      %v2555 = vrcp.pop %v2512
      %v2556 = vmul.f32 1.0, %v2555
      %v2557 = vrcp.pop %v2513
      %v2558 = vmul.f32 1.0, %v2557
      %v2559 = vrcp.pop %v2514
      %v2560 = vmul.f32 1.0, %v2559
      %v2561 = vrcp.pop %v2515
      %v2562 = vmul.f32 1.0, %v2561
      %v2563 = vrcp.pop %v2516
      %v2564 = vmul.f32 1.0, %v2563
      %v2565 = vrcp.pop %v2517
      %v2566 = vmul.f32 1.0, %v2565
      %v2567 = vrcp.pop %v2518
      %v2568 = vmul.f32 1.0, %v2567
      %v2569 = vrcp.pop %v2519
      %v2570 = vmul.f32 1.0, %v2569
      %v2571 = vrcp.pop %v2520
      %v2572 = vmul.f32 1.0, %v2571
      %v2573 = vrcp.pop %v2521
      %v2574 = vmul.f32 1.0, %v2573
      %v2575 = vrcp.pop %v2522
      %v2576 = vmul.f32 1.0, %v2575
      %v2577 = vrcp.pop %v2523
      %v2578 = vmul.f32 1.0, %v2577
      %v2579 = vrcp.pop %v2524
      %v2580 = vmul.f32 1.0, %v2579
      %v2581 = vrcp.pop %v2525
      %v2582 = vmul.f32 1.0, %v2581
      %v2583 = vrcp.pop %v2526
      %v2584 = vmul.f32 1.0, %v2583
      %v2585 = vrcp.pop %v2527
      %v2586 = vmul.f32 1.0, %v2585
      %v2587 = vrcp.pop %v2528
      %v2588 = vmul.f32 1.0, %v2587
      %v2589 = vrcp.pop %v2529
      %v2590 = vmul.f32 1.0, %v2589
      %v2591 = vrcp.pop %v2530
      %v2592 = vmul.f32 1.0, %v2591
      %v2593 = vrcp.pop %v2531
      %v2594 = vmul.f32 1.0, %v2593
      %v2595 = vrcp.pop %v2532
      %v2596 = vmul.f32 1.0, %v2595
      %v2597 = vrcp.pop %v2533
      %v2598 = vmul.f32 1.0, %v2597
      %v2599 = vrcp.pop %v2534
      %v2600 = vmul.f32 1.0, %v2599
      %v2601 = vrcp.pop %v2535
      %v2602 = vmul.f32 1.0, %v2601
      %v2603 = vrcp.pop %v2536
      %v2604 = vmul.f32 1.0, %v2603
      %v2605 = vrcp.pop %v2537
      %v2606 = vmul.f32 1.0, %v2605
      %v2607 = vrcp.pop %v2538
      %v2608 = vmul.f32 1.0, %v2607
      %v2609 = vrcp.pop %v2539
      %v2610 = vmul.f32 1.0, %v2609
      %v2611 = vrcp.pop %v2540
      %v2612 = vmul.f32 1.0, %v2611
      %v2613 = vrcp.pop %v2541
      %v2614 = vmul.f32 1.0, %v2613
      %v2615 = vrcp.pop %v2542
      %v2616 = vmul.f32 1.0, %v2615
      %v2617 = vrcp.pop %v2543
      %v2618 = vmul.f32 1.0, %v2617
      %v2619 = vrcp.pop %v2544
      %v2620 = vmul.f32 1.0, %v2619
      %v2621 = vsub.f32 %v2546, 0.5
      %v2622 = vsub.f32 %v2548, 0.5
      %v2623 = vsub.f32 %v2550, 0.5
      %v2624 = vsub.f32 %v2552, 0.5
      %v2625 = vsub.f32 %v2554, 0.5
      %v2626 = vsub.f32 %v2556, 0.5
      %v2627 = vsub.f32 %v2558, 0.5
      %v2628 = vsub.f32 %v2560, 0.5
      %v2629 = vsub.f32 %v2562, 0.5
      %v2630 = vsub.f32 %v2564, 0.5
      %v2631 = vsub.f32 %v2566, 0.5
      %v2632 = vsub.f32 %v2568, 0.5
      %v2633 = vsub.f32 %v2570, 0.5
      %v2634 = vsub.f32 %v2572, 0.5
      %v2635 = vsub.f32 %v2574, 0.5
      %v2636 = vsub.f32 %v2576, 0.5
      %v2637 = vsub.f32 %v2578, 0.5
      %v2638 = vsub.f32 %v2580, 0.5
      %v2639 = vsub.f32 %v2582, 0.5
      %v2640 = vsub.f32 %v2584, 0.5
      %v2641 = vsub.f32 %v2586, 0.5
      %v2642 = vsub.f32 %v2588, 0.5
      %v2643 = vsub.f32 %v2590, 0.5
      %v2644 = vsub.f32 %v2592, 0.5
      %v2645 = vsub.f32 %v2594, 0.5
      %v2646 = vsub.f32 %v2596, 0.5
      %v2647 = vsub.f32 %v2598, 0.5
      %v2648 = vsub.f32 %v2600, 0.5
      %v2649 = vsub.f32 %v2602, 0.5
      %v2650 = vsub.f32 %v2604, 0.5
      %v2651 = vsub.f32 %v2606, 0.5
      %v2652 = vsub.f32 %v2608, 0.5
      %v2653 = vsub.f32 %v2610, 0.5
      %v2654 = vsub.f32 %v2612, 0.5
      %v2655 = vsub.f32 %v2614, 0.5
      %v2656 = vsub.f32 %v2616, 0.5
      %v2657 = vsub.f32 %v2618, 0.5
      %v2658 = vsub.f32 %v2620, 0.5
      %v2659 = vmul.f32 %v2621, 0.2
      %v2660 = vmul.f32 %v2622, 0.2
      %v2661 = vmul.f32 %v2623, 0.2
      %v2662 = vmul.f32 %v2624, 0.2
      %v2663 = vmul.f32 %v2625, 0.2
      %v2664 = vmul.f32 %v2626, 0.2
      %v2665 = vmul.f32 %v2627, 0.2
      %v2666 = vmul.f32 %v2628, 0.2
      %v2667 = vmul.f32 %v2629, 0.2
      %v2668 = vmul.f32 %v2630, 0.2
      %v2669 = vmul.f32 %v2631, 0.2
      %v2670 = vmul.f32 %v2632, 0.2
      %v2671 = vmul.f32 %v2633, 0.2
      %v2672 = vmul.f32 %v2634, 0.2
      %v2673 = vmul.f32 %v2635, 0.2
      %v2674 = vmul.f32 %v2636, 0.2
      %v2675 = vmul.f32 %v2637, 0.2
      %v2676 = vmul.f32 %v2638, 0.2
      %v2677 = vmul.f32 %v2639, 0.2
      %v2678 = vmul.f32 %v2640, 0.2
      %v2679 = vmul.f32 %v2641, 0.2
      %v2680 = vmul.f32 %v2642, 0.2
      %v2681 = vmul.f32 %v2643, 0.2
      %v2682 = vmul.f32 %v2644, 0.2
      %v2683 = vmul.f32 %v2645, 0.2
      %v2684 = vmul.f32 %v2646, 0.2
      %v2685 = vmul.f32 %v2647, 0.2
      %v2686 = vmul.f32 %v2648, 0.2
      %v2687 = vmul.f32 %v2649, 0.2
      %v2688 = vmul.f32 %v2650, 0.2
      %v2689 = vmul.f32 %v2651, 0.2
      %v2690 = vmul.f32 %v2652, 0.2
      %v2691 = vmul.f32 %v2653, 0.2
      %v2692 = vmul.f32 %v2654, 0.2
      %v2693 = vmul.f32 %v2655, 0.2
      %v2694 = vmul.f32 %v2656, 0.2
      %v2695 = vmul.f32 %v2657, 0.2
      %v2696 = vmul.f32 %v2658, 0.2
      %v2697 = vadd.f32 %v2659, 0.5
      %v2698 = vadd.f32 %v2660, 0.5
      %v2699 = vadd.f32 %v2661, 0.5
      %v2700 = vadd.f32 %v2662, 0.5
      %v2701 = vadd.f32 %v2663, 0.5
      %v2702 = vadd.f32 %v2664, 0.5
      %v2703 = vadd.f32 %v2665, 0.5
      %v2704 = vadd.f32 %v2666, 0.5
      %v2705 = vadd.f32 %v2667, 0.5
      %v2706 = vadd.f32 %v2668, 0.5
      %v2707 = vadd.f32 %v2669, 0.5
      %v2708 = vadd.f32 %v2670, 0.5
      %v2709 = vadd.f32 %v2671, 0.5
      %v2710 = vadd.f32 %v2672, 0.5
      %v2711 = vadd.f32 %v2673, 0.5
      %v2712 = vadd.f32 %v2674, 0.5
      %v2713 = vadd.f32 %v2675, 0.5
      %v2714 = vadd.f32 %v2676, 0.5
      %v2715 = vadd.f32 %v2677, 0.5
      %v2716 = vadd.f32 %v2678, 0.5
      %v2717 = vadd.f32 %v2679, 0.5
      %v2718 = vadd.f32 %v2680, 0.5
      %v2719 = vadd.f32 %v2681, 0.5
      %v2720 = vadd.f32 %v2682, 0.5
      %v2721 = vadd.f32 %v2683, 0.5
      %v2722 = vadd.f32 %v2684, 0.5
      %v2723 = vadd.f32 %v2685, 0.5
      %v2724 = vadd.f32 %v2686, 0.5
      %v2725 = vadd.f32 %v2687, 0.5
      %v2726 = vadd.f32 %v2688, 0.5
      %v2727 = vadd.f32 %v2689, 0.5
      %v2728 = vadd.f32 %v2690, 0.5
      %v2729 = vadd.f32 %v2691, 0.5
      %v2730 = vadd.f32 %v2692, 0.5
      %v2731 = vadd.f32 %v2693, 0.5
      %v2732 = vadd.f32 %v2694, 0.5
      %v2733 = vadd.f32 %v2695, 0.5
      %v2734 = vadd.f32 %v2696, 0.5
      %vm2735 = vcmp.gt.f32.partialorder %v2062, %v2697
      %vm2736 = vcmp.gt.f32.partialorder %v2064, %v2698
      %vm2737 = vcmp.gt.f32.partialorder %v2066, %v2699
      %vm2738 = vcmp.gt.f32.partialorder %v2068, %v2700
      %vm2739 = vcmp.gt.f32.partialorder %v2070, %v2701
      %vm2740 = vcmp.gt.f32.partialorder %v2072, %v2702
      %vm2741 = vcmp.gt.f32.partialorder %v2074, %v2703
      %vm2742 = vcmp.gt.f32.partialorder %v2076, %v2704
      %vm2743 = vcmp.gt.f32.partialorder %v2078, %v2705
      %vm2744 = vcmp.gt.f32.partialorder %v2080, %v2706
      %vm2745 = vcmp.gt.f32.partialorder %v2082, %v2707
      %vm2746 = vcmp.gt.f32.partialorder %v2084, %v2708
      %vm2747 = vcmp.gt.f32.partialorder %v2086, %v2709
      %vm2748 = vcmp.gt.f32.partialorder %v2088, %v2710
      %vm2749 = vcmp.gt.f32.partialorder %v2090, %v2711
      %vm2750 = vcmp.gt.f32.partialorder %v2092, %v2712
      %vm2751 = vcmp.gt.f32.partialorder %v2094, %v2713
      %vm2752 = vcmp.gt.f32.partialorder %v2096, %v2714
      %vm2753 = vcmp.gt.f32.partialorder %v2098, %v2715
      %vm2754 = vcmp.gt.f32.partialorder %v2100, %v2716
      %vm2755 = vcmp.gt.f32.partialorder %v2102, %v2717
      %vm2756 = vcmp.gt.f32.partialorder %v2104, %v2718
      %vm2757 = vcmp.gt.f32.partialorder %v2106, %v2719
      %vm2758 = vcmp.gt.f32.partialorder %v2108, %v2720
      %vm2759 = vcmp.gt.f32.partialorder %v2110, %v2721
      %vm2760 = vcmp.gt.f32.partialorder %v2112, %v2722
      %vm2761 = vcmp.gt.f32.partialorder %v2114, %v2723
      %vm2762 = vcmp.gt.f32.partialorder %v2116, %v2724
      %vm2763 = vcmp.gt.f32.partialorder %v2118, %v2725
      %vm2764 = vcmp.gt.f32.partialorder %v2120, %v2726
      %vm2765 = vcmp.gt.f32.partialorder %v2122, %v2727
      %vm2766 = vcmp.gt.f32.partialorder %v2124, %v2728
      %vm2767 = vcmp.gt.f32.partialorder %v2126, %v2729
      %vm2768 = vcmp.gt.f32.partialorder %v2128, %v2730
      %vm2769 = vcmp.gt.f32.partialorder %v2130, %v2731
      %vm2770 = vcmp.gt.f32.partialorder %v2132, %v2732
      %vm2771 = vcmp.gt.f32.partialorder %v2134, %v2733
      %vm2772 = vcmp.gt.f32.partialorder %v2136, %v2734
      %v2773 = vsel %vm2735, 1, 0
      %v2774 = vsel %vm2736, 1, 0
      %v2775 = vsel %vm2737, 1, 0
      %v2776 = vsel %vm2738, 1, 0
      %v2777 = vsel %vm2739, 1, 0
      %v2778 = vsel %vm2740, 1, 0
      %v2779 = vsel %vm2741, 1, 0
      %v2780 = vsel %vm2742, 1, 0
      %v2781 = vsel %vm2743, 1, 0
      %v2782 = vsel %vm2744, 1, 0
      %v2783 = vsel %vm2745, 1, 0
      %v2784 = vsel %vm2746, 1, 0
      %v2785 = vsel %vm2747, 1, 0
      %v2786 = vsel %vm2748, 1, 0
      %v2787 = vsel %vm2749, 1, 0
      %v2788 = vsel %vm2750, 1, 0
      %v2789 = vsel %vm2751, 1, 0
      %v2790 = vsel %vm2752, 1, 0
      %v2791 = vsel %vm2753, 1, 0
      %v2792 = vsel %vm2754, 1, 0
      %v2793 = vsel %vm2755, 1, 0
      %v2794 = vsel %vm2756, 1, 0
      %v2795 = vsel %vm2757, 1, 0
      %v2796 = vsel %vm2758, 1, 0
      %v2797 = vsel %vm2759, 1, 0
      %v2798 = vsel %vm2760, 1, 0
      %v2799 = vsel %vm2761, 1, 0
      %v2800 = vsel %vm2762, 1, 0
      %v2801 = vsel %vm2763, 1, 0
      %v2802 = vsel %vm2764, 1, 0
      %v2803 = vsel %vm2765, 1, 0
      %v2804 = vsel %vm2766, 1, 0
      %v2805 = vsel %vm2767, 1, 0
      %v2806 = vsel %vm2768, 1, 0
      %v2807 = vsel %vm2769, 1, 0
      %v2808 = vsel %vm2770, 1, 0
      %v2809 = vsel %vm2771, 1, 0
      %v2810 = vsel %vm2772, 1, 0
      %v2811 = vcvt.s32.f32 %v2773
      %v2812 = vcvt.s32.f32 %v2774
      %v2813 = vcvt.s32.f32 %v2775
      %v2814 = vcvt.s32.f32 %v2776
      %v2815 = vcvt.s32.f32 %v2777
      %v2816 = vcvt.s32.f32 %v2778
      %v2817 = vcvt.s32.f32 %v2779
      %v2818 = vcvt.s32.f32 %v2780
      %v2819 = vcvt.s32.f32 %v2781
      %v2820 = vcvt.s32.f32 %v2782
      %v2821 = vcvt.s32.f32 %v2783
      %v2822 = vcvt.s32.f32 %v2784
      %v2823 = vcvt.s32.f32 %v2785
      %v2824 = vcvt.s32.f32 %v2786
      %v2825 = vcvt.s32.f32 %v2787
      %v2826 = vcvt.s32.f32 %v2788
      %v2827 = vcvt.s32.f32 %v2789
      %v2828 = vcvt.s32.f32 %v2790
      %v2829 = vcvt.s32.f32 %v2791
      %v2830 = vcvt.s32.f32 %v2792
      %v2831 = vcvt.s32.f32 %v2793
      %v2832 = vcvt.s32.f32 %v2794
      %v2833 = vcvt.s32.f32 %v2795
      %v2834 = vcvt.s32.f32 %v2796
      %v2835 = vcvt.s32.f32 %v2797
      %v2836 = vcvt.s32.f32 %v2798
      %v2837 = vcvt.s32.f32 %v2799
      %v2838 = vcvt.s32.f32 %v2800
      %v2839 = vcvt.s32.f32 %v2801
      %v2840 = vcvt.s32.f32 %v2802
      %v2841 = vcvt.s32.f32 %v2803
      %v2842 = vcvt.s32.f32 %v2804
      %v2843 = vcvt.s32.f32 %v2805
      %v2844 = vcvt.s32.f32 %v2806
      %v2845 = vcvt.s32.f32 %v2807
      %v2846 = vcvt.s32.f32 %v2808
      %v2847 = vcvt.s32.f32 %v2809
      %v2848 = vcvt.s32.f32 %v2810
      %2849 = vst [vmem:[%s388] sm:$0xff] %v2811
      %2850 = vst [vmem:[%s388 + $0x8] sm:$0xff] %v2812
      %2851 = vst [vmem:[%s388 + $0x10] sm:$0xff] %v2813
      %2852 = vst [vmem:[%s388 + $0x18] sm:$0xff] %v2814
      %2853 = vst [vmem:[%s388 + $0x20] sm:$0xff] %v2815
      %2854 = vst [vmem:[%s388 + $0x28] sm:$0xff] %v2816
      %2855 = vst [vmem:[%s388 + $0x30] sm:$0xff] %v2817
      %2856 = vst [vmem:[%s388 + $0x38] sm:$0xff] %v2818
      %2857 = vst [vmem:[%s388 + $0x40] sm:$0xff] %v2819
      %2858 = vst [vmem:[%s388 + $0x48] sm:$0xff] %v2820
      %2859 = vst [vmem:[%s388 + $0x50] sm:$0xff] %v2821
      %2860 = vst [vmem:[%s388 + $0x58] sm:$0xff] %v2822
      %2861 = vst [vmem:[%s388 + $0x60] sm:$0xff] %v2823
      %2862 = vst [vmem:[%s388 + $0x68] sm:$0xff] %v2824
      %2863 = vst [vmem:[%s388 + $0x70] sm:$0xff] %v2825
      %2864 = vst [vmem:[%s388 + $0x78] sm:$0xff] %v2826
      %2865 = vst [vmem:[%s388 + $0x80] sm:$0xff] %v2827
      %2866 = vst [vmem:[%s388 + $0x88] sm:$0xff] %v2828
      %2867 = vst [vmem:[%s388 + $0x90] sm:$0xff] %v2829
      %2868 = vst [vmem:[%s388 + $0x98] sm:$0xff] %v2830
      %2869 = vst [vmem:[%s388 + $0xa0] sm:$0xff] %v2831
      %2870 = vst [vmem:[%s388 + $0xa8] sm:$0xff] %v2832
      %2871 = vst [vmem:[%s388 + $0xb0] sm:$0xff] %v2833
      %2872 = vst [vmem:[%s388 + $0xb8] sm:$0xff] %v2834
      %2873 = vst [vmem:[%s388 + $0xc0] sm:$0xff] %v2835
      %2874 = vst [vmem:[%s388 + $0xc8] sm:$0xff] %v2836
      %2875 = vst [vmem:[%s388 + $0xd0] sm:$0xff] %v2837
      %2876 = vst [vmem:[%s388 + $0xd8] sm:$0xff] %v2838
      %2877 = vst [vmem:[%s388 + $0xe0] sm:$0xff] %v2839
      %2878 = vst [vmem:[%s388 + $0xe8] sm:$0xff] %v2840
      %2879 = vst [vmem:[%s388 + $0xf0] sm:$0xff] %v2841
      %2880 = vst [vmem:[%s388 + $0xf8] sm:$0xff] %v2842
      %2881 = vst [vmem:[%s388 + $0x100] sm:$0xff] %v2843
      %2882 = vst [vmem:[%s388 + $0x108] sm:$0xff] %v2844
      %2883 = vst [vmem:[%s388 + $0x110] sm:$0xff] %v2845
      %2884 = vst [vmem:[%s388 + $0x118] sm:$0xff] %v2846
      %2885 = vst [vmem:[%s388 + $0x120] sm:$0xff] %v2847
      %2886 = vst [vmem:[%s388 + $0x128] sm:$0xff] %v2848
      %s2887 = smul.u32 38, %s22
      %p2888 = scmp.lt.s32.totalorder %s2887, 75
      %s2889 = scalar_select %p2888, %s2887, 75
      %s2890 = smul.addr %s2889, 8
      %s2891 = scalar_lea.vmem %s11, %s2890
      // Predicated region
      $region65: #{_ecc_impl.1} parent=63 // pred_check
        %p2892 = pneg %p276
      $region66: #{_ecc_impl.1} parent=63 // pred_check_branch
        %2894 = sbr.rel (%p2892) target = $region68
      $region67: #{_ecc_impl.1} parent=63 // pred_region
        %s2895 = smul.u32 38, %s22
      $region68: #{_ecc_impl.1} parent=63 // pred_fallthru
        _
    $region64: #{_ecc_impl.1} parent=5 // pred_fallthru
      _
    %p2896 = scmp.le.s32.totalorder 2, %s17
    // Predicated region
    $region69: #{_ecc_impl.1} parent=5 // pred_check
      %p2897 = pneg %p2896
    $region70: #{_ecc_impl.1} parent=5 // pred_check_branch
      %2899 = sbr.rel (%p2897) target = $region72
    $region71: #{_ecc_impl.1} parent=5 // pred_region
      %s2900 = ssub.s32 %s17, 2
      // Predicated region
      $region73: #{_ecc_impl.1} parent=71 // pred_check
        %p2901 = pneg %p282
      $region74: #{_ecc_impl.1} parent=71 // pred_check_branch
        %2903 = sbr.rel (%p2901) target = $region76
      $region75: #{_ecc_impl.1} parent=71 // pred_region
        %s2904 = smul.u32 38, %s23
        %p2905 = scmp.lt.s32.totalorder %s2904, 75
        %s2906 = scalar_select %p2905, %s2904, 75
        %s2907 = smul.addr %s2906, 8
        %s2908 = scalar_lea.vmem %s11, %s2907
      $region76: #{_ecc_impl.1} parent=71 // pred_fallthru
        _
    $region72: #{_ecc_impl.1} parent=5 // pred_fallthru
      _
  $region6: #{_ecc_impl.1} parent=0 // loop_footer
    %s21 = sadd.s32 1, %s17
  $region7: #{_ecc_impl.1} parent=0 // loop_footer_branch
    %16 = sbr.rel target = $region3
  $region8: #{_ecc_impl.1} parent=0 // loop_exit
    _

// kernel: _ecc_impl.1
$region0: #{_ecc_impl.1}
  #allocation0 [shape = 'u32[]', space=smem, size = 0x4, offset = 0x4, fixed_abs, tag = 'smem constant byte address 0x4 - core index']
  #allocation1 [shape = 'u32[144,128]{1,0:T(1,128)}', space=vmem, size = 0x12000, scoped, tag = 'internal scratch']
  %s0 = inlined_call_operand.vmem [shape: bf16[608,128], index: 0, kind: input, shape index: {}]
  %s1 = inlined_call_operand.vmem [shape: bf16[128,256], index: 1, kind: input, shape index: {}]
  %s2 = inlined_call_operand.vmem [shape: f32[1,256], index: 2, kind: input, shape index: {}]
  %s3 = inlined_call_operand.vmem [shape: bf16[128,128], index: 3, kind: input, shape index: {}]
  %s4 = inlined_call_operand.vmem [shape: f32[1,128], index: 4, kind: input, shape index: {}]
  %s5 = inlined_call_operand.vmem [shape: bf16[128,128], index: 5, kind: input, shape index: {}]
  %s6 = inlined_call_operand.vmem [shape: f32[1,128], index: 6, kind: input, shape index: {}]
  %s7 = inlined_call_operand.vmem [shape: bf16[128,128], index: 7, kind: input, shape index: {}]
  %s8 = inlined_call_operand.vmem [shape: f32[1,128], index: 8, kind: input, shape index: {}]
  %s9 = inlined_call_operand.vmem [shape: bf16[128,128], index: 9, kind: input, shape index: {}]
  %s10 = inlined_call_operand.vmem [shape: f32[1,128], index: 10, kind: input, shape index: {}]
  %s11 = inlined_call_operand.vmem [shape: f32[608,128], index: 11, kind: output, shape index: {}]
  %s12 = sld [smem:[#allocation0]]
  $region77: #{_ecc_impl.1} parent=0
    _
  %s14 = ssub.s32 1, %s12
  %s15 = scalar_select 0, %s14, %s12
  loop: start=0, step=1, limit=4
  $region2: #{_ecc_impl.1} parent=0 // loop_pre_header
    _
  $region3: #{_ecc_impl.1} parent=0 // loop_header
    %s17 = sphi 0, %s21
    %p18 = scmp.ge.s32.totalorder %s17, 4
    %s27 = sphi 0, %s29
    %s30 = sphi 0, %s27
    %s31 = sphi 0, %s30
    %s47 = sphi 0, %s31
    %s51 = sphi 0, %s51
    %s53 = sphi 0, %s51
    %s54 = sphi 0, %s53
    %s68 = sphi 0, %s54
    %s72 = sphi 0, %s72
    %s74 = sphi 0, %s72
    %s75 = sphi 0, %s74
    %s89 = sphi 0, %s75
    %s93 = sphi 0, %s93
    %s95 = sphi 0, %s93
    %s96 = sphi 0, %s95
    %s110 = sphi 0, %s96
    %s114 = sphi 0, %s114
    %s116 = sphi 0, %s114
    %s117 = sphi 0, %s116
    %s131 = sphi 0, %s117
    %s135 = sphi 0, %s135
    %s137 = sphi 0, %s135
    %s138 = sphi 0, %s137
    %s152 = sphi 0, %s138
    %s156 = sphi 0, %s156
    %s158 = sphi 0, %s156
    %s159 = sphi 0, %s158
    %s173 = sphi 0, %s159
    %s177 = sphi 0, %s177
    %s179 = sphi 0, %s177
    %s180 = sphi 0, %s179
    %s194 = sphi 0, %s180
    %s198 = sphi 0, %s198
    %s200 = sphi 0, %s198
    %s201 = sphi 0, %s200
    %s215 = sphi 0, %s201
    %s219 = sphi 0, %s219
    %s221 = sphi 0, %s219
    %s222 = sphi 0, %s221
    %s236 = sphi 0, %s222
    %s240 = sphi 0, %s240
    %s242 = sphi 0, %s240
    %s243 = sphi 0, %s242
    %s257 = sphi 0, %s243
    %s263 = sphi 0, %s265
    %s266 = sphi 0, %s263
    %s267 = sphi 0, %s266
    %s283 = sphi 0, %s267
  $region4: #{_ecc_impl.1} parent=0 // loop_header_branch
    %20 = sbr.rel (%p18) target = $region8
  $region5: #{_ecc_impl.1} parent=0 // loop_body
    %s22 = ssub.s32 %s17, 1
    %s23 = ssub.s32 %s17, 2
    %s24 = sadd.s32 %s17, 1
    %s25 = ssub.s32 %s17, %s24
    %p26 = scmp.eq.s32.totalorder %s25, 0
    %s28 = sadd.s32 %s27, 1
    %s29 = scalar_select %p26, %s27, %s28
    %p32 = pneg %p26
    %p33 = scmp.eq.s32.totalorder %s17, 1
    %p34 = por %p32, %p33
    %p35 = scmp.ne.s32.totalorder %s27, %s30
    %p36 = scmp.eq.s32.totalorder %s17, 0
    %p37 = por %p35, %p36
    %p38 = scmp.ne.s32.totalorder %s27, %s30
    %p39 = scmp.eq.s32.totalorder %s22, 1
    %p40 = por %p38, %p39
    %p41 = scmp.ne.s32.totalorder %s30, %s31
    %p42 = scmp.eq.s32.totalorder %s22, 0
    %p43 = por %p41, %p42
    %p44 = scmp.ne.s32.totalorder %s30, %s31
    %p45 = scmp.eq.s32.totalorder %s23, 1
    %p46 = por %p44, %p45
    %p48 = scmp.ne.s32.totalorder %s31, %s47
    %p49 = scmp.eq.s32.totalorder %s23, 0
    %p50 = por %p48, %p49
    %s52 = sadd.s32 %s51, 1
    %p55 = scmp.eq.s32.totalorder %s17, 1
    %p56 = scmp.ne.s32.totalorder %s51, %s53
    %p57 = scmp.eq.s32.totalorder %s17, 0
    %p58 = por %p56, %p57
    %p59 = scmp.ne.s32.totalorder %s51, %s53
    %p60 = scmp.eq.s32.totalorder %s22, 1
    %p61 = por %p59, %p60
    %p62 = scmp.ne.s32.totalorder %s53, %s54
    %p63 = scmp.eq.s32.totalorder %s22, 0
    %p64 = por %p62, %p63
    %p65 = scmp.ne.s32.totalorder %s53, %s54
    %p66 = scmp.eq.s32.totalorder %s23, 1
    %p67 = por %p65, %p66
    %p69 = scmp.ne.s32.totalorder %s54, %s68
    %p70 = scmp.eq.s32.totalorder %s23, 0
    %p71 = por %p69, %p70
    %s73 = sadd.s32 %s72, 1
    %p76 = scmp.eq.s32.totalorder %s17, 1
    %p77 = scmp.ne.s32.totalorder %s72, %s74
    %p78 = scmp.eq.s32.totalorder %s17, 0
    %p79 = por %p77, %p78
    %p80 = scmp.ne.s32.totalorder %s72, %s74
    %p81 = scmp.eq.s32.totalorder %s22, 1
    %p82 = por %p80, %p81
    %p83 = scmp.ne.s32.totalorder %s74, %s75
    %p84 = scmp.eq.s32.totalorder %s22, 0
    %p85 = por %p83, %p84
    %p86 = scmp.ne.s32.totalorder %s74, %s75
    %p87 = scmp.eq.s32.totalorder %s23, 1
    %p88 = por %p86, %p87
    %p90 = scmp.ne.s32.totalorder %s75, %s89
    %p91 = scmp.eq.s32.totalorder %s23, 0
    %p92 = por %p90, %p91
    %s94 = sadd.s32 %s93, 1
    %p97 = scmp.eq.s32.totalorder %s17, 1
    %p98 = scmp.ne.s32.totalorder %s93, %s95
    %p99 = scmp.eq.s32.totalorder %s17, 0
    %p100 = por %p98, %p99
    %p101 = scmp.ne.s32.totalorder %s93, %s95
    %p102 = scmp.eq.s32.totalorder %s22, 1
    %p103 = por %p101, %p102
    %p104 = scmp.ne.s32.totalorder %s95, %s96
    %p105 = scmp.eq.s32.totalorder %s22, 0
    %p106 = por %p104, %p105
    %p107 = scmp.ne.s32.totalorder %s95, %s96
    %p108 = scmp.eq.s32.totalorder %s23, 1
    %p109 = por %p107, %p108
    %p111 = scmp.ne.s32.totalorder %s96, %s110
    %p112 = scmp.eq.s32.totalorder %s23, 0
    %p113 = por %p111, %p112
    %s115 = sadd.s32 %s114, 1
    %p118 = scmp.eq.s32.totalorder %s17, 1
    %p119 = scmp.ne.s32.totalorder %s114, %s116
    %p120 = scmp.eq.s32.totalorder %s17, 0
    %p121 = por %p119, %p120
    %p122 = scmp.ne.s32.totalorder %s114, %s116
    %p123 = scmp.eq.s32.totalorder %s22, 1
    %p124 = por %p122, %p123
    %p125 = scmp.ne.s32.totalorder %s116, %s117
    %p126 = scmp.eq.s32.totalorder %s22, 0
    %p127 = por %p125, %p126
    %p128 = scmp.ne.s32.totalorder %s116, %s117
    %p129 = scmp.eq.s32.totalorder %s23, 1
    %p130 = por %p128, %p129
    %p132 = scmp.ne.s32.totalorder %s117, %s131
    %p133 = scmp.eq.s32.totalorder %s23, 0
    %p134 = por %p132, %p133
    %s136 = sadd.s32 %s135, 1
    %p139 = scmp.eq.s32.totalorder %s17, 1
    %p140 = scmp.ne.s32.totalorder %s135, %s137
    %p141 = scmp.eq.s32.totalorder %s17, 0
    %p142 = por %p140, %p141
    %p143 = scmp.ne.s32.totalorder %s135, %s137
    %p144 = scmp.eq.s32.totalorder %s22, 1
    %p145 = por %p143, %p144
    %p146 = scmp.ne.s32.totalorder %s137, %s138
    %p147 = scmp.eq.s32.totalorder %s22, 0
    %p148 = por %p146, %p147
    %p149 = scmp.ne.s32.totalorder %s137, %s138
    %p150 = scmp.eq.s32.totalorder %s23, 1
    %p151 = por %p149, %p150
    %p153 = scmp.ne.s32.totalorder %s138, %s152
    %p154 = scmp.eq.s32.totalorder %s23, 0
    %p155 = por %p153, %p154
    %s157 = sadd.s32 %s156, 1
    %p160 = scmp.eq.s32.totalorder %s17, 1
    %p161 = scmp.ne.s32.totalorder %s156, %s158
    %p162 = scmp.eq.s32.totalorder %s17, 0
    %p163 = por %p161, %p162
    %p164 = scmp.ne.s32.totalorder %s156, %s158
    %p165 = scmp.eq.s32.totalorder %s22, 1
    %p166 = por %p164, %p165
    %p167 = scmp.ne.s32.totalorder %s158, %s159
    %p168 = scmp.eq.s32.totalorder %s22, 0
    %p169 = por %p167, %p168
    %p170 = scmp.ne.s32.totalorder %s158, %s159
    %p171 = scmp.eq.s32.totalorder %s23, 1
    %p172 = por %p170, %p171
    %p174 = scmp.ne.s32.totalorder %s159, %s173
    %p175 = scmp.eq.s32.totalorder %s23, 0
    %p176 = por %p174, %p175
    %s178 = sadd.s32 %s177, 1
    %p181 = scmp.eq.s32.totalorder %s17, 1
    %p182 = scmp.ne.s32.totalorder %s177, %s179
    %p183 = scmp.eq.s32.totalorder %s17, 0
    %p184 = por %p182, %p183
    %p185 = scmp.ne.s32.totalorder %s177, %s179
    %p186 = scmp.eq.s32.totalorder %s22, 1
    %p187 = por %p185, %p186
    %p188 = scmp.ne.s32.totalorder %s179, %s180
    %p189 = scmp.eq.s32.totalorder %s22, 0
    %p190 = por %p188, %p189
    %p191 = scmp.ne.s32.totalorder %s179, %s180
    %p192 = scmp.eq.s32.totalorder %s23, 1
    %p193 = por %p191, %p192
    %p195 = scmp.ne.s32.totalorder %s180, %s194
    %p196 = scmp.eq.s32.totalorder %s23, 0
    %p197 = por %p195, %p196
    %s199 = sadd.s32 %s198, 1
    %p202 = scmp.eq.s32.totalorder %s17, 1
    %p203 = scmp.ne.s32.totalorder %s198, %s200
    %p204 = scmp.eq.s32.totalorder %s17, 0
    %p205 = por %p203, %p204
    %p206 = scmp.ne.s32.totalorder %s198, %s200
    %p207 = scmp.eq.s32.totalorder %s22, 1
    %p208 = por %p206, %p207
    %p209 = scmp.ne.s32.totalorder %s200, %s201
    %p210 = scmp.eq.s32.totalorder %s22, 0
    %p211 = por %p209, %p210
    %p212 = scmp.ne.s32.totalorder %s200, %s201
    %p213 = scmp.eq.s32.totalorder %s23, 1
    %p214 = por %p212, %p213
    %p216 = scmp.ne.s32.totalorder %s201, %s215
    %p217 = scmp.eq.s32.totalorder %s23, 0
    %p218 = por %p216, %p217
    %s220 = sadd.s32 %s219, 1
    %p223 = scmp.eq.s32.totalorder %s17, 1
    %p224 = scmp.ne.s32.totalorder %s219, %s221
    %p225 = scmp.eq.s32.totalorder %s17, 0
    %p226 = por %p224, %p225
    %p227 = scmp.ne.s32.totalorder %s219, %s221
    %p228 = scmp.eq.s32.totalorder %s22, 1
    %p229 = por %p227, %p228
    %p230 = scmp.ne.s32.totalorder %s221, %s222
    %p231 = scmp.eq.s32.totalorder %s22, 0
    %p232 = por %p230, %p231
    %p233 = scmp.ne.s32.totalorder %s221, %s222
    %p234 = scmp.eq.s32.totalorder %s23, 1
    %p235 = por %p233, %p234
    %p237 = scmp.ne.s32.totalorder %s222, %s236
    %p238 = scmp.eq.s32.totalorder %s23, 0
    %p239 = por %p237, %p238
    %s241 = sadd.s32 %s240, 1
    %p244 = scmp.eq.s32.totalorder %s17, 1
    %p245 = scmp.ne.s32.totalorder %s240, %s242
    %p246 = scmp.eq.s32.totalorder %s17, 0
    %p247 = por %p245, %p246
    %p248 = scmp.ne.s32.totalorder %s240, %s242
    %p249 = scmp.eq.s32.totalorder %s22, 1
    %p250 = por %p248, %p249
    %p251 = scmp.ne.s32.totalorder %s242, %s243
    %p252 = scmp.eq.s32.totalorder %s22, 0
    %p253 = por %p251, %p252
    %p254 = scmp.ne.s32.totalorder %s242, %s243
    %p255 = scmp.eq.s32.totalorder %s23, 1
    %p256 = por %p254, %p255
    %p258 = scmp.ne.s32.totalorder %s243, %s257
    %p259 = scmp.eq.s32.totalorder %s23, 0
    %p260 = por %p258, %p259
    %s261 = ssub.s32 %s17, %s24
    %p262 = scmp.eq.s32.totalorder %s261, 0
    %s264 = sadd.s32 %s263, 1
    %s265 = scalar_select %p262, %s263, %s264
    %p268 = pneg %p262
    %p269 = scmp.eq.s32.totalorder %s17, 1
    %p270 = por %p268, %p269
    %p271 = scmp.ne.s32.totalorder %s263, %s266
    %p272 = scmp.eq.s32.totalorder %s17, 0
    %p273 = por %p271, %p272
    %p274 = scmp.ne.s32.totalorder %s263, %s266
    %p275 = scmp.eq.s32.totalorder %s22, 1
    %p276 = por %p274, %p275
    %p277 = scmp.ne.s32.totalorder %s266, %s267
    %p278 = scmp.eq.s32.totalorder %s22, 0
    %p279 = por %p277, %p278
    %p280 = scmp.ne.s32.totalorder %s266, %s267
    %p281 = scmp.eq.s32.totalorder %s23, 1
    %p282 = por %p280, %p281
    %p284 = scmp.ne.s32.totalorder %s267, %s283
    %p285 = scmp.eq.s32.totalorder %s23, 0
    %p286 = por %p284, %p285
    %p287 = scmp.le.s32.totalorder 1, %s17
    %p288 = scmp.lt.s32.totalorder %s17, 3
    %p289 = pnand %p287, %p288
    %p290 = pneg %p289
    // Predicated region
    $region9: #{_ecc_impl.1} parent=5 // pred_check
      _
    $region10: #{_ecc_impl.1} parent=5 // pred_check_branch
      %292 = sbr.rel (%p289) target = $region12
    $region11: #{_ecc_impl.1} parent=5 // pred_region
      %s293 = ssub.s32 %s17, 1
      // Predicated region
      $region13: #{_ecc_impl.1} parent=11 // pred_check
        %p294 = pneg %p64
      $region14: #{_ecc_impl.1} parent=11 // pred_check_branch
        %296 = sbr.rel (%p294) target = $region16
      $region15: #{_ecc_impl.1} parent=11 // pred_region
        _
      $region16: #{_ecc_impl.1} parent=11 // pred_fallthru
        _
      // Predicated region
      $region17: #{_ecc_impl.1} parent=11 // pred_check
        %p297 = pneg %p85
      $region18: #{_ecc_impl.1} parent=11 // pred_check_branch
        %299 = sbr.rel (%p297) target = $region20
      $region19: #{_ecc_impl.1} parent=11 // pred_region
        _
      $region20: #{_ecc_impl.1} parent=11 // pred_fallthru
        _
      // Predicated region
      $region21: #{_ecc_impl.1} parent=11 // pred_check
        %p300 = pneg %p106
      $region22: #{_ecc_impl.1} parent=11 // pred_check_branch
        %302 = sbr.rel (%p300) target = $region24
      $region23: #{_ecc_impl.1} parent=11 // pred_region
        _
      $region24: #{_ecc_impl.1} parent=11 // pred_fallthru
        _
      // Predicated region
      $region25: #{_ecc_impl.1} parent=11 // pred_check
        %p303 = pneg %p127
      $region26: #{_ecc_impl.1} parent=11 // pred_check_branch
        %305 = sbr.rel (%p303) target = $region28
      $region27: #{_ecc_impl.1} parent=11 // pred_region
        _
      $region28: #{_ecc_impl.1} parent=11 // pred_fallthru
        _
      // Predicated region
      $region29: #{_ecc_impl.1} parent=11 // pred_check
        %p306 = pneg %p148
      $region30: #{_ecc_impl.1} parent=11 // pred_check_branch
        %308 = sbr.rel (%p306) target = $region32
      $region31: #{_ecc_impl.1} parent=11 // pred_region
        _
      $region32: #{_ecc_impl.1} parent=11 // pred_fallthru
        _
      // Predicated region
      $region33: #{_ecc_impl.1} parent=11 // pred_check
        %p309 = pneg %p169
      $region34: #{_ecc_impl.1} parent=11 // pred_check_branch
        %311 = sbr.rel (%p309) target = $region36
      $region35: #{_ecc_impl.1} parent=11 // pred_region
        _
      $region36: #{_ecc_impl.1} parent=11 // pred_fallthru
        _
      // Predicated region
      $region37: #{_ecc_impl.1} parent=11 // pred_check
        %p312 = pneg %p190
      $region38: #{_ecc_impl.1} parent=11 // pred_check_branch
        %314 = sbr.rel (%p312) target = $region40
      $region39: #{_ecc_impl.1} parent=11 // pred_region
        _
      $region40: #{_ecc_impl.1} parent=11 // pred_fallthru
        _
      // Predicated region
      $region41: #{_ecc_impl.1} parent=11 // pred_check
        %p315 = pneg %p211
      $region42: #{_ecc_impl.1} parent=11 // pred_check_branch
        %317 = sbr.rel (%p315) target = $region44
      $region43: #{_ecc_impl.1} parent=11 // pred_region
        _
      $region44: #{_ecc_impl.1} parent=11 // pred_fallthru
        _
      // Predicated region
      $region45: #{_ecc_impl.1} parent=11 // pred_check
        %p318 = pneg %p232
      $region46: #{_ecc_impl.1} parent=11 // pred_check_branch
        %320 = sbr.rel (%p318) target = $region48
      $region47: #{_ecc_impl.1} parent=11 // pred_region
        _
      $region48: #{_ecc_impl.1} parent=11 // pred_fallthru
        _
      // Predicated region
      $region49: #{_ecc_impl.1} parent=11 // pred_check
        %p321 = pneg %p253
      $region50: #{_ecc_impl.1} parent=11 // pred_check_branch
        %323 = sbr.rel (%p321) target = $region52
      $region51: #{_ecc_impl.1} parent=11 // pred_region
        _
      $region52: #{_ecc_impl.1} parent=11 // pred_fallthru
        _
    $region12: #{_ecc_impl.1} parent=5 // pred_fallthru
      _
    %p324 = scmp.lt.s32.totalorder %s17, 2
    // Predicated region
    $region53: #{_ecc_impl.1} parent=5 // pred_check
      %p325 = pneg %p324
    $region54: #{_ecc_impl.1} parent=5 // pred_check_branch
      %327 = sbr.rel (%p325) target = $region56
    $region55: #{_ecc_impl.1} parent=5 // pred_region
      // Predicated region
      $region57: #{_ecc_impl.1} parent=55 // pred_check
        %p328 = pneg %p37
      $region58: #{_ecc_impl.1} parent=55 // pred_check_branch
        %330 = sbr.rel (%p328) target = $region60
      $region59: #{_ecc_impl.1} parent=55 // pred_region
        %s331 = smul.u32 38, %s17
        %p332 = scmp.lt.s32.totalorder %s331, 75
        %s333 = scalar_select %p332, %s331, 75
        %s334 = smul.addr %s333, 4
        %s335 = scalar_lea.vmem %s0, %s334
        %s336 = smul.u32 38, %s17
      $region60: #{_ecc_impl.1} parent=55 // pred_fallthru
        _
    $region56: #{_ecc_impl.1} parent=5 // pred_fallthru
      _
    %p337 = scmp.le.s32.totalorder 1, %s17
    %p338 = scmp.lt.s32.totalorder %s17, 3
    %p339 = pnand %p337, %p338
    %p340 = pneg %p339
    // Predicated region
    $region61: #{_ecc_impl.1} parent=5 // pred_check
      _
    $region62: #{_ecc_impl.1} parent=5 // pred_check_branch
      %342 = sbr.rel (%p339) target = $region64
    $region63: #{_ecc_impl.1} parent=5 // pred_region
      %s343 = ssub.s32 %s17, 1
      %s344 = smul.u32 38, %s22
      %p345 = scmp.lt.s32.totalorder %s344, 75
      %s346 = scalar_select %p345, %s344, 75
      %s347 = smul.addr %s346, 4
      %s348 = scalar_lea.vmem %s0, %s347
      %p349 = pneg %p43
      %p350 = pneg %p40
      %p351 = pneg %p64
      %p352 = pneg %p61
      %p353 = pneg %p85
      %p354 = pneg %p82
      %p355 = pneg %p106
      %p356 = pneg %p103
      %p357 = pneg %p127
      %p358 = pneg %p124
      %p359 = pneg %p148
      %p360 = pneg %p145
      %p361 = pneg %p169
      %p362 = pneg %p166
      %p363 = pneg %p190
      %p364 = pneg %p187
      %p365 = pneg %p211
      %p366 = pneg %p208
      %p367 = pneg %p232
      %p368 = pneg %p229
      %p369 = pneg %p253
      %p370 = pneg %p250
      %p371 = pneg %p279
      %p372 = pneg %p276
      %s373 = smul.u32 38, %s22
      %p374 = scmp.lt.s32.totalorder %s373, 75
      %s375 = scalar_select %p374, %s373, 75
      %s376 = smul.addr %s375, 8
      %s377 = scalar_lea.vmem %s11, %s376
      %s378 = smul.u32 38, %s22
      %p379 = scmp.lt.s32.totalorder %s378, 75
      %s380 = scalar_select %p379, %s378, 75
      %s381 = smul.addr %s380, 4
      %s382 = scalar_lea.vmem %s0, %s381
      %s383 = smul.u32 38, %s22
      %s384 = smul.u32 38, %s22
      %p385 = scmp.lt.s32.totalorder %s384, 75
      %s386 = scalar_select %p385, %s384, 75
      %s387 = smul.addr %s386, 8
      %s388 = scalar_lea.vmem %s11, %s387
      %s389 = smul.u32 38, %s22
      %v392 = vld [vmem:[%s382] sm:$0xf]
      %v393 = vld [vmem:[%s382 + $0x4] sm:$0xf]
      %v394 = vld [vmem:[%s382 + $0x8] sm:$0xf]
      %v395 = vld [vmem:[%s382 + $0xc] sm:$0xf]
      %v396 = vld [vmem:[%s382 + $0x10] sm:$0xf]
      %v397 = vld [vmem:[%s382 + $0x14] sm:$0xf]
      %v398 = vld [vmem:[%s382 + $0x18] sm:$0xf]
      %v399 = vld [vmem:[%s382 + $0x1c] sm:$0xf]
      %v400 = vld [vmem:[%s382 + $0x20] sm:$0xf]
      %v401 = vld [vmem:[%s382 + $0x24] sm:$0xf]
      %v402 = vld [vmem:[%s382 + $0x28] sm:$0xf]
      %v403 = vld [vmem:[%s382 + $0x2c] sm:$0xf]
      %v404 = vld [vmem:[%s382 + $0x30] sm:$0xf]
      %v405 = vld [vmem:[%s382 + $0x34] sm:$0xf]
      %v406 = vld [vmem:[%s382 + $0x38] sm:$0xf]
      %v407 = vld [vmem:[%s382 + $0x3c] sm:$0xf]
      %v408 = vld [vmem:[%s382 + $0x40] sm:$0xf]
      %v409 = vld [vmem:[%s382 + $0x44] sm:$0xf]
      %v410 = vld [vmem:[%s382 + $0x48] sm:$0xf]
      %v411 = vld [vmem:[%s382 + $0x4c] sm:$0xf]
      %v412 = vld [vmem:[%s382 + $0x50] sm:$0xf]
      %v413 = vld [vmem:[%s382 + $0x54] sm:$0xf]
      %v414 = vld [vmem:[%s382 + $0x58] sm:$0xf]
      %v415 = vld [vmem:[%s382 + $0x5c] sm:$0xf]
      %v416 = vld [vmem:[%s382 + $0x60] sm:$0xf]
      %v417 = vld [vmem:[%s382 + $0x64] sm:$0xf]
      %v418 = vld [vmem:[%s382 + $0x68] sm:$0xf]
      %v419 = vld [vmem:[%s382 + $0x6c] sm:$0xf]
      %v420 = vld [vmem:[%s382 + $0x70] sm:$0xf]
      %v421 = vld [vmem:[%s382 + $0x74] sm:$0xf]
      %v422 = vld [vmem:[%s382 + $0x78] sm:$0xf]
      %v423 = vld [vmem:[%s382 + $0x7c] sm:$0xf]
      %v424 = vld [vmem:[%s382 + $0x80] sm:$0xf]
      %v425 = vld [vmem:[%s382 + $0x84] sm:$0xf]
      %v426 = vld [vmem:[%s382 + $0x88] sm:$0xf]
      %v427 = vld [vmem:[%s382 + $0x8c] sm:$0xf]
      %v428 = vld [vmem:[%s382 + $0x90] sm:$0xf]
      %v429 = vld [vmem:[%s382 + $0x94] sm:$0xf]
      %v430 = vld [vmem:[%s1] sm:$0xff]
      %v431 = vld [vmem:[%s1 + $0x8] sm:$0xff]
      %v432 = vld [vmem:[%s1 + $0x10] sm:$0xff]
      %v433 = vld [vmem:[%s1 + $0x18] sm:$0xff]
      %v434 = vld [vmem:[%s1 + $0x20] sm:$0xff]
      %v435 = vld [vmem:[%s1 + $0x28] sm:$0xff]
      %v436 = vld [vmem:[%s1 + $0x30] sm:$0xff]
      %v437 = vld [vmem:[%s1 + $0x38] sm:$0xff]
      %v438 = vld [vmem:[%s1 + $0x40] sm:$0xff]
      %v439 = vld [vmem:[%s1 + $0x48] sm:$0xff]
      %v440 = vld [vmem:[%s1 + $0x50] sm:$0xff]
      %v441 = vld [vmem:[%s1 + $0x58] sm:$0xff]
      %v442 = vld [vmem:[%s1 + $0x60] sm:$0xff]
      %v443 = vld [vmem:[%s1 + $0x68] sm:$0xff]
      %v444 = vld [vmem:[%s1 + $0x70] sm:$0xff]
      %v445 = vld [vmem:[%s1 + $0x78] sm:$0xff]
      %v446 = vld [vmem:[%s2] sm:$0x3]
      %v448 = vlaneseq
      %v449 = vshrl.u32 %v448, 7
      %v450 = vsub.s32 0, %v449
      %v451 = vrot.slane %v446, %v450
      %v452 = vlaneseq
      %v453 = vshrl.u32 %v452, 7
      %v454 = vsub.s32 1, %v453
      %v455 = vrot.slane %v446, %v454
      %v496 = vunpack.c.l.b16 %v392
      %v497 = vunpack.c.l.b16 %v393
      %v498 = vunpack.c.l.b16 %v394
      %v499 = vunpack.c.l.b16 %v395
      %v500 = vunpack.c.l.b16 %v396
      %v501 = vunpack.c.l.b16 %v397
      %v502 = vunpack.c.l.b16 %v398
      %v503 = vunpack.c.l.b16 %v399
      %v504 = vunpack.c.l.b16 %v400
      %v505 = vunpack.c.l.b16 %v401
      %v506 = vunpack.c.l.b16 %v402
      %v507 = vunpack.c.l.b16 %v403
      %v508 = vunpack.c.l.b16 %v404
      %v509 = vunpack.c.l.b16 %v405
      %v510 = vunpack.c.l.b16 %v406
      %v511 = vunpack.c.l.b16 %v407
      %v512 = vunpack.c.l.b16 %v408
      %v513 = vunpack.c.l.b16 %v409
      %v514 = vunpack.c.l.b16 %v410
      %v515 = vunpack.c.l.b16 %v411
      %v516 = vunpack.c.l.b16 %v412
      %v517 = vunpack.c.l.b16 %v413
      %v518 = vunpack.c.l.b16 %v414
      %v519 = vunpack.c.l.b16 %v415
      %v520 = vunpack.c.l.b16 %v416
      %v521 = vunpack.c.l.b16 %v417
      %v522 = vunpack.c.l.b16 %v418
      %v523 = vunpack.c.l.b16 %v419
      %v524 = vunpack.c.l.b16 %v420
      %v525 = vunpack.c.l.b16 %v421
      %v526 = vunpack.c.l.b16 %v422
      %v527 = vunpack.c.l.b16 %v423
      %v528 = vunpack.c.l.b16 %v424
      %v529 = vunpack.c.l.b16 %v425
      %v530 = vunpack.c.l.b16 %v426
      %v531 = vunpack.c.l.b16 %v427
      %v532 = vunpack.c.l.b16 %v428
      %v533 = vunpack.c.l.b16 %v429
      %v534 = vpack.c.b16 %v497, %v496
      %v535 = vpack.c.b16 %v499, %v498
      %v536 = vpack.c.b16 %v501, %v500
      %v537 = vpack.c.b16 %v503, %v502
      %v538 = vpack.c.b16 %v505, %v504
      %v539 = vpack.c.b16 %v507, %v506
      %v540 = vpack.c.b16 %v509, %v508
      %v541 = vpack.c.b16 %v511, %v510
      %v542 = vpack.c.b16 %v513, %v512
      %v543 = vpack.c.b16 %v515, %v514
      %v544 = vpack.c.b16 %v517, %v516
      %v545 = vpack.c.b16 %v519, %v518
      %v546 = vpack.c.b16 %v521, %v520
      %v547 = vpack.c.b16 %v523, %v522
      %v548 = vpack.c.b16 %v525, %v524
      %v549 = vpack.c.b16 %v527, %v526
      %v550 = vpack.c.b16 %v529, %v528
      %v551 = vpack.c.b16 %v531, %v530
      %v552 = vpack.c.b16 %v533, %v532
      %v588 = vunpack.c.l.b16 %v430
      %v589 = vunpack.c.h.b16 %v430
      %v590 = vunpack.c.l.b16 %v431
      %v591 = vunpack.c.h.b16 %v431
      %v592 = vunpack.c.l.b16 %v432
      %v593 = vunpack.c.h.b16 %v432
      %v594 = vunpack.c.l.b16 %v433
      %v595 = vunpack.c.h.b16 %v433
      %v596 = vunpack.c.l.b16 %v434
      %v597 = vunpack.c.h.b16 %v434
      %v598 = vunpack.c.l.b16 %v435
      %v599 = vunpack.c.h.b16 %v435
      %v600 = vunpack.c.l.b16 %v436
      %v601 = vunpack.c.h.b16 %v436
      %v602 = vunpack.c.l.b16 %v437
      %v603 = vunpack.c.h.b16 %v437
      %v604 = vunpack.c.l.b16 %v438
      %v605 = vunpack.c.h.b16 %v438
      %v606 = vunpack.c.l.b16 %v439
      %v607 = vunpack.c.h.b16 %v439
      %v608 = vunpack.c.l.b16 %v440
      %v609 = vunpack.c.h.b16 %v440
      %v610 = vunpack.c.l.b16 %v441
      %v611 = vunpack.c.h.b16 %v441
      %v612 = vunpack.c.l.b16 %v442
      %v613 = vunpack.c.h.b16 %v442
      %v614 = vunpack.c.l.b16 %v443
      %v615 = vunpack.c.h.b16 %v443
      %v616 = vunpack.c.l.b16 %v444
      %v617 = vunpack.c.h.b16 %v444
      %v618 = vunpack.c.l.b16 %v445
      %v619 = vunpack.c.h.b16 %v445
      %v620 = vpack.c.b16 %v590, %v588
      %v621 = vpack.c.b16 %v591, %v589
      %v622 = vpack.c.b16 %v594, %v592
      %v623 = vpack.c.b16 %v595, %v593
      %v624 = vpack.c.b16 %v598, %v596
      %v625 = vpack.c.b16 %v599, %v597
      %v626 = vpack.c.b16 %v602, %v600
      %v627 = vpack.c.b16 %v603, %v601
      %v628 = vpack.c.b16 %v606, %v604
      %v629 = vpack.c.b16 %v607, %v605
      %v630 = vpack.c.b16 %v610, %v608
      %v631 = vpack.c.b16 %v611, %v609
      %v632 = vpack.c.b16 %v614, %v612
      %v633 = vpack.c.b16 %v615, %v613
      %v634 = vpack.c.b16 %v618, %v616
      %v635 = vpack.c.b16 %v619, %v617
      %652 = vmatprep.subr.bf16.mxu0 %v621
      %653 = vmatpush1.bf16.msra.mxu0 %v620
      %654 = vmatprep.subr.bf16.mxu0 %v623
      %655 = vmatpush1.bf16.msra.mxu0 %v622
      %656 = vmatprep.subr.bf16.mxu0 %v625
      %657 = vmatpush1.bf16.msra.mxu0 %v624
      %658 = vmatprep.subr.bf16.mxu0 %v627
      %659 = vmatpush1.bf16.msra.mxu0 %v626
      %660 = vmatprep.subr.bf16.mxu0 %v629
      %661 = vmatpush1.bf16.msra.mxu0 %v628
      %662 = vmatprep.subr.bf16.mxu0 %v631
      %663 = vmatpush1.bf16.msra.mxu0 %v630
      %664 = vmatprep.subr.bf16.mxu0 %v633
      %665 = vmatpush1.bf16.msra.mxu0 %v632
      %666 = vmatprep.subr.bf16.mxu0 %v635
      %667 = vmatpush1.bf16.msra.mxu0 %v634
      %668 = vmatprep.subr.bf16.mxu0 0
      %669 = vmatpush1.bf16.msra.mxu0 0
      %670 = vmatprep.subr.bf16.mxu0 0
      %671 = vmatpush1.bf16.msra.mxu0 0
      %672 = vmatprep.subr.bf16.mxu0 0
      %673 = vmatpush1.bf16.msra.mxu0 0
      %674 = vmatprep.subr.bf16.mxu0 0
      %675 = vmatpush1.bf16.msra.mxu0 0
      %676 = vmatprep.subr.bf16.mxu0 0
      %677 = vmatpush1.bf16.msra.mxu0 0
      %678 = vmatprep.subr.bf16.mxu0 0
      %679 = vmatpush1.bf16.msra.mxu0 0
      %680 = vmatprep.subr.bf16.mxu0 0
      %681 = vmatpush1.bf16.msra.mxu0 0
      %682 = vmatprep.subr.bf16.mxu0 0
      %683 = vmatpush1.bf16.msra.mxu0 0
      %684 = vmatprep.mubr.bf16.mxu0 0
      %685 = vmatmul.mubr.bf16.gmra.mrb[0].mxu0 %v534
      %v686 = vpop.f32.mrb[0].mxu0
      %v687 = vadd.f32 %v451, %v686
      %v688 = vpop.f32.mrb[0].mxu0
      %v689 = vadd.f32 %v455, %v688
      %v690 = vpop.f32.mrb[0].mxu0
      %v691 = vadd.f32 %v451, %v690
      %v692 = vpop.f32.mrb[0].mxu0
      %v693 = vadd.f32 %v455, %v692
      %694 = vmatprep.mubr.bf16.mxu0 0
      %695 = vmatmul.mubr.bf16.gmra.mrb[0].mxu0 %v535
      %v696 = vpop.f32.mrb[0].mxu0
      %v697 = vadd.f32 %v451, %v696
      %v698 = vpop.f32.mrb[0].mxu0
      %v699 = vadd.f32 %v455, %v698
      %v700 = vpop.f32.mrb[0].mxu0
      %v701 = vadd.f32 %v451, %v700
      %v702 = vpop.f32.mrb[0].mxu0
      %v703 = vadd.f32 %v455, %v702
      %704 = vmatprep.mubr.bf16.mxu0 0
      %705 = vmatmul.mubr.bf16.gmra.mrb[0].mxu0 %v536
      %v706 = vpop.f32.mrb[0].mxu0
      %v707 = vadd.f32 %v451, %v706
      %v708 = vpop.f32.mrb[0].mxu0
      %v709 = vadd.f32 %v455, %v708
      %v710 = vpop.f32.mrb[0].mxu0
      %v711 = vadd.f32 %v451, %v710
      %v712 = vpop.f32.mrb[0].mxu0
      %v713 = vadd.f32 %v455, %v712
      %714 = vmatprep.mubr.bf16.mxu0 0
      %715 = vmatmul.mubr.bf16.gmra.mrb[0].mxu0 %v537
      %v716 = vpop.f32.mrb[0].mxu0
      %v717 = vadd.f32 %v451, %v716
      %v718 = vpop.f32.mrb[0].mxu0
      %v719 = vadd.f32 %v455, %v718
      %v720 = vpop.f32.mrb[0].mxu0
      %v721 = vadd.f32 %v451, %v720
      %v722 = vpop.f32.mrb[0].mxu0
      %v723 = vadd.f32 %v455, %v722
      %724 = vmatprep.mubr.bf16.mxu0 0
      %725 = vmatmul.mubr.bf16.gmra.mrb[0].mxu0 %v538
      %v726 = vpop.f32.mrb[0].mxu0
      %v727 = vadd.f32 %v451, %v726
      %v728 = vpop.f32.mrb[0].mxu0
      %v729 = vadd.f32 %v455, %v728
      %v730 = vpop.f32.mrb[0].mxu0
      %v731 = vadd.f32 %v451, %v730
      %v732 = vpop.f32.mrb[0].mxu0
      %v733 = vadd.f32 %v455, %v732
      %734 = vmatprep.mubr.bf16.mxu0 0
      %735 = vmatmul.mubr.bf16.gmra.mrb[0].mxu0 %v539
      %v736 = vpop.f32.mrb[0].mxu0
      %v737 = vadd.f32 %v451, %v736
      %v738 = vpop.f32.mrb[0].mxu0
      %v739 = vadd.f32 %v455, %v738
      %v740 = vpop.f32.mrb[0].mxu0
      %v741 = vadd.f32 %v451, %v740
      %v742 = vpop.f32.mrb[0].mxu0
      %v743 = vadd.f32 %v455, %v742
      %744 = vmatprep.mubr.bf16.mxu0 0
      %745 = vmatmul.mubr.bf16.gmra.mrb[0].mxu0 %v540
      %v746 = vpop.f32.mrb[0].mxu0
      %v747 = vadd.f32 %v451, %v746
      %v748 = vpop.f32.mrb[0].mxu0
      %v749 = vadd.f32 %v455, %v748
      %v750 = vpop.f32.mrb[0].mxu0
      %v751 = vadd.f32 %v451, %v750
      %v752 = vpop.f32.mrb[0].mxu0
      %v753 = vadd.f32 %v455, %v752
      %754 = vmatprep.mubr.bf16.mxu0 0
      %755 = vmatmul.mubr.bf16.gmra.mrb[0].mxu0 %v541
      %v756 = vpop.f32.mrb[0].mxu0
      %v757 = vadd.f32 %v451, %v756
      %v758 = vpop.f32.mrb[0].mxu0
      %v759 = vadd.f32 %v455, %v758
      %v760 = vpop.f32.mrb[0].mxu0
      %v761 = vadd.f32 %v451, %v760
      %v762 = vpop.f32.mrb[0].mxu0
      %v763 = vadd.f32 %v455, %v762
      %764 = vmatprep.mubr.bf16.mxu0 0
      %765 = vmatmul.mubr.bf16.gmra.mrb[0].mxu0 %v542
      %v766 = vpop.f32.mrb[0].mxu0
      %v767 = vadd.f32 %v451, %v766
      %v768 = vpop.f32.mrb[0].mxu0
      %v769 = vadd.f32 %v455, %v768
      %v770 = vpop.f32.mrb[0].mxu0
      %v771 = vadd.f32 %v451, %v770
      %v772 = vpop.f32.mrb[0].mxu0
      %v773 = vadd.f32 %v455, %v772
      %774 = vmatprep.mubr.bf16.mxu0 0
      %775 = vmatmul.mubr.bf16.gmra.mrb[0].mxu0 %v543
      %v776 = vpop.f32.mrb[0].mxu0
      %v777 = vadd.f32 %v451, %v776
      %v778 = vpop.f32.mrb[0].mxu0
      %v779 = vadd.f32 %v455, %v778
      %v780 = vpop.f32.mrb[0].mxu0
      %v781 = vadd.f32 %v451, %v780
      %v782 = vpop.f32.mrb[0].mxu0
      %v783 = vadd.f32 %v455, %v782
      %784 = vmatprep.mubr.bf16.mxu0 0
      %785 = vmatmul.mubr.bf16.gmra.mrb[0].mxu0 %v544
      %v786 = vpop.f32.mrb[0].mxu0
      %v787 = vadd.f32 %v451, %v786
      %v788 = vpop.f32.mrb[0].mxu0
      %v789 = vadd.f32 %v455, %v788
      %v790 = vpop.f32.mrb[0].mxu0
      %v791 = vadd.f32 %v451, %v790
      %v792 = vpop.f32.mrb[0].mxu0
      %v793 = vadd.f32 %v455, %v792
      %794 = vmatprep.mubr.bf16.mxu0 0
      %795 = vmatmul.mubr.bf16.gmra.mrb[0].mxu0 %v545
      %v796 = vpop.f32.mrb[0].mxu0
      %v797 = vadd.f32 %v451, %v796
      %v798 = vpop.f32.mrb[0].mxu0
      %v799 = vadd.f32 %v455, %v798
      %v800 = vpop.f32.mrb[0].mxu0
      %v801 = vadd.f32 %v451, %v800
      %v802 = vpop.f32.mrb[0].mxu0
      %v803 = vadd.f32 %v455, %v802
      %804 = vmatprep.mubr.bf16.mxu0 0
      %805 = vmatmul.mubr.bf16.gmra.mrb[0].mxu0 %v546
      %v806 = vpop.f32.mrb[0].mxu0
      %v807 = vadd.f32 %v451, %v806
      %v808 = vpop.f32.mrb[0].mxu0
      %v809 = vadd.f32 %v455, %v808
      %v810 = vpop.f32.mrb[0].mxu0
      %v811 = vadd.f32 %v451, %v810
      %v812 = vpop.f32.mrb[0].mxu0
      %v813 = vadd.f32 %v455, %v812
      %814 = vmatprep.mubr.bf16.mxu0 0
      %815 = vmatmul.mubr.bf16.gmra.mrb[0].mxu0 %v547
      %v816 = vpop.f32.mrb[0].mxu0
      %v817 = vadd.f32 %v451, %v816
      %v818 = vpop.f32.mrb[0].mxu0
      %v819 = vadd.f32 %v455, %v818
      %v820 = vpop.f32.mrb[0].mxu0
      %v821 = vadd.f32 %v451, %v820
      %v822 = vpop.f32.mrb[0].mxu0
      %v823 = vadd.f32 %v455, %v822
      %824 = vmatprep.mubr.bf16.mxu0 0
      %825 = vmatmul.mubr.bf16.gmra.mrb[0].mxu0 %v548
      %v826 = vpop.f32.mrb[0].mxu0
      %v827 = vadd.f32 %v451, %v826
      %v828 = vpop.f32.mrb[0].mxu0
      %v829 = vadd.f32 %v455, %v828
      %v830 = vpop.f32.mrb[0].mxu0
      %v831 = vadd.f32 %v451, %v830
      %v832 = vpop.f32.mrb[0].mxu0
      %v833 = vadd.f32 %v455, %v832
      %834 = vmatprep.mubr.bf16.mxu0 0
      %835 = vmatmul.mubr.bf16.gmra.mrb[0].mxu0 %v549
      %v836 = vpop.f32.mrb[0].mxu0
      %v837 = vadd.f32 %v451, %v836
      %v838 = vpop.f32.mrb[0].mxu0
      %v839 = vadd.f32 %v455, %v838
      %v840 = vpop.f32.mrb[0].mxu0
      %v841 = vadd.f32 %v451, %v840
      %v842 = vpop.f32.mrb[0].mxu0
      %v843 = vadd.f32 %v455, %v842
      %844 = vmatprep.mubr.bf16.mxu0 0
      %845 = vmatmul.mubr.bf16.gmra.mrb[0].mxu0 %v550
      %v846 = vpop.f32.mrb[0].mxu0
      %v847 = vadd.f32 %v451, %v846
      %v848 = vpop.f32.mrb[0].mxu0
      %v849 = vadd.f32 %v455, %v848
      %v850 = vpop.f32.mrb[0].mxu0
      %v851 = vadd.f32 %v451, %v850
      %v852 = vpop.f32.mrb[0].mxu0
      %v853 = vadd.f32 %v455, %v852
      %854 = vmatprep.mubr.bf16.mxu0 0
      %855 = vmatmul.mubr.bf16.gmra.mrb[0].mxu0 %v551
      %v856 = vpop.f32.mrb[0].mxu0
      %v857 = vadd.f32 %v451, %v856
      %v858 = vpop.f32.mrb[0].mxu0
      %v859 = vadd.f32 %v455, %v858
      %v860 = vpop.f32.mrb[0].mxu0
      %v861 = vadd.f32 %v451, %v860
      %v862 = vpop.f32.mrb[0].mxu0
      %v863 = vadd.f32 %v455, %v862
      %864 = vmatprep.mubr.bf16.mxu0 0
      %865 = vmatmul.mubr.bf16.gmra.mrb[0].mxu0 %v552
      %v866 = vpop.f32.mrb[0].mxu0
      %v867 = vadd.f32 %v451, %v866
      %v868 = vpop.f32.mrb[0].mxu0
      %v869 = vadd.f32 %v455, %v868
      %v870 = vpop.f32.mrb[0].mxu0
      %v871 = vadd.f32 %v451, %v870
      %v872 = vpop.f32.mrb[0].mxu0
      %v873 = vadd.f32 %v455, %v872
      %874 = vdwg.mxu0
      %v875 = vpack.c.bf16 %v691, %v687
      %v876 = vpack.c.bf16 %v701, %v697
      %v877 = vpack.c.bf16 %v711, %v707
      %v878 = vpack.c.bf16 %v721, %v717
      %v879 = vpack.c.bf16 %v731, %v727
      %v880 = vpack.c.bf16 %v741, %v737
      %v881 = vpack.c.bf16 %v751, %v747
      %v882 = vpack.c.bf16 %v761, %v757
      %v883 = vpack.c.bf16 %v771, %v767
      %v884 = vpack.c.bf16 %v781, %v777
      %v885 = vpack.c.bf16 %v791, %v787
      %v886 = vpack.c.bf16 %v801, %v797
      %v887 = vpack.c.bf16 %v811, %v807
      %v888 = vpack.c.bf16 %v821, %v817
      %v889 = vpack.c.bf16 %v831, %v827
      %v890 = vpack.c.bf16 %v841, %v837
      %v891 = vpack.c.bf16 %v851, %v847
      %v892 = vpack.c.bf16 %v861, %v857
      %v893 = vpack.c.bf16 %v871, %v867
      %vm894 = vcmp.gt.bf16.partialorder %v875, 0
      %vm895 = vcmp.gt.bf16.partialorder %v876, 0
      %vm896 = vcmp.gt.bf16.partialorder %v877, 0
      %vm897 = vcmp.gt.bf16.partialorder %v878, 0
      %vm898 = vcmp.gt.bf16.partialorder %v879, 0
      %vm899 = vcmp.gt.bf16.partialorder %v880, 0
      %vm900 = vcmp.gt.bf16.partialorder %v881, 0
      %vm901 = vcmp.gt.bf16.partialorder %v882, 0
      %vm902 = vcmp.gt.bf16.partialorder %v883, 0
      %vm903 = vcmp.gt.bf16.partialorder %v884, 0
      %vm904 = vcmp.gt.bf16.partialorder %v885, 0
      %vm905 = vcmp.gt.bf16.partialorder %v886, 0
      %vm906 = vcmp.gt.bf16.partialorder %v887, 0
      %vm907 = vcmp.gt.bf16.partialorder %v888, 0
      %vm908 = vcmp.gt.bf16.partialorder %v889, 0
      %vm909 = vcmp.gt.bf16.partialorder %v890, 0
      %vm910 = vcmp.gt.bf16.partialorder %v891, 0
      %vm911 = vcmp.gt.bf16.partialorder %v892, 0
      %vm912 = vcmp.gt.bf16.partialorder %v893, 0
      %v913 = vmul.bf16 %v875, 1045249613
      %v914 = vmul.bf16 %v876, 1045249613
      %v915 = vmul.bf16 %v877, 1045249613
      %v916 = vmul.bf16 %v878, 1045249613
      %v917 = vmul.bf16 %v879, 1045249613
      %v918 = vmul.bf16 %v880, 1045249613
      %v919 = vmul.bf16 %v881, 1045249613
      %v920 = vmul.bf16 %v882, 1045249613
      %v921 = vmul.bf16 %v883, 1045249613
      %v922 = vmul.bf16 %v884, 1045249613
      %v923 = vmul.bf16 %v885, 1045249613
      %v924 = vmul.bf16 %v886, 1045249613
      %v925 = vmul.bf16 %v887, 1045249613
      %v926 = vmul.bf16 %v888, 1045249613
      %v927 = vmul.bf16 %v889, 1045249613
      %v928 = vmul.bf16 %v890, 1045249613
      %v929 = vmul.bf16 %v891, 1045249613
      %v930 = vmul.bf16 %v892, 1045249613
      %v931 = vmul.bf16 %v893, 1045249613
      %v932 = vsel %vm894, %v875, %v913
      %v933 = vsel %vm895, %v876, %v914
      %v934 = vsel %vm896, %v877, %v915
      %v935 = vsel %vm897, %v878, %v916
      %v936 = vsel %vm898, %v879, %v917
      %v937 = vsel %vm899, %v880, %v918
      %v938 = vsel %vm900, %v881, %v919
      %v939 = vsel %vm901, %v882, %v920
      %v940 = vsel %vm902, %v883, %v921
      %v941 = vsel %vm903, %v884, %v922
      %v942 = vsel %vm904, %v885, %v923
      %v943 = vsel %vm905, %v886, %v924
      %v944 = vsel %vm906, %v887, %v925
      %v945 = vsel %vm907, %v888, %v926
      %v946 = vsel %vm908, %v889, %v927
      %v947 = vsel %vm909, %v890, %v928
      %v948 = vsel %vm910, %v891, %v929
      %v949 = vsel %vm911, %v892, %v930
      %v950 = vsel %vm912, %v893, %v931
      %v951 = vpack.c.bf16 %v693, %v689
      %v952 = vpack.c.bf16 %v703, %v699
      %v953 = vpack.c.bf16 %v713, %v709
      %v954 = vpack.c.bf16 %v723, %v719
      %v955 = vpack.c.bf16 %v733, %v729
      %v956 = vpack.c.bf16 %v743, %v739
      %v957 = vpack.c.bf16 %v753, %v749
      %v958 = vpack.c.bf16 %v763, %v759
      %v959 = vpack.c.bf16 %v773, %v769
      %v960 = vpack.c.bf16 %v783, %v779
      %v961 = vpack.c.bf16 %v793, %v789
      %v962 = vpack.c.bf16 %v803, %v799
      %v963 = vpack.c.bf16 %v813, %v809
      %v964 = vpack.c.bf16 %v823, %v819
      %v965 = vpack.c.bf16 %v833, %v829
      %v966 = vpack.c.bf16 %v843, %v839
      %v967 = vpack.c.bf16 %v853, %v849
      %v968 = vpack.c.bf16 %v863, %v859
      %v969 = vpack.c.bf16 %v873, %v869
      %v970 = vmax.bf16 %v951, 0
      %v971 = vmax.bf16 %v952, 0
      %v972 = vmax.bf16 %v953, 0
      %v973 = vmax.bf16 %v954, 0
      %v974 = vmax.bf16 %v955, 0
      %v975 = vmax.bf16 %v956, 0
      %v976 = vmax.bf16 %v957, 0
      %v977 = vmax.bf16 %v958, 0
      %v978 = vmax.bf16 %v959, 0
      %v979 = vmax.bf16 %v960, 0
      %v980 = vmax.bf16 %v961, 0
      %v981 = vmax.bf16 %v962, 0
      %v982 = vmax.bf16 %v963, 0
      %v983 = vmax.bf16 %v964, 0
      %v984 = vmax.bf16 %v965, 0
      %v985 = vmax.bf16 %v966, 0
      %v986 = vmax.bf16 %v967, 0
      %v987 = vmax.bf16 %v968, 0
      %v988 = vmax.bf16 %v969, 0
      %v989 = vld [vmem:[%s3] sm:$0xf]
      %v990 = vld [vmem:[%s3 + $0x4] sm:$0xf]
      %v991 = vld [vmem:[%s3 + $0x8] sm:$0xf]
      %v992 = vld [vmem:[%s3 + $0xc] sm:$0xf]
      %v993 = vld [vmem:[%s3 + $0x10] sm:$0xf]
      %v994 = vld [vmem:[%s3 + $0x14] sm:$0xf]
      %v995 = vld [vmem:[%s3 + $0x18] sm:$0xf]
      %v996 = vld [vmem:[%s3 + $0x1c] sm:$0xf]
      %v997 = vld [vmem:[%s3 + $0x20] sm:$0xf]
      %v998 = vld [vmem:[%s3 + $0x24] sm:$0xf]
      %v999 = vld [vmem:[%s3 + $0x28] sm:$0xf]
      %v1000 = vld [vmem:[%s3 + $0x2c] sm:$0xf]
      %v1001 = vld [vmem:[%s3 + $0x30] sm:$0xf]
      %v1002 = vld [vmem:[%s3 + $0x34] sm:$0xf]
      %v1003 = vld [vmem:[%s3 + $0x38] sm:$0xf]
      %v1004 = vld [vmem:[%s3 + $0x3c] sm:$0xf]
      %v1005 = vld [vmem:[%s4] sm:$0x1]
      %v1007 = vlaneseq
      %v1008 = vshrl.u32 %v1007, 7
      %v1009 = vsub.s32 0, %v1008
      %v1010 = vrot.slane %v1005, %v1009
      %v1028 = vunpack.c.l.b16 %v989
      %v1029 = vunpack.c.l.b16 %v990
      %v1030 = vunpack.c.l.b16 %v991
      %v1031 = vunpack.c.l.b16 %v992
      %v1032 = vunpack.c.l.b16 %v993
      %v1033 = vunpack.c.l.b16 %v994
      %v1034 = vunpack.c.l.b16 %v995
      %v1035 = vunpack.c.l.b16 %v996
      %v1036 = vunpack.c.l.b16 %v997
      %v1037 = vunpack.c.l.b16 %v998
      %v1038 = vunpack.c.l.b16 %v999
      %v1039 = vunpack.c.l.b16 %v1000
      %v1040 = vunpack.c.l.b16 %v1001
      %v1041 = vunpack.c.l.b16 %v1002
      %v1042 = vunpack.c.l.b16 %v1003
      %v1043 = vunpack.c.l.b16 %v1004
      %v1044 = vpack.c.b16 %v1029, %v1028
      %v1045 = vpack.c.b16 %v1031, %v1030
      %v1046 = vpack.c.b16 %v1033, %v1032
      %v1047 = vpack.c.b16 %v1035, %v1034
      %v1048 = vpack.c.b16 %v1037, %v1036
      %v1049 = vpack.c.b16 %v1039, %v1038
      %v1050 = vpack.c.b16 %v1041, %v1040
      %v1051 = vpack.c.b16 %v1043, %v1042
      %1060 = vmatprep.subr.bf16.mxu0 0
      %1061 = vmatpush1.bf16.msra.mxu0 %v1044
      %1062 = vmatprep.subr.bf16.mxu0 0
      %1063 = vmatpush1.bf16.msra.mxu0 %v1045
      %1064 = vmatprep.subr.bf16.mxu0 0
      %1065 = vmatpush1.bf16.msra.mxu0 %v1046
      %1066 = vmatprep.subr.bf16.mxu0 0
      %1067 = vmatpush1.bf16.msra.mxu0 %v1047
      %1068 = vmatprep.subr.bf16.mxu0 0
      %1069 = vmatpush1.bf16.msra.mxu0 %v1048
      %1070 = vmatprep.subr.bf16.mxu0 0
      %1071 = vmatpush1.bf16.msra.mxu0 %v1049
      %1072 = vmatprep.subr.bf16.mxu0 0
      %1073 = vmatpush1.bf16.msra.mxu0 %v1050
      %1074 = vmatprep.subr.bf16.mxu0 0
      %1075 = vmatpush1.bf16.msra.mxu0 %v1051
      %1076 = vmatprep.subr.bf16.mxu0 0
      %1077 = vmatpush1.bf16.msra.mxu0 0
      %1078 = vmatprep.subr.bf16.mxu0 0
      %1079 = vmatpush1.bf16.msra.mxu0 0
      %1080 = vmatprep.subr.bf16.mxu0 0
      %1081 = vmatpush1.bf16.msra.mxu0 0
      %1082 = vmatprep.subr.bf16.mxu0 0
      %1083 = vmatpush1.bf16.msra.mxu0 0
      %1084 = vmatprep.subr.bf16.mxu0 0
      %1085 = vmatpush1.bf16.msra.mxu0 0
      %1086 = vmatprep.subr.bf16.mxu0 0
      %1087 = vmatpush1.bf16.msra.mxu0 0
      %1088 = vmatprep.subr.bf16.mxu0 0
      %1089 = vmatpush1.bf16.msra.mxu0 0
      %1090 = vmatprep.subr.bf16.mxu0 0
      %1091 = vmatpush1.bf16.msra.mxu0 0
      %1092 = vmatprep.mubr.bf16.mxu0 0
      %1093 = vmatmul.mubr.bf16.gmra.mrb[0].mxu0 %v932
      %v1094 = vpop.f32.mrb[0].mxu0
      %v1095 = vadd.f32 %v1010, %v1094
      %v1096 = vpop.f32.mrb[0].mxu0
      %v1097 = vpop.f32.mrb[0].mxu0
      %v1098 = vadd.f32 %v1010, %v1097
      %v1099 = vpop.f32.mrb[0].mxu0
      %1100 = vmatprep.mubr.bf16.mxu0 0
      %1101 = vmatmul.mubr.bf16.gmra.mrb[0].mxu0 %v933
      %v1102 = vpop.f32.mrb[0].mxu0
      %v1103 = vadd.f32 %v1010, %v1102
      %v1104 = vpop.f32.mrb[0].mxu0
      %v1105 = vpop.f32.mrb[0].mxu0
      %v1106 = vadd.f32 %v1010, %v1105
      %v1107 = vpop.f32.mrb[0].mxu0
      %1108 = vmatprep.mubr.bf16.mxu0 0
      %1109 = vmatmul.mubr.bf16.gmra.mrb[0].mxu0 %v934
      %v1110 = vpop.f32.mrb[0].mxu0
      %v1111 = vadd.f32 %v1010, %v1110
      %v1112 = vpop.f32.mrb[0].mxu0
      %v1113 = vpop.f32.mrb[0].mxu0
      %v1114 = vadd.f32 %v1010, %v1113
      %v1115 = vpop.f32.mrb[0].mxu0
      %1116 = vmatprep.mubr.bf16.mxu0 0
      %1117 = vmatmul.mubr.bf16.gmra.mrb[0].mxu0 %v935
      %v1118 = vpop.f32.mrb[0].mxu0
      %v1119 = vadd.f32 %v1010, %v1118
      %v1120 = vpop.f32.mrb[0].mxu0
      %v1121 = vpop.f32.mrb[0].mxu0
      %v1122 = vadd.f32 %v1010, %v1121
      %v1123 = vpop.f32.mrb[0].mxu0
      %1124 = vmatprep.mubr.bf16.mxu0 0
      %1125 = vmatmul.mubr.bf16.gmra.mrb[0].mxu0 %v936
      %v1126 = vpop.f32.mrb[0].mxu0
      %v1127 = vadd.f32 %v1010, %v1126
      %v1128 = vpop.f32.mrb[0].mxu0
      %v1129 = vpop.f32.mrb[0].mxu0
      %v1130 = vadd.f32 %v1010, %v1129
      %v1131 = vpop.f32.mrb[0].mxu0
      %1132 = vmatprep.mubr.bf16.mxu0 0
      %1133 = vmatmul.mubr.bf16.gmra.mrb[0].mxu0 %v937
      %v1134 = vpop.f32.mrb[0].mxu0
      %v1135 = vadd.f32 %v1010, %v1134
      %v1136 = vpop.f32.mrb[0].mxu0
      %v1137 = vpop.f32.mrb[0].mxu0
      %v1138 = vadd.f32 %v1010, %v1137
      %v1139 = vpop.f32.mrb[0].mxu0
      %1140 = vmatprep.mubr.bf16.mxu0 0
      %1141 = vmatmul.mubr.bf16.gmra.mrb[0].mxu0 %v938
      %v1142 = vpop.f32.mrb[0].mxu0
      %v1143 = vadd.f32 %v1010, %v1142
      %v1144 = vpop.f32.mrb[0].mxu0
      %v1145 = vpop.f32.mrb[0].mxu0
      %v1146 = vadd.f32 %v1010, %v1145
      %v1147 = vpop.f32.mrb[0].mxu0
      %1148 = vmatprep.mubr.bf16.mxu0 0
      %1149 = vmatmul.mubr.bf16.gmra.mrb[0].mxu0 %v939
      %v1150 = vpop.f32.mrb[0].mxu0
      %v1151 = vadd.f32 %v1010, %v1150
      %v1152 = vpop.f32.mrb[0].mxu0
      %v1153 = vpop.f32.mrb[0].mxu0
      %v1154 = vadd.f32 %v1010, %v1153
      %v1155 = vpop.f32.mrb[0].mxu0
      %1156 = vmatprep.mubr.bf16.mxu0 0
      %1157 = vmatmul.mubr.bf16.gmra.mrb[0].mxu0 %v940
      %v1158 = vpop.f32.mrb[0].mxu0
      %v1159 = vadd.f32 %v1010, %v1158
      %v1160 = vpop.f32.mrb[0].mxu0
      %v1161 = vpop.f32.mrb[0].mxu0
      %v1162 = vadd.f32 %v1010, %v1161
      %v1163 = vpop.f32.mrb[0].mxu0
      %1164 = vmatprep.mubr.bf16.mxu0 0
      %1165 = vmatmul.mubr.bf16.gmra.mrb[0].mxu0 %v941
      %v1166 = vpop.f32.mrb[0].mxu0
      %v1167 = vadd.f32 %v1010, %v1166
      %v1168 = vpop.f32.mrb[0].mxu0
      %v1169 = vpop.f32.mrb[0].mxu0
      %v1170 = vadd.f32 %v1010, %v1169
      %v1171 = vpop.f32.mrb[0].mxu0
      %1172 = vmatprep.mubr.bf16.mxu0 0
      %1173 = vmatmul.mubr.bf16.gmra.mrb[0].mxu0 %v942
      %v1174 = vpop.f32.mrb[0].mxu0
      %v1175 = vadd.f32 %v1010, %v1174
      %v1176 = vpop.f32.mrb[0].mxu0
      %v1177 = vpop.f32.mrb[0].mxu0
      %v1178 = vadd.f32 %v1010, %v1177
      %v1179 = vpop.f32.mrb[0].mxu0
      %1180 = vmatprep.mubr.bf16.mxu0 0
      %1181 = vmatmul.mubr.bf16.gmra.mrb[0].mxu0 %v943
      %v1182 = vpop.f32.mrb[0].mxu0
      %v1183 = vadd.f32 %v1010, %v1182
      %v1184 = vpop.f32.mrb[0].mxu0
      %v1185 = vpop.f32.mrb[0].mxu0
      %v1186 = vadd.f32 %v1010, %v1185
      %v1187 = vpop.f32.mrb[0].mxu0
      %1188 = vmatprep.mubr.bf16.mxu0 0
      %1189 = vmatmul.mubr.bf16.gmra.mrb[0].mxu0 %v944
      %v1190 = vpop.f32.mrb[0].mxu0
      %v1191 = vadd.f32 %v1010, %v1190
      %v1192 = vpop.f32.mrb[0].mxu0
      %v1193 = vpop.f32.mrb[0].mxu0
      %v1194 = vadd.f32 %v1010, %v1193
      %v1195 = vpop.f32.mrb[0].mxu0
      %1196 = vmatprep.mubr.bf16.mxu0 0
      %1197 = vmatmul.mubr.bf16.gmra.mrb[0].mxu0 %v945
      %v1198 = vpop.f32.mrb[0].mxu0
      %v1199 = vadd.f32 %v1010, %v1198
      %v1200 = vpop.f32.mrb[0].mxu0
      %v1201 = vpop.f32.mrb[0].mxu0
      %v1202 = vadd.f32 %v1010, %v1201
      %v1203 = vpop.f32.mrb[0].mxu0
      %1204 = vmatprep.mubr.bf16.mxu0 0
      %1205 = vmatmul.mubr.bf16.gmra.mrb[0].mxu0 %v946
      %v1206 = vpop.f32.mrb[0].mxu0
      %v1207 = vadd.f32 %v1010, %v1206
      %v1208 = vpop.f32.mrb[0].mxu0
      %v1209 = vpop.f32.mrb[0].mxu0
      %v1210 = vadd.f32 %v1010, %v1209
      %v1211 = vpop.f32.mrb[0].mxu0
      %1212 = vmatprep.mubr.bf16.mxu0 0
      %1213 = vmatmul.mubr.bf16.gmra.mrb[0].mxu0 %v947
      %v1214 = vpop.f32.mrb[0].mxu0
      %v1215 = vadd.f32 %v1010, %v1214
      %v1216 = vpop.f32.mrb[0].mxu0
      %v1217 = vpop.f32.mrb[0].mxu0
      %v1218 = vadd.f32 %v1010, %v1217
      %v1219 = vpop.f32.mrb[0].mxu0
      %1220 = vmatprep.mubr.bf16.mxu0 0
      %1221 = vmatmul.mubr.bf16.gmra.mrb[0].mxu0 %v948
      %v1222 = vpop.f32.mrb[0].mxu0
      %v1223 = vadd.f32 %v1010, %v1222
      %v1224 = vpop.f32.mrb[0].mxu0
      %v1225 = vpop.f32.mrb[0].mxu0
      %v1226 = vadd.f32 %v1010, %v1225
      %v1227 = vpop.f32.mrb[0].mxu0
      %1228 = vmatprep.mubr.bf16.mxu0 0
      %1229 = vmatmul.mubr.bf16.gmra.mrb[0].mxu0 %v949
      %v1230 = vpop.f32.mrb[0].mxu0
      %v1231 = vadd.f32 %v1010, %v1230
      %v1232 = vpop.f32.mrb[0].mxu0
      %v1233 = vpop.f32.mrb[0].mxu0
      %v1234 = vadd.f32 %v1010, %v1233
      %v1235 = vpop.f32.mrb[0].mxu0
      %1236 = vmatprep.mubr.bf16.mxu0 0
      %1237 = vmatmul.mubr.bf16.gmra.mrb[0].mxu0 %v950
      %v1238 = vpop.f32.mrb[0].mxu0
      %v1239 = vadd.f32 %v1010, %v1238
      %v1240 = vpop.f32.mrb[0].mxu0
      %v1241 = vpop.f32.mrb[0].mxu0
      %v1242 = vadd.f32 %v1010, %v1241
      %v1243 = vpop.f32.mrb[0].mxu0
      %1244 = vdwg.mxu0
      %v1245 = vpack.c.bf16 %v1098, %v1095
      %v1246 = vpack.c.bf16 %v1106, %v1103
      %v1247 = vpack.c.bf16 %v1114, %v1111
      %v1248 = vpack.c.bf16 %v1122, %v1119
      %v1249 = vpack.c.bf16 %v1130, %v1127
      %v1250 = vpack.c.bf16 %v1138, %v1135
      %v1251 = vpack.c.bf16 %v1146, %v1143
      %v1252 = vpack.c.bf16 %v1154, %v1151
      %v1253 = vpack.c.bf16 %v1162, %v1159
      %v1254 = vpack.c.bf16 %v1170, %v1167
      %v1255 = vpack.c.bf16 %v1178, %v1175
      %v1256 = vpack.c.bf16 %v1186, %v1183
      %v1257 = vpack.c.bf16 %v1194, %v1191
      %v1258 = vpack.c.bf16 %v1202, %v1199
      %v1259 = vpack.c.bf16 %v1210, %v1207
      %v1260 = vpack.c.bf16 %v1218, %v1215
      %v1261 = vpack.c.bf16 %v1226, %v1223
      %v1262 = vpack.c.bf16 %v1234, %v1231
      %v1263 = vpack.c.bf16 %v1242, %v1239
      %vm1264 = vcmp.gt.bf16.partialorder %v1245, 0
      %vm1265 = vcmp.gt.bf16.partialorder %v1246, 0
      %vm1266 = vcmp.gt.bf16.partialorder %v1247, 0
      %vm1267 = vcmp.gt.bf16.partialorder %v1248, 0
      %vm1268 = vcmp.gt.bf16.partialorder %v1249, 0
      %vm1269 = vcmp.gt.bf16.partialorder %v1250, 0
      %vm1270 = vcmp.gt.bf16.partialorder %v1251, 0
      %vm1271 = vcmp.gt.bf16.partialorder %v1252, 0
      %vm1272 = vcmp.gt.bf16.partialorder %v1253, 0
      %vm1273 = vcmp.gt.bf16.partialorder %v1254, 0
      %vm1274 = vcmp.gt.bf16.partialorder %v1255, 0
      %vm1275 = vcmp.gt.bf16.partialorder %v1256, 0
      %vm1276 = vcmp.gt.bf16.partialorder %v1257, 0
      %vm1277 = vcmp.gt.bf16.partialorder %v1258, 0
      %vm1278 = vcmp.gt.bf16.partialorder %v1259, 0
      %vm1279 = vcmp.gt.bf16.partialorder %v1260, 0
      %vm1280 = vcmp.gt.bf16.partialorder %v1261, 0
      %vm1281 = vcmp.gt.bf16.partialorder %v1262, 0
      %vm1282 = vcmp.gt.bf16.partialorder %v1263, 0
      %v1283 = vmul.bf16 %v1245, 1045249613
      %v1284 = vmul.bf16 %v1246, 1045249613
      %v1285 = vmul.bf16 %v1247, 1045249613
      %v1286 = vmul.bf16 %v1248, 1045249613
      %v1287 = vmul.bf16 %v1249, 1045249613
      %v1288 = vmul.bf16 %v1250, 1045249613
      %v1289 = vmul.bf16 %v1251, 1045249613
      %v1290 = vmul.bf16 %v1252, 1045249613
      %v1291 = vmul.bf16 %v1253, 1045249613
      %v1292 = vmul.bf16 %v1254, 1045249613
      %v1293 = vmul.bf16 %v1255, 1045249613
      %v1294 = vmul.bf16 %v1256, 1045249613
      %v1295 = vmul.bf16 %v1257, 1045249613
      %v1296 = vmul.bf16 %v1258, 1045249613
      %v1297 = vmul.bf16 %v1259, 1045249613
      %v1298 = vmul.bf16 %v1260, 1045249613
      %v1299 = vmul.bf16 %v1261, 1045249613
      %v1300 = vmul.bf16 %v1262, 1045249613
      %v1301 = vmul.bf16 %v1263, 1045249613
      %v1302 = vsel %vm1264, %v1245, %v1283
      %v1303 = vsel %vm1265, %v1246, %v1284
      %v1304 = vsel %vm1266, %v1247, %v1285
      %v1305 = vsel %vm1267, %v1248, %v1286
      %v1306 = vsel %vm1268, %v1249, %v1287
      %v1307 = vsel %vm1269, %v1250, %v1288
      %v1308 = vsel %vm1270, %v1251, %v1289
      %v1309 = vsel %vm1271, %v1252, %v1290
      %v1310 = vsel %vm1272, %v1253, %v1291
      %v1311 = vsel %vm1273, %v1254, %v1292
      %v1312 = vsel %vm1274, %v1255, %v1293
      %v1313 = vsel %vm1275, %v1256, %v1294
      %v1314 = vsel %vm1276, %v1257, %v1295
      %v1315 = vsel %vm1277, %v1258, %v1296
      %v1316 = vsel %vm1278, %v1259, %v1297
      %v1317 = vsel %vm1279, %v1260, %v1298
      %v1318 = vsel %vm1280, %v1261, %v1299
      %v1319 = vsel %vm1281, %v1262, %v1300
      %v1320 = vsel %vm1282, %v1263, %v1301
      %v1321 = vld [vmem:[%s5] sm:$0xf]
      %v1322 = vld [vmem:[%s5 + $0x4] sm:$0xf]
      %v1323 = vld [vmem:[%s5 + $0x8] sm:$0xf]
      %v1324 = vld [vmem:[%s5 + $0xc] sm:$0xf]
      %v1325 = vld [vmem:[%s5 + $0x10] sm:$0xf]
      %v1326 = vld [vmem:[%s5 + $0x14] sm:$0xf]
      %v1327 = vld [vmem:[%s5 + $0x18] sm:$0xf]
      %v1328 = vld [vmem:[%s5 + $0x1c] sm:$0xf]
      %v1329 = vld [vmem:[%s5 + $0x20] sm:$0xf]
      %v1330 = vld [vmem:[%s5 + $0x24] sm:$0xf]
      %v1331 = vld [vmem:[%s5 + $0x28] sm:$0xf]
      %v1332 = vld [vmem:[%s5 + $0x2c] sm:$0xf]
      %v1333 = vld [vmem:[%s5 + $0x30] sm:$0xf]
      %v1334 = vld [vmem:[%s5 + $0x34] sm:$0xf]
      %v1335 = vld [vmem:[%s5 + $0x38] sm:$0xf]
      %v1336 = vld [vmem:[%s5 + $0x3c] sm:$0xf]
      %v1337 = vld [vmem:[%s6] sm:$0x1]
      %v1339 = vlaneseq
      %v1340 = vshrl.u32 %v1339, 7
      %v1341 = vsub.s32 0, %v1340
      %v1342 = vrot.slane %v1337, %v1341
      %v1360 = vunpack.c.l.b16 %v1321
      %v1361 = vunpack.c.l.b16 %v1322
      %v1362 = vunpack.c.l.b16 %v1323
      %v1363 = vunpack.c.l.b16 %v1324
      %v1364 = vunpack.c.l.b16 %v1325
      %v1365 = vunpack.c.l.b16 %v1326
      %v1366 = vunpack.c.l.b16 %v1327
      %v1367 = vunpack.c.l.b16 %v1328
      %v1368 = vunpack.c.l.b16 %v1329
      %v1369 = vunpack.c.l.b16 %v1330
      %v1370 = vunpack.c.l.b16 %v1331
      %v1371 = vunpack.c.l.b16 %v1332
      %v1372 = vunpack.c.l.b16 %v1333
      %v1373 = vunpack.c.l.b16 %v1334
      %v1374 = vunpack.c.l.b16 %v1335
      %v1375 = vunpack.c.l.b16 %v1336
      %v1376 = vpack.c.b16 %v1361, %v1360
      %v1377 = vpack.c.b16 %v1363, %v1362
      %v1378 = vpack.c.b16 %v1365, %v1364
      %v1379 = vpack.c.b16 %v1367, %v1366
      %v1380 = vpack.c.b16 %v1369, %v1368
      %v1381 = vpack.c.b16 %v1371, %v1370
      %v1382 = vpack.c.b16 %v1373, %v1372
      %v1383 = vpack.c.b16 %v1375, %v1374
      %1392 = vmatprep.subr.bf16.mxu0 0
      %1393 = vmatpush1.bf16.msra.mxu0 %v1376
      %1394 = vmatprep.subr.bf16.mxu0 0
      %1395 = vmatpush1.bf16.msra.mxu0 %v1377
      %1396 = vmatprep.subr.bf16.mxu0 0
      %1397 = vmatpush1.bf16.msra.mxu0 %v1378
      %1398 = vmatprep.subr.bf16.mxu0 0
      %1399 = vmatpush1.bf16.msra.mxu0 %v1379
      %1400 = vmatprep.subr.bf16.mxu0 0
      %1401 = vmatpush1.bf16.msra.mxu0 %v1380
      %1402 = vmatprep.subr.bf16.mxu0 0
      %1403 = vmatpush1.bf16.msra.mxu0 %v1381
      %1404 = vmatprep.subr.bf16.mxu0 0
      %1405 = vmatpush1.bf16.msra.mxu0 %v1382
      %1406 = vmatprep.subr.bf16.mxu0 0
      %1407 = vmatpush1.bf16.msra.mxu0 %v1383
      %1408 = vmatprep.subr.bf16.mxu0 0
      %1409 = vmatpush1.bf16.msra.mxu0 0
      %1410 = vmatprep.subr.bf16.mxu0 0
      %1411 = vmatpush1.bf16.msra.mxu0 0
      %1412 = vmatprep.subr.bf16.mxu0 0
      %1413 = vmatpush1.bf16.msra.mxu0 0
      %1414 = vmatprep.subr.bf16.mxu0 0
      %1415 = vmatpush1.bf16.msra.mxu0 0
      %1416 = vmatprep.subr.bf16.mxu0 0
      %1417 = vmatpush1.bf16.msra.mxu0 0
      %1418 = vmatprep.subr.bf16.mxu0 0
      %1419 = vmatpush1.bf16.msra.mxu0 0
      %1420 = vmatprep.subr.bf16.mxu0 0
      %1421 = vmatpush1.bf16.msra.mxu0 0
      %1422 = vmatprep.subr.bf16.mxu0 0
      %1423 = vmatpush1.bf16.msra.mxu0 0
      %1424 = vmatprep.mubr.bf16.mxu0 0
      %1425 = vmatmul.mubr.bf16.gmra.mrb[0].mxu0 %v1302
      %v1426 = vpop.f32.mrb[0].mxu0
      %v1427 = vadd.f32 %v1342, %v1426
      %v1428 = vpop.f32.mrb[0].mxu0
      %v1429 = vpop.f32.mrb[0].mxu0
      %v1430 = vadd.f32 %v1342, %v1429
      %v1431 = vpop.f32.mrb[0].mxu0
      %1432 = vmatprep.mubr.bf16.mxu0 0
      %1433 = vmatmul.mubr.bf16.gmra.mrb[0].mxu0 %v1303
      %v1434 = vpop.f32.mrb[0].mxu0
      %v1435 = vadd.f32 %v1342, %v1434
      %v1436 = vpop.f32.mrb[0].mxu0
      %v1437 = vpop.f32.mrb[0].mxu0
      %v1438 = vadd.f32 %v1342, %v1437
      %v1439 = vpop.f32.mrb[0].mxu0
      %1440 = vmatprep.mubr.bf16.mxu0 0
      %1441 = vmatmul.mubr.bf16.gmra.mrb[0].mxu0 %v1304
      %v1442 = vpop.f32.mrb[0].mxu0
      %v1443 = vadd.f32 %v1342, %v1442
      %v1444 = vpop.f32.mrb[0].mxu0
      %v1445 = vpop.f32.mrb[0].mxu0
      %v1446 = vadd.f32 %v1342, %v1445
      %v1447 = vpop.f32.mrb[0].mxu0
      %1448 = vmatprep.mubr.bf16.mxu0 0
      %1449 = vmatmul.mubr.bf16.gmra.mrb[0].mxu0 %v1305
      %v1450 = vpop.f32.mrb[0].mxu0
      %v1451 = vadd.f32 %v1342, %v1450
      %v1452 = vpop.f32.mrb[0].mxu0
      %v1453 = vpop.f32.mrb[0].mxu0
      %v1454 = vadd.f32 %v1342, %v1453
      %v1455 = vpop.f32.mrb[0].mxu0
      %1456 = vmatprep.mubr.bf16.mxu0 0
      %1457 = vmatmul.mubr.bf16.gmra.mrb[0].mxu0 %v1306
      %v1458 = vpop.f32.mrb[0].mxu0
      %v1459 = vadd.f32 %v1342, %v1458
      %v1460 = vpop.f32.mrb[0].mxu0
      %v1461 = vpop.f32.mrb[0].mxu0
      %v1462 = vadd.f32 %v1342, %v1461
      %v1463 = vpop.f32.mrb[0].mxu0
      %1464 = vmatprep.mubr.bf16.mxu0 0
      %1465 = vmatmul.mubr.bf16.gmra.mrb[0].mxu0 %v1307
      %v1466 = vpop.f32.mrb[0].mxu0
      %v1467 = vadd.f32 %v1342, %v1466
      %v1468 = vpop.f32.mrb[0].mxu0
      %v1469 = vpop.f32.mrb[0].mxu0
      %v1470 = vadd.f32 %v1342, %v1469
      %v1471 = vpop.f32.mrb[0].mxu0
      %1472 = vmatprep.mubr.bf16.mxu0 0
      %1473 = vmatmul.mubr.bf16.gmra.mrb[0].mxu0 %v1308
      %v1474 = vpop.f32.mrb[0].mxu0
      %v1475 = vadd.f32 %v1342, %v1474
      %v1476 = vpop.f32.mrb[0].mxu0
      %v1477 = vpop.f32.mrb[0].mxu0
      %v1478 = vadd.f32 %v1342, %v1477
      %v1479 = vpop.f32.mrb[0].mxu0
      %1480 = vmatprep.mubr.bf16.mxu0 0
      %1481 = vmatmul.mubr.bf16.gmra.mrb[0].mxu0 %v1309
      %v1482 = vpop.f32.mrb[0].mxu0
      %v1483 = vadd.f32 %v1342, %v1482
      %v1484 = vpop.f32.mrb[0].mxu0
      %v1485 = vpop.f32.mrb[0].mxu0
      %v1486 = vadd.f32 %v1342, %v1485
      %v1487 = vpop.f32.mrb[0].mxu0
      %1488 = vmatprep.mubr.bf16.mxu0 0
      %1489 = vmatmul.mubr.bf16.gmra.mrb[0].mxu0 %v1310
      %v1490 = vpop.f32.mrb[0].mxu0
      %v1491 = vadd.f32 %v1342, %v1490
      %v1492 = vpop.f32.mrb[0].mxu0
      %v1493 = vpop.f32.mrb[0].mxu0
      %v1494 = vadd.f32 %v1342, %v1493
      %v1495 = vpop.f32.mrb[0].mxu0
      %1496 = vmatprep.mubr.bf16.mxu0 0
      %1497 = vmatmul.mubr.bf16.gmra.mrb[0].mxu0 %v1311
      %v1498 = vpop.f32.mrb[0].mxu0
      %v1499 = vadd.f32 %v1342, %v1498
      %v1500 = vpop.f32.mrb[0].mxu0
      %v1501 = vpop.f32.mrb[0].mxu0
      %v1502 = vadd.f32 %v1342, %v1501
      %v1503 = vpop.f32.mrb[0].mxu0
      %1504 = vmatprep.mubr.bf16.mxu0 0
      %1505 = vmatmul.mubr.bf16.gmra.mrb[0].mxu0 %v1312
      %v1506 = vpop.f32.mrb[0].mxu0
      %v1507 = vadd.f32 %v1342, %v1506
      %v1508 = vpop.f32.mrb[0].mxu0
      %v1509 = vpop.f32.mrb[0].mxu0
      %v1510 = vadd.f32 %v1342, %v1509
      %v1511 = vpop.f32.mrb[0].mxu0
      %1512 = vmatprep.mubr.bf16.mxu0 0
      %1513 = vmatmul.mubr.bf16.gmra.mrb[0].mxu0 %v1313
      %v1514 = vpop.f32.mrb[0].mxu0
      %v1515 = vadd.f32 %v1342, %v1514
      %v1516 = vpop.f32.mrb[0].mxu0
      %v1517 = vpop.f32.mrb[0].mxu0
      %v1518 = vadd.f32 %v1342, %v1517
      %v1519 = vpop.f32.mrb[0].mxu0
      %1520 = vmatprep.mubr.bf16.mxu0 0
      %1521 = vmatmul.mubr.bf16.gmra.mrb[0].mxu0 %v1314
      %v1522 = vpop.f32.mrb[0].mxu0
      %v1523 = vadd.f32 %v1342, %v1522
      %v1524 = vpop.f32.mrb[0].mxu0
      %v1525 = vpop.f32.mrb[0].mxu0
      %v1526 = vadd.f32 %v1342, %v1525
      %v1527 = vpop.f32.mrb[0].mxu0
      %1528 = vmatprep.mubr.bf16.mxu0 0
      %1529 = vmatmul.mubr.bf16.gmra.mrb[0].mxu0 %v1315
      %v1530 = vpop.f32.mrb[0].mxu0
      %v1531 = vadd.f32 %v1342, %v1530
      %v1532 = vpop.f32.mrb[0].mxu0
      %v1533 = vpop.f32.mrb[0].mxu0
      %v1534 = vadd.f32 %v1342, %v1533
      %v1535 = vpop.f32.mrb[0].mxu0
      %1536 = vmatprep.mubr.bf16.mxu0 0
      %1537 = vmatmul.mubr.bf16.gmra.mrb[0].mxu0 %v1316
      %v1538 = vpop.f32.mrb[0].mxu0
      %v1539 = vadd.f32 %v1342, %v1538
      %v1540 = vpop.f32.mrb[0].mxu0
      %v1541 = vpop.f32.mrb[0].mxu0
      %v1542 = vadd.f32 %v1342, %v1541
      %v1543 = vpop.f32.mrb[0].mxu0
      %1544 = vmatprep.mubr.bf16.mxu0 0
      %1545 = vmatmul.mubr.bf16.gmra.mrb[0].mxu0 %v1317
      %v1546 = vpop.f32.mrb[0].mxu0
      %v1547 = vadd.f32 %v1342, %v1546
      %v1548 = vpop.f32.mrb[0].mxu0
      %v1549 = vpop.f32.mrb[0].mxu0
      %v1550 = vadd.f32 %v1342, %v1549
      %v1551 = vpop.f32.mrb[0].mxu0
      %1552 = vmatprep.mubr.bf16.mxu0 0
      %1553 = vmatmul.mubr.bf16.gmra.mrb[0].mxu0 %v1318
      %v1554 = vpop.f32.mrb[0].mxu0
      %v1555 = vadd.f32 %v1342, %v1554
      %v1556 = vpop.f32.mrb[0].mxu0
      %v1557 = vpop.f32.mrb[0].mxu0
      %v1558 = vadd.f32 %v1342, %v1557
      %v1559 = vpop.f32.mrb[0].mxu0
      %1560 = vmatprep.mubr.bf16.mxu0 0
      %1561 = vmatmul.mubr.bf16.gmra.mrb[0].mxu0 %v1319
      %v1562 = vpop.f32.mrb[0].mxu0
      %v1563 = vadd.f32 %v1342, %v1562
      %v1564 = vpop.f32.mrb[0].mxu0
      %v1565 = vpop.f32.mrb[0].mxu0
      %v1566 = vadd.f32 %v1342, %v1565
      %v1567 = vpop.f32.mrb[0].mxu0
      %1568 = vmatprep.mubr.bf16.mxu0 0
      %1569 = vmatmul.mubr.bf16.gmra.mrb[0].mxu0 %v1320
      %v1570 = vpop.f32.mrb[0].mxu0
      %v1571 = vadd.f32 %v1342, %v1570
      %v1572 = vpop.f32.mrb[0].mxu0
      %v1573 = vpop.f32.mrb[0].mxu0
      %v1574 = vadd.f32 %v1342, %v1573
      %v1575 = vpop.f32.mrb[0].mxu0
      %1576 = vdwg.mxu0
      %v1577 = vpack.c.bf16 %v1430, %v1427
      %v1578 = vpack.c.bf16 %v1438, %v1435
      %v1579 = vpack.c.bf16 %v1446, %v1443
      %v1580 = vpack.c.bf16 %v1454, %v1451
      %v1581 = vpack.c.bf16 %v1462, %v1459
      %v1582 = vpack.c.bf16 %v1470, %v1467
      %v1583 = vpack.c.bf16 %v1478, %v1475
      %v1584 = vpack.c.bf16 %v1486, %v1483
      %v1585 = vpack.c.bf16 %v1494, %v1491
      %v1586 = vpack.c.bf16 %v1502, %v1499
      %v1587 = vpack.c.bf16 %v1510, %v1507
      %v1588 = vpack.c.bf16 %v1518, %v1515
      %v1589 = vpack.c.bf16 %v1526, %v1523
      %v1590 = vpack.c.bf16 %v1534, %v1531
      %v1591 = vpack.c.bf16 %v1542, %v1539
      %v1592 = vpack.c.bf16 %v1550, %v1547
      %v1593 = vpack.c.bf16 %v1558, %v1555
      %v1594 = vpack.c.bf16 %v1566, %v1563
      %v1595 = vpack.c.bf16 %v1574, %v1571
      %vm1596 = vcmp.gt.bf16.partialorder %v1577, 0
      %vm1597 = vcmp.gt.bf16.partialorder %v1578, 0
      %vm1598 = vcmp.gt.bf16.partialorder %v1579, 0
      %vm1599 = vcmp.gt.bf16.partialorder %v1580, 0
      %vm1600 = vcmp.gt.bf16.partialorder %v1581, 0
      %vm1601 = vcmp.gt.bf16.partialorder %v1582, 0
      %vm1602 = vcmp.gt.bf16.partialorder %v1583, 0
      %vm1603 = vcmp.gt.bf16.partialorder %v1584, 0
      %vm1604 = vcmp.gt.bf16.partialorder %v1585, 0
      %vm1605 = vcmp.gt.bf16.partialorder %v1586, 0
      %vm1606 = vcmp.gt.bf16.partialorder %v1587, 0
      %vm1607 = vcmp.gt.bf16.partialorder %v1588, 0
      %vm1608 = vcmp.gt.bf16.partialorder %v1589, 0
      %vm1609 = vcmp.gt.bf16.partialorder %v1590, 0
      %vm1610 = vcmp.gt.bf16.partialorder %v1591, 0
      %vm1611 = vcmp.gt.bf16.partialorder %v1592, 0
      %vm1612 = vcmp.gt.bf16.partialorder %v1593, 0
      %vm1613 = vcmp.gt.bf16.partialorder %v1594, 0
      %vm1614 = vcmp.gt.bf16.partialorder %v1595, 0
      %v1615 = vmul.bf16 %v1577, 1045249613
      %v1616 = vmul.bf16 %v1578, 1045249613
      %v1617 = vmul.bf16 %v1579, 1045249613
      %v1618 = vmul.bf16 %v1580, 1045249613
      %v1619 = vmul.bf16 %v1581, 1045249613
      %v1620 = vmul.bf16 %v1582, 1045249613
      %v1621 = vmul.bf16 %v1583, 1045249613
      %v1622 = vmul.bf16 %v1584, 1045249613
      %v1623 = vmul.bf16 %v1585, 1045249613
      %v1624 = vmul.bf16 %v1586, 1045249613
      %v1625 = vmul.bf16 %v1587, 1045249613
      %v1626 = vmul.bf16 %v1588, 1045249613
      %v1627 = vmul.bf16 %v1589, 1045249613
      %v1628 = vmul.bf16 %v1590, 1045249613
      %v1629 = vmul.bf16 %v1591, 1045249613
      %v1630 = vmul.bf16 %v1592, 1045249613
      %v1631 = vmul.bf16 %v1593, 1045249613
      %v1632 = vmul.bf16 %v1594, 1045249613
      %v1633 = vmul.bf16 %v1595, 1045249613
      %v1634 = vsel %vm1596, %v1577, %v1615
      %v1635 = vsel %vm1597, %v1578, %v1616
      %v1636 = vsel %vm1598, %v1579, %v1617
      %v1637 = vsel %vm1599, %v1580, %v1618
      %v1638 = vsel %vm1600, %v1581, %v1619
      %v1639 = vsel %vm1601, %v1582, %v1620
      %v1640 = vsel %vm1602, %v1583, %v1621
      %v1641 = vsel %vm1603, %v1584, %v1622
      %v1642 = vsel %vm1604, %v1585, %v1623
      %v1643 = vsel %vm1605, %v1586, %v1624
      %v1644 = vsel %vm1606, %v1587, %v1625
      %v1645 = vsel %vm1607, %v1588, %v1626
      %v1646 = vsel %vm1608, %v1589, %v1627
      %v1647 = vsel %vm1609, %v1590, %v1628
      %v1648 = vsel %vm1610, %v1591, %v1629
      %v1649 = vsel %vm1611, %v1592, %v1630
      %v1650 = vsel %vm1612, %v1593, %v1631
      %v1651 = vsel %vm1613, %v1594, %v1632
      %v1652 = vsel %vm1614, %v1595, %v1633
      %v1653 = vld [vmem:[%s7] sm:$0xf]
      %v1654 = vld [vmem:[%s7 + $0x4] sm:$0xf]
      %v1655 = vld [vmem:[%s7 + $0x8] sm:$0xf]
      %v1656 = vld [vmem:[%s7 + $0xc] sm:$0xf]
      %v1657 = vld [vmem:[%s7 + $0x10] sm:$0xf]
      %v1658 = vld [vmem:[%s7 + $0x14] sm:$0xf]
      %v1659 = vld [vmem:[%s7 + $0x18] sm:$0xf]
      %v1660 = vld [vmem:[%s7 + $0x1c] sm:$0xf]
      %v1661 = vld [vmem:[%s7 + $0x20] sm:$0xf]
      %v1662 = vld [vmem:[%s7 + $0x24] sm:$0xf]
      %v1663 = vld [vmem:[%s7 + $0x28] sm:$0xf]
      %v1664 = vld [vmem:[%s7 + $0x2c] sm:$0xf]
      %v1665 = vld [vmem:[%s7 + $0x30] sm:$0xf]
      %v1666 = vld [vmem:[%s7 + $0x34] sm:$0xf]
      %v1667 = vld [vmem:[%s7 + $0x38] sm:$0xf]
      %v1668 = vld [vmem:[%s7 + $0x3c] sm:$0xf]
      %v1669 = vld [vmem:[%s8] sm:$0x1]
      %v1671 = vlaneseq
      %v1672 = vshrl.u32 %v1671, 7
      %v1673 = vsub.s32 0, %v1672
      %v1674 = vrot.slane %v1669, %v1673
      %v1692 = vunpack.c.l.b16 %v1653
      %v1693 = vunpack.c.l.b16 %v1654
      %v1694 = vunpack.c.l.b16 %v1655
      %v1695 = vunpack.c.l.b16 %v1656
      %v1696 = vunpack.c.l.b16 %v1657
      %v1697 = vunpack.c.l.b16 %v1658
      %v1698 = vunpack.c.l.b16 %v1659
      %v1699 = vunpack.c.l.b16 %v1660
      %v1700 = vunpack.c.l.b16 %v1661
      %v1701 = vunpack.c.l.b16 %v1662
      %v1702 = vunpack.c.l.b16 %v1663
      %v1703 = vunpack.c.l.b16 %v1664
      %v1704 = vunpack.c.l.b16 %v1665
      %v1705 = vunpack.c.l.b16 %v1666
      %v1706 = vunpack.c.l.b16 %v1667
      %v1707 = vunpack.c.l.b16 %v1668
      %v1708 = vpack.c.b16 %v1693, %v1692
      %v1709 = vpack.c.b16 %v1695, %v1694
      %v1710 = vpack.c.b16 %v1697, %v1696
      %v1711 = vpack.c.b16 %v1699, %v1698
      %v1712 = vpack.c.b16 %v1701, %v1700
      %v1713 = vpack.c.b16 %v1703, %v1702
      %v1714 = vpack.c.b16 %v1705, %v1704
      %v1715 = vpack.c.b16 %v1707, %v1706
      %1724 = vmatprep.subr.bf16.mxu0 0
      %1725 = vmatpush1.bf16.msra.mxu0 %v1708
      %1726 = vmatprep.subr.bf16.mxu0 0
      %1727 = vmatpush1.bf16.msra.mxu0 %v1709
      %1728 = vmatprep.subr.bf16.mxu0 0
      %1729 = vmatpush1.bf16.msra.mxu0 %v1710
      %1730 = vmatprep.subr.bf16.mxu0 0
      %1731 = vmatpush1.bf16.msra.mxu0 %v1711
      %1732 = vmatprep.subr.bf16.mxu0 0
      %1733 = vmatpush1.bf16.msra.mxu0 %v1712
      %1734 = vmatprep.subr.bf16.mxu0 0
      %1735 = vmatpush1.bf16.msra.mxu0 %v1713
      %1736 = vmatprep.subr.bf16.mxu0 0
      %1737 = vmatpush1.bf16.msra.mxu0 %v1714
      %1738 = vmatprep.subr.bf16.mxu0 0
      %1739 = vmatpush1.bf16.msra.mxu0 %v1715
      %1740 = vmatprep.subr.bf16.mxu0 0
      %1741 = vmatpush1.bf16.msra.mxu0 0
      %1742 = vmatprep.subr.bf16.mxu0 0
      %1743 = vmatpush1.bf16.msra.mxu0 0
      %1744 = vmatprep.subr.bf16.mxu0 0
      %1745 = vmatpush1.bf16.msra.mxu0 0
      %1746 = vmatprep.subr.bf16.mxu0 0
      %1747 = vmatpush1.bf16.msra.mxu0 0
      %1748 = vmatprep.subr.bf16.mxu0 0
      %1749 = vmatpush1.bf16.msra.mxu0 0
      %1750 = vmatprep.subr.bf16.mxu0 0
      %1751 = vmatpush1.bf16.msra.mxu0 0
      %1752 = vmatprep.subr.bf16.mxu0 0
      %1753 = vmatpush1.bf16.msra.mxu0 0
      %1754 = vmatprep.subr.bf16.mxu0 0
      %1755 = vmatpush1.bf16.msra.mxu0 0
      %1756 = vmatprep.mubr.bf16.mxu0 0
      %1757 = vmatmul.mubr.bf16.gmra.mrb[0].mxu0 %v1634
      %v1758 = vpop.f32.mrb[0].mxu0
      %v1759 = vadd.f32 %v1674, %v1758
      %v1760 = vpop.f32.mrb[0].mxu0
      %v1761 = vpop.f32.mrb[0].mxu0
      %v1762 = vadd.f32 %v1674, %v1761
      %v1763 = vpop.f32.mrb[0].mxu0
      %1764 = vmatprep.mubr.bf16.mxu0 0
      %1765 = vmatmul.mubr.bf16.gmra.mrb[0].mxu0 %v1635
      %v1766 = vpop.f32.mrb[0].mxu0
      %v1767 = vadd.f32 %v1674, %v1766
      %v1768 = vpop.f32.mrb[0].mxu0
      %v1769 = vpop.f32.mrb[0].mxu0
      %v1770 = vadd.f32 %v1674, %v1769
      %v1771 = vpop.f32.mrb[0].mxu0
      %1772 = vmatprep.mubr.bf16.mxu0 0
      %1773 = vmatmul.mubr.bf16.gmra.mrb[0].mxu0 %v1636
      %v1774 = vpop.f32.mrb[0].mxu0
      %v1775 = vadd.f32 %v1674, %v1774
      %v1776 = vpop.f32.mrb[0].mxu0
      %v1777 = vpop.f32.mrb[0].mxu0
      %v1778 = vadd.f32 %v1674, %v1777
      %v1779 = vpop.f32.mrb[0].mxu0
      %1780 = vmatprep.mubr.bf16.mxu0 0
      %1781 = vmatmul.mubr.bf16.gmra.mrb[0].mxu0 %v1637
      %v1782 = vpop.f32.mrb[0].mxu0
      %v1783 = vadd.f32 %v1674, %v1782
      %v1784 = vpop.f32.mrb[0].mxu0
      %v1785 = vpop.f32.mrb[0].mxu0
      %v1786 = vadd.f32 %v1674, %v1785
      %v1787 = vpop.f32.mrb[0].mxu0
      %1788 = vmatprep.mubr.bf16.mxu0 0
      %1789 = vmatmul.mubr.bf16.gmra.mrb[0].mxu0 %v1638
      %v1790 = vpop.f32.mrb[0].mxu0
      %v1791 = vadd.f32 %v1674, %v1790
      %v1792 = vpop.f32.mrb[0].mxu0
      %v1793 = vpop.f32.mrb[0].mxu0
      %v1794 = vadd.f32 %v1674, %v1793
      %v1795 = vpop.f32.mrb[0].mxu0
      %1796 = vmatprep.mubr.bf16.mxu0 0
      %1797 = vmatmul.mubr.bf16.gmra.mrb[0].mxu0 %v1639
      %v1798 = vpop.f32.mrb[0].mxu0
      %v1799 = vadd.f32 %v1674, %v1798
      %v1800 = vpop.f32.mrb[0].mxu0
      %v1801 = vpop.f32.mrb[0].mxu0
      %v1802 = vadd.f32 %v1674, %v1801
      %v1803 = vpop.f32.mrb[0].mxu0
      %1804 = vmatprep.mubr.bf16.mxu0 0
      %1805 = vmatmul.mubr.bf16.gmra.mrb[0].mxu0 %v1640
      %v1806 = vpop.f32.mrb[0].mxu0
      %v1807 = vadd.f32 %v1674, %v1806
      %v1808 = vpop.f32.mrb[0].mxu0
      %v1809 = vpop.f32.mrb[0].mxu0
      %v1810 = vadd.f32 %v1674, %v1809
      %v1811 = vpop.f32.mrb[0].mxu0
      %1812 = vmatprep.mubr.bf16.mxu0 0
      %1813 = vmatmul.mubr.bf16.gmra.mrb[0].mxu0 %v1641
      %v1814 = vpop.f32.mrb[0].mxu0
      %v1815 = vadd.f32 %v1674, %v1814
      %v1816 = vpop.f32.mrb[0].mxu0
      %v1817 = vpop.f32.mrb[0].mxu0
      %v1818 = vadd.f32 %v1674, %v1817
      %v1819 = vpop.f32.mrb[0].mxu0
      %1820 = vmatprep.mubr.bf16.mxu0 0
      %1821 = vmatmul.mubr.bf16.gmra.mrb[0].mxu0 %v1642
      %v1822 = vpop.f32.mrb[0].mxu0
      %v1823 = vadd.f32 %v1674, %v1822
      %v1824 = vpop.f32.mrb[0].mxu0
      %v1825 = vpop.f32.mrb[0].mxu0
      %v1826 = vadd.f32 %v1674, %v1825
      %v1827 = vpop.f32.mrb[0].mxu0
      %1828 = vmatprep.mubr.bf16.mxu0 0
      %1829 = vmatmul.mubr.bf16.gmra.mrb[0].mxu0 %v1643
      %v1830 = vpop.f32.mrb[0].mxu0
      %v1831 = vadd.f32 %v1674, %v1830
      %v1832 = vpop.f32.mrb[0].mxu0
      %v1833 = vpop.f32.mrb[0].mxu0
      %v1834 = vadd.f32 %v1674, %v1833
      %v1835 = vpop.f32.mrb[0].mxu0
      %1836 = vmatprep.mubr.bf16.mxu0 0
      %1837 = vmatmul.mubr.bf16.gmra.mrb[0].mxu0 %v1644
      %v1838 = vpop.f32.mrb[0].mxu0
      %v1839 = vadd.f32 %v1674, %v1838
      %v1840 = vpop.f32.mrb[0].mxu0
      %v1841 = vpop.f32.mrb[0].mxu0
      %v1842 = vadd.f32 %v1674, %v1841
      %v1843 = vpop.f32.mrb[0].mxu0
      %1844 = vmatprep.mubr.bf16.mxu0 0
      %1845 = vmatmul.mubr.bf16.gmra.mrb[0].mxu0 %v1645
      %v1846 = vpop.f32.mrb[0].mxu0
      %v1847 = vadd.f32 %v1674, %v1846
      %v1848 = vpop.f32.mrb[0].mxu0
      %v1849 = vpop.f32.mrb[0].mxu0
      %v1850 = vadd.f32 %v1674, %v1849
      %v1851 = vpop.f32.mrb[0].mxu0
      %1852 = vmatprep.mubr.bf16.mxu0 0
      %1853 = vmatmul.mubr.bf16.gmra.mrb[0].mxu0 %v1646
      %v1854 = vpop.f32.mrb[0].mxu0
      %v1855 = vadd.f32 %v1674, %v1854
      %v1856 = vpop.f32.mrb[0].mxu0
      %v1857 = vpop.f32.mrb[0].mxu0
      %v1858 = vadd.f32 %v1674, %v1857
      %v1859 = vpop.f32.mrb[0].mxu0
      %1860 = vmatprep.mubr.bf16.mxu0 0
      %1861 = vmatmul.mubr.bf16.gmra.mrb[0].mxu0 %v1647
      %v1862 = vpop.f32.mrb[0].mxu0
      %v1863 = vadd.f32 %v1674, %v1862
      %v1864 = vpop.f32.mrb[0].mxu0
      %v1865 = vpop.f32.mrb[0].mxu0
      %v1866 = vadd.f32 %v1674, %v1865
      %v1867 = vpop.f32.mrb[0].mxu0
      %1868 = vmatprep.mubr.bf16.mxu0 0
      %1869 = vmatmul.mubr.bf16.gmra.mrb[0].mxu0 %v1648
      %v1870 = vpop.f32.mrb[0].mxu0
      %v1871 = vadd.f32 %v1674, %v1870
      %v1872 = vpop.f32.mrb[0].mxu0
      %v1873 = vpop.f32.mrb[0].mxu0
      %v1874 = vadd.f32 %v1674, %v1873
      %v1875 = vpop.f32.mrb[0].mxu0
      %1876 = vmatprep.mubr.bf16.mxu0 0
      %1877 = vmatmul.mubr.bf16.gmra.mrb[0].mxu0 %v1649
      %v1878 = vpop.f32.mrb[0].mxu0
      %v1879 = vadd.f32 %v1674, %v1878
      %v1880 = vpop.f32.mrb[0].mxu0
      %v1881 = vpop.f32.mrb[0].mxu0
      %v1882 = vadd.f32 %v1674, %v1881
      %v1883 = vpop.f32.mrb[0].mxu0
      %1884 = vmatprep.mubr.bf16.mxu0 0
      %1885 = vmatmul.mubr.bf16.gmra.mrb[0].mxu0 %v1650
      %v1886 = vpop.f32.mrb[0].mxu0
      %v1887 = vadd.f32 %v1674, %v1886
      %v1888 = vpop.f32.mrb[0].mxu0
      %v1889 = vpop.f32.mrb[0].mxu0
      %v1890 = vadd.f32 %v1674, %v1889
      %v1891 = vpop.f32.mrb[0].mxu0
      %1892 = vmatprep.mubr.bf16.mxu0 0
      %1893 = vmatmul.mubr.bf16.gmra.mrb[0].mxu0 %v1651
      %v1894 = vpop.f32.mrb[0].mxu0
      %v1895 = vadd.f32 %v1674, %v1894
      %v1896 = vpop.f32.mrb[0].mxu0
      %v1897 = vpop.f32.mrb[0].mxu0
      %v1898 = vadd.f32 %v1674, %v1897
      %v1899 = vpop.f32.mrb[0].mxu0
      %1900 = vmatprep.mubr.bf16.mxu0 0
      %1901 = vmatmul.mubr.bf16.gmra.mrb[0].mxu0 %v1652
      %v1902 = vpop.f32.mrb[0].mxu0
      %v1903 = vadd.f32 %v1674, %v1902
      %v1904 = vpop.f32.mrb[0].mxu0
      %v1905 = vpop.f32.mrb[0].mxu0
      %v1906 = vadd.f32 %v1674, %v1905
      %v1907 = vpop.f32.mrb[0].mxu0
      %1908 = vdwg.mxu0
      %v1909 = vxor.u32 %v1759, 2147483648
      %v1910 = vxor.u32 %v1762, 2147483648
      %v1911 = vxor.u32 %v1767, 2147483648
      %v1912 = vxor.u32 %v1770, 2147483648
      %v1913 = vxor.u32 %v1775, 2147483648
      %v1914 = vxor.u32 %v1778, 2147483648
      %v1915 = vxor.u32 %v1783, 2147483648
      %v1916 = vxor.u32 %v1786, 2147483648
      %v1917 = vxor.u32 %v1791, 2147483648
      %v1918 = vxor.u32 %v1794, 2147483648
      %v1919 = vxor.u32 %v1799, 2147483648
      %v1920 = vxor.u32 %v1802, 2147483648
      %v1921 = vxor.u32 %v1807, 2147483648
      %v1922 = vxor.u32 %v1810, 2147483648
      %v1923 = vxor.u32 %v1815, 2147483648
      %v1924 = vxor.u32 %v1818, 2147483648
      %v1925 = vxor.u32 %v1823, 2147483648
      %v1926 = vxor.u32 %v1826, 2147483648
      %v1927 = vxor.u32 %v1831, 2147483648
      %v1928 = vxor.u32 %v1834, 2147483648
      %v1929 = vxor.u32 %v1839, 2147483648
      %v1930 = vxor.u32 %v1842, 2147483648
      %v1931 = vxor.u32 %v1847, 2147483648
      %v1932 = vxor.u32 %v1850, 2147483648
      %v1933 = vxor.u32 %v1855, 2147483648
      %v1934 = vxor.u32 %v1858, 2147483648
      %v1935 = vxor.u32 %v1863, 2147483648
      %v1936 = vxor.u32 %v1866, 2147483648
      %v1937 = vxor.u32 %v1871, 2147483648
      %v1938 = vxor.u32 %v1874, 2147483648
      %v1939 = vxor.u32 %v1879, 2147483648
      %v1940 = vxor.u32 %v1882, 2147483648
      %v1941 = vxor.u32 %v1887, 2147483648
      %v1942 = vxor.u32 %v1890, 2147483648
      %v1943 = vxor.u32 %v1895, 2147483648
      %v1944 = vxor.u32 %v1898, 2147483648
      %v1945 = vxor.u32 %v1903, 2147483648
      %v1946 = vxor.u32 %v1906, 2147483648
      %v1947 = vmul.f32 %v1909, 1.442695
      %v1948 = vpow.pop %v1947
      %v1949 = vmul.f32 %v1910, 1.442695
      %v1950 = vpow.pop %v1949
      %v1951 = vmul.f32 %v1911, 1.442695
      %v1952 = vpow.pop %v1951
      %v1953 = vmul.f32 %v1912, 1.442695
      %v1954 = vpow.pop %v1953
      %v1955 = vmul.f32 %v1913, 1.442695
      %v1956 = vpow.pop %v1955
      %v1957 = vmul.f32 %v1914, 1.442695
      %v1958 = vpow.pop %v1957
      %v1959 = vmul.f32 %v1915, 1.442695
      %v1960 = vpow.pop %v1959
      %v1961 = vmul.f32 %v1916, 1.442695
      %v1962 = vpow.pop %v1961
      %v1963 = vmul.f32 %v1917, 1.442695
      %v1964 = vpow.pop %v1963
      %v1965 = vmul.f32 %v1918, 1.442695
      %v1966 = vpow.pop %v1965
      %v1967 = vmul.f32 %v1919, 1.442695
      %v1968 = vpow.pop %v1967
      %v1969 = vmul.f32 %v1920, 1.442695
      %v1970 = vpow.pop %v1969
      %v1971 = vmul.f32 %v1921, 1.442695
      %v1972 = vpow.pop %v1971
      %v1973 = vmul.f32 %v1922, 1.442695
      %v1974 = vpow.pop %v1973
      %v1975 = vmul.f32 %v1923, 1.442695
      %v1976 = vpow.pop %v1975
      %v1977 = vmul.f32 %v1924, 1.442695
      %v1978 = vpow.pop %v1977
      %v1979 = vmul.f32 %v1925, 1.442695
      %v1980 = vpow.pop %v1979
      %v1981 = vmul.f32 %v1926, 1.442695
      %v1982 = vpow.pop %v1981
      %v1983 = vmul.f32 %v1927, 1.442695
      %v1984 = vpow.pop %v1983
      %v1985 = vmul.f32 %v1928, 1.442695
      %v1986 = vpow.pop %v1985
      %v1987 = vmul.f32 %v1929, 1.442695
      %v1988 = vpow.pop %v1987
      %v1989 = vmul.f32 %v1930, 1.442695
      %v1990 = vpow.pop %v1989
      %v1991 = vmul.f32 %v1931, 1.442695
      %v1992 = vpow.pop %v1991
      %v1993 = vmul.f32 %v1932, 1.442695
      %v1994 = vpow.pop %v1993
      %v1995 = vmul.f32 %v1933, 1.442695
      %v1996 = vpow.pop %v1995
      %v1997 = vmul.f32 %v1934, 1.442695
      %v1998 = vpow.pop %v1997
      %v1999 = vmul.f32 %v1935, 1.442695
      %v2000 = vpow.pop %v1999
      %v2001 = vmul.f32 %v1936, 1.442695
      %v2002 = vpow.pop %v2001
      %v2003 = vmul.f32 %v1937, 1.442695
      %v2004 = vpow.pop %v2003
      %v2005 = vmul.f32 %v1938, 1.442695
      %v2006 = vpow.pop %v2005
      %v2007 = vmul.f32 %v1939, 1.442695
      %v2008 = vpow.pop %v2007
      %v2009 = vmul.f32 %v1940, 1.442695
      %v2010 = vpow.pop %v2009
      %v2011 = vmul.f32 %v1941, 1.442695
      %v2012 = vpow.pop %v2011
      %v2013 = vmul.f32 %v1942, 1.442695
      %v2014 = vpow.pop %v2013
      %v2015 = vmul.f32 %v1943, 1.442695
      %v2016 = vpow.pop %v2015
      %v2017 = vmul.f32 %v1944, 1.442695
      %v2018 = vpow.pop %v2017
      %v2019 = vmul.f32 %v1945, 1.442695
      %v2020 = vpow.pop %v2019
      %v2021 = vmul.f32 %v1946, 1.442695
      %v2022 = vpow.pop %v2021
      %v2023 = vadd.f32 %v1948, 1.0
      %v2024 = vadd.f32 %v1950, 1.0
      %v2025 = vadd.f32 %v1952, 1.0
      %v2026 = vadd.f32 %v1954, 1.0
      %v2027 = vadd.f32 %v1956, 1.0
      %v2028 = vadd.f32 %v1958, 1.0
      %v2029 = vadd.f32 %v1960, 1.0
      %v2030 = vadd.f32 %v1962, 1.0
      %v2031 = vadd.f32 %v1964, 1.0
      %v2032 = vadd.f32 %v1966, 1.0
      %v2033 = vadd.f32 %v1968, 1.0
      %v2034 = vadd.f32 %v1970, 1.0
      %v2035 = vadd.f32 %v1972, 1.0
      %v2036 = vadd.f32 %v1974, 1.0
      %v2037 = vadd.f32 %v1976, 1.0
      %v2038 = vadd.f32 %v1978, 1.0
      %v2039 = vadd.f32 %v1980, 1.0
      %v2040 = vadd.f32 %v1982, 1.0
      %v2041 = vadd.f32 %v1984, 1.0
      %v2042 = vadd.f32 %v1986, 1.0
      %v2043 = vadd.f32 %v1988, 1.0
      %v2044 = vadd.f32 %v1990, 1.0
      %v2045 = vadd.f32 %v1992, 1.0
      %v2046 = vadd.f32 %v1994, 1.0
      %v2047 = vadd.f32 %v1996, 1.0
      %v2048 = vadd.f32 %v1998, 1.0
      %v2049 = vadd.f32 %v2000, 1.0
      %v2050 = vadd.f32 %v2002, 1.0
      %v2051 = vadd.f32 %v2004, 1.0
      %v2052 = vadd.f32 %v2006, 1.0
      %v2053 = vadd.f32 %v2008, 1.0
      %v2054 = vadd.f32 %v2010, 1.0
      %v2055 = vadd.f32 %v2012, 1.0
      %v2056 = vadd.f32 %v2014, 1.0
      %v2057 = vadd.f32 %v2016, 1.0
      %v2058 = vadd.f32 %v2018, 1.0
      %v2059 = vadd.f32 %v2020, 1.0
      %v2060 = vadd.f32 %v2022, 1.0
      %v2061 = vrcp.pop %v2023
      %v2062 = vmul.f32 1.0, %v2061
      %v2063 = vrcp.pop %v2024
      %v2064 = vmul.f32 1.0, %v2063
      %v2065 = vrcp.pop %v2025
      %v2066 = vmul.f32 1.0, %v2065
      %v2067 = vrcp.pop %v2026
      %v2068 = vmul.f32 1.0, %v2067
      %v2069 = vrcp.pop %v2027
      %v2070 = vmul.f32 1.0, %v2069
      %v2071 = vrcp.pop %v2028
      %v2072 = vmul.f32 1.0, %v2071
      %v2073 = vrcp.pop %v2029
      %v2074 = vmul.f32 1.0, %v2073
      %v2075 = vrcp.pop %v2030
      %v2076 = vmul.f32 1.0, %v2075
      %v2077 = vrcp.pop %v2031
      %v2078 = vmul.f32 1.0, %v2077
      %v2079 = vrcp.pop %v2032
      %v2080 = vmul.f32 1.0, %v2079
      %v2081 = vrcp.pop %v2033
      %v2082 = vmul.f32 1.0, %v2081
      %v2083 = vrcp.pop %v2034
      %v2084 = vmul.f32 1.0, %v2083
      %v2085 = vrcp.pop %v2035
      %v2086 = vmul.f32 1.0, %v2085
      %v2087 = vrcp.pop %v2036
      %v2088 = vmul.f32 1.0, %v2087
      %v2089 = vrcp.pop %v2037
      %v2090 = vmul.f32 1.0, %v2089
      %v2091 = vrcp.pop %v2038
      %v2092 = vmul.f32 1.0, %v2091
      %v2093 = vrcp.pop %v2039
      %v2094 = vmul.f32 1.0, %v2093
      %v2095 = vrcp.pop %v2040
      %v2096 = vmul.f32 1.0, %v2095
      %v2097 = vrcp.pop %v2041
      %v2098 = vmul.f32 1.0, %v2097
      %v2099 = vrcp.pop %v2042
      %v2100 = vmul.f32 1.0, %v2099
      %v2101 = vrcp.pop %v2043
      %v2102 = vmul.f32 1.0, %v2101
      %v2103 = vrcp.pop %v2044
      %v2104 = vmul.f32 1.0, %v2103
      %v2105 = vrcp.pop %v2045
      %v2106 = vmul.f32 1.0, %v2105
      %v2107 = vrcp.pop %v2046
      %v2108 = vmul.f32 1.0, %v2107
      %v2109 = vrcp.pop %v2047
      %v2110 = vmul.f32 1.0, %v2109
      %v2111 = vrcp.pop %v2048
      %v2112 = vmul.f32 1.0, %v2111
      %v2113 = vrcp.pop %v2049
      %v2114 = vmul.f32 1.0, %v2113
      %v2115 = vrcp.pop %v2050
      %v2116 = vmul.f32 1.0, %v2115
      %v2117 = vrcp.pop %v2051
      %v2118 = vmul.f32 1.0, %v2117
      %v2119 = vrcp.pop %v2052
      %v2120 = vmul.f32 1.0, %v2119
      %v2121 = vrcp.pop %v2053
      %v2122 = vmul.f32 1.0, %v2121
      %v2123 = vrcp.pop %v2054
      %v2124 = vmul.f32 1.0, %v2123
      %v2125 = vrcp.pop %v2055
      %v2126 = vmul.f32 1.0, %v2125
      %v2127 = vrcp.pop %v2056
      %v2128 = vmul.f32 1.0, %v2127
      %v2129 = vrcp.pop %v2057
      %v2130 = vmul.f32 1.0, %v2129
      %v2131 = vrcp.pop %v2058
      %v2132 = vmul.f32 1.0, %v2131
      %v2133 = vrcp.pop %v2059
      %v2134 = vmul.f32 1.0, %v2133
      %v2135 = vrcp.pop %v2060
      %v2136 = vmul.f32 1.0, %v2135
      %v2137 = vld [vmem:[%s9] sm:$0xf]
      %v2138 = vld [vmem:[%s9 + $0x4] sm:$0xf]
      %v2139 = vld [vmem:[%s9 + $0x8] sm:$0xf]
      %v2140 = vld [vmem:[%s9 + $0xc] sm:$0xf]
      %v2141 = vld [vmem:[%s9 + $0x10] sm:$0xf]
      %v2142 = vld [vmem:[%s9 + $0x14] sm:$0xf]
      %v2143 = vld [vmem:[%s9 + $0x18] sm:$0xf]
      %v2144 = vld [vmem:[%s9 + $0x1c] sm:$0xf]
      %v2145 = vld [vmem:[%s9 + $0x20] sm:$0xf]
      %v2146 = vld [vmem:[%s9 + $0x24] sm:$0xf]
      %v2147 = vld [vmem:[%s9 + $0x28] sm:$0xf]
      %v2148 = vld [vmem:[%s9 + $0x2c] sm:$0xf]
      %v2149 = vld [vmem:[%s9 + $0x30] sm:$0xf]
      %v2150 = vld [vmem:[%s9 + $0x34] sm:$0xf]
      %v2151 = vld [vmem:[%s9 + $0x38] sm:$0xf]
      %v2152 = vld [vmem:[%s9 + $0x3c] sm:$0xf]
      %v2153 = vld [vmem:[%s10] sm:$0x1]
      %v2155 = vlaneseq
      %v2156 = vshrl.u32 %v2155, 7
      %v2157 = vsub.s32 0, %v2156
      %v2158 = vrot.slane %v2153, %v2157
      %v2176 = vunpack.c.l.b16 %v2137
      %v2177 = vunpack.c.l.b16 %v2138
      %v2178 = vunpack.c.l.b16 %v2139
      %v2179 = vunpack.c.l.b16 %v2140
      %v2180 = vunpack.c.l.b16 %v2141
      %v2181 = vunpack.c.l.b16 %v2142
      %v2182 = vunpack.c.l.b16 %v2143
      %v2183 = vunpack.c.l.b16 %v2144
      %v2184 = vunpack.c.l.b16 %v2145
      %v2185 = vunpack.c.l.b16 %v2146
      %v2186 = vunpack.c.l.b16 %v2147
      %v2187 = vunpack.c.l.b16 %v2148
      %v2188 = vunpack.c.l.b16 %v2149
      %v2189 = vunpack.c.l.b16 %v2150
      %v2190 = vunpack.c.l.b16 %v2151
      %v2191 = vunpack.c.l.b16 %v2152
      %v2192 = vpack.c.b16 %v2177, %v2176
      %v2193 = vpack.c.b16 %v2179, %v2178
      %v2194 = vpack.c.b16 %v2181, %v2180
      %v2195 = vpack.c.b16 %v2183, %v2182
      %v2196 = vpack.c.b16 %v2185, %v2184
      %v2197 = vpack.c.b16 %v2187, %v2186
      %v2198 = vpack.c.b16 %v2189, %v2188
      %v2199 = vpack.c.b16 %v2191, %v2190
      %2208 = vmatprep.subr.bf16.mxu0 0
      %2209 = vmatpush1.bf16.msra.mxu0 %v2192
      %2210 = vmatprep.subr.bf16.mxu0 0
      %2211 = vmatpush1.bf16.msra.mxu0 %v2193
      %2212 = vmatprep.subr.bf16.mxu0 0
      %2213 = vmatpush1.bf16.msra.mxu0 %v2194
      %2214 = vmatprep.subr.bf16.mxu0 0
      %2215 = vmatpush1.bf16.msra.mxu0 %v2195
      %2216 = vmatprep.subr.bf16.mxu0 0
      %2217 = vmatpush1.bf16.msra.mxu0 %v2196
      %2218 = vmatprep.subr.bf16.mxu0 0
      %2219 = vmatpush1.bf16.msra.mxu0 %v2197
      %2220 = vmatprep.subr.bf16.mxu0 0
      %2221 = vmatpush1.bf16.msra.mxu0 %v2198
      %2222 = vmatprep.subr.bf16.mxu0 0
      %2223 = vmatpush1.bf16.msra.mxu0 %v2199
      %2224 = vmatprep.subr.bf16.mxu0 0
      %2225 = vmatpush1.bf16.msra.mxu0 0
      %2226 = vmatprep.subr.bf16.mxu0 0
      %2227 = vmatpush1.bf16.msra.mxu0 0
      %2228 = vmatprep.subr.bf16.mxu0 0
      %2229 = vmatpush1.bf16.msra.mxu0 0
      %2230 = vmatprep.subr.bf16.mxu0 0
      %2231 = vmatpush1.bf16.msra.mxu0 0
      %2232 = vmatprep.subr.bf16.mxu0 0
      %2233 = vmatpush1.bf16.msra.mxu0 0
      %2234 = vmatprep.subr.bf16.mxu0 0
      %2235 = vmatpush1.bf16.msra.mxu0 0
      %2236 = vmatprep.subr.bf16.mxu0 0
      %2237 = vmatpush1.bf16.msra.mxu0 0
      %2238 = vmatprep.subr.bf16.mxu0 0
      %2239 = vmatpush1.bf16.msra.mxu0 0
      %2240 = vmatprep.mubr.bf16.mxu0 0
      %2241 = vmatmul.mubr.bf16.gmra.mrb[0].mxu0 %v970
      %v2242 = vpop.f32.mrb[0].mxu0
      %v2243 = vadd.f32 %v2158, %v2242
      %v2244 = vpop.f32.mrb[0].mxu0
      %v2245 = vpop.f32.mrb[0].mxu0
      %v2246 = vadd.f32 %v2158, %v2245
      %v2247 = vpop.f32.mrb[0].mxu0
      %2248 = vmatprep.mubr.bf16.mxu0 0
      %2249 = vmatmul.mubr.bf16.gmra.mrb[0].mxu0 %v971
      %v2250 = vpop.f32.mrb[0].mxu0
      %v2251 = vadd.f32 %v2158, %v2250
      %v2252 = vpop.f32.mrb[0].mxu0
      %v2253 = vpop.f32.mrb[0].mxu0
      %v2254 = vadd.f32 %v2158, %v2253
      %v2255 = vpop.f32.mrb[0].mxu0
      %2256 = vmatprep.mubr.bf16.mxu0 0
      %2257 = vmatmul.mubr.bf16.gmra.mrb[0].mxu0 %v972
      %v2258 = vpop.f32.mrb[0].mxu0
      %v2259 = vadd.f32 %v2158, %v2258
      %v2260 = vpop.f32.mrb[0].mxu0
      %v2261 = vpop.f32.mrb[0].mxu0
      %v2262 = vadd.f32 %v2158, %v2261
      %v2263 = vpop.f32.mrb[0].mxu0
      %2264 = vmatprep.mubr.bf16.mxu0 0
      %2265 = vmatmul.mubr.bf16.gmra.mrb[0].mxu0 %v973
      %v2266 = vpop.f32.mrb[0].mxu0
      %v2267 = vadd.f32 %v2158, %v2266
      %v2268 = vpop.f32.mrb[0].mxu0
      %v2269 = vpop.f32.mrb[0].mxu0
      %v2270 = vadd.f32 %v2158, %v2269
      %v2271 = vpop.f32.mrb[0].mxu0
      %2272 = vmatprep.mubr.bf16.mxu0 0
      %2273 = vmatmul.mubr.bf16.gmra.mrb[0].mxu0 %v974
      %v2274 = vpop.f32.mrb[0].mxu0
      %v2275 = vadd.f32 %v2158, %v2274
      %v2276 = vpop.f32.mrb[0].mxu0
      %v2277 = vpop.f32.mrb[0].mxu0
      %v2278 = vadd.f32 %v2158, %v2277
      %v2279 = vpop.f32.mrb[0].mxu0
      %2280 = vmatprep.mubr.bf16.mxu0 0
      %2281 = vmatmul.mubr.bf16.gmra.mrb[0].mxu0 %v975
      %v2282 = vpop.f32.mrb[0].mxu0
      %v2283 = vadd.f32 %v2158, %v2282
      %v2284 = vpop.f32.mrb[0].mxu0
      %v2285 = vpop.f32.mrb[0].mxu0
      %v2286 = vadd.f32 %v2158, %v2285
      %v2287 = vpop.f32.mrb[0].mxu0
      %2288 = vmatprep.mubr.bf16.mxu0 0
      %2289 = vmatmul.mubr.bf16.gmra.mrb[0].mxu0 %v976
      %v2290 = vpop.f32.mrb[0].mxu0
      %v2291 = vadd.f32 %v2158, %v2290
      %v2292 = vpop.f32.mrb[0].mxu0
      %v2293 = vpop.f32.mrb[0].mxu0
      %v2294 = vadd.f32 %v2158, %v2293
      %v2295 = vpop.f32.mrb[0].mxu0
      %2296 = vmatprep.mubr.bf16.mxu0 0
      %2297 = vmatmul.mubr.bf16.gmra.mrb[0].mxu0 %v977
      %v2298 = vpop.f32.mrb[0].mxu0
      %v2299 = vadd.f32 %v2158, %v2298
      %v2300 = vpop.f32.mrb[0].mxu0
      %v2301 = vpop.f32.mrb[0].mxu0
      %v2302 = vadd.f32 %v2158, %v2301
      %v2303 = vpop.f32.mrb[0].mxu0
      %2304 = vmatprep.mubr.bf16.mxu0 0
      %2305 = vmatmul.mubr.bf16.gmra.mrb[0].mxu0 %v978
      %v2306 = vpop.f32.mrb[0].mxu0
      %v2307 = vadd.f32 %v2158, %v2306
      %v2308 = vpop.f32.mrb[0].mxu0
      %v2309 = vpop.f32.mrb[0].mxu0
      %v2310 = vadd.f32 %v2158, %v2309
      %v2311 = vpop.f32.mrb[0].mxu0
      %2312 = vmatprep.mubr.bf16.mxu0 0
      %2313 = vmatmul.mubr.bf16.gmra.mrb[0].mxu0 %v979
      %v2314 = vpop.f32.mrb[0].mxu0
      %v2315 = vadd.f32 %v2158, %v2314
      %v2316 = vpop.f32.mrb[0].mxu0
      %v2317 = vpop.f32.mrb[0].mxu0
      %v2318 = vadd.f32 %v2158, %v2317
      %v2319 = vpop.f32.mrb[0].mxu0
      %2320 = vmatprep.mubr.bf16.mxu0 0
      %2321 = vmatmul.mubr.bf16.gmra.mrb[0].mxu0 %v980
      %v2322 = vpop.f32.mrb[0].mxu0
      %v2323 = vadd.f32 %v2158, %v2322
      %v2324 = vpop.f32.mrb[0].mxu0
      %v2325 = vpop.f32.mrb[0].mxu0
      %v2326 = vadd.f32 %v2158, %v2325
      %v2327 = vpop.f32.mrb[0].mxu0
      %2328 = vmatprep.mubr.bf16.mxu0 0
      %2329 = vmatmul.mubr.bf16.gmra.mrb[0].mxu0 %v981
      %v2330 = vpop.f32.mrb[0].mxu0
      %v2331 = vadd.f32 %v2158, %v2330
      %v2332 = vpop.f32.mrb[0].mxu0
      %v2333 = vpop.f32.mrb[0].mxu0
      %v2334 = vadd.f32 %v2158, %v2333
      %v2335 = vpop.f32.mrb[0].mxu0
      %2336 = vmatprep.mubr.bf16.mxu0 0
      %2337 = vmatmul.mubr.bf16.gmra.mrb[0].mxu0 %v982
      %v2338 = vpop.f32.mrb[0].mxu0
      %v2339 = vadd.f32 %v2158, %v2338
      %v2340 = vpop.f32.mrb[0].mxu0
      %v2341 = vpop.f32.mrb[0].mxu0
      %v2342 = vadd.f32 %v2158, %v2341
      %v2343 = vpop.f32.mrb[0].mxu0
      %2344 = vmatprep.mubr.bf16.mxu0 0
      %2345 = vmatmul.mubr.bf16.gmra.mrb[0].mxu0 %v983
      %v2346 = vpop.f32.mrb[0].mxu0
      %v2347 = vadd.f32 %v2158, %v2346
      %v2348 = vpop.f32.mrb[0].mxu0
      %v2349 = vpop.f32.mrb[0].mxu0
      %v2350 = vadd.f32 %v2158, %v2349
      %v2351 = vpop.f32.mrb[0].mxu0
      %2352 = vmatprep.mubr.bf16.mxu0 0
      %2353 = vmatmul.mubr.bf16.gmra.mrb[0].mxu0 %v984
      %v2354 = vpop.f32.mrb[0].mxu0
      %v2355 = vadd.f32 %v2158, %v2354
      %v2356 = vpop.f32.mrb[0].mxu0
      %v2357 = vpop.f32.mrb[0].mxu0
      %v2358 = vadd.f32 %v2158, %v2357
      %v2359 = vpop.f32.mrb[0].mxu0
      %2360 = vmatprep.mubr.bf16.mxu0 0
      %2361 = vmatmul.mubr.bf16.gmra.mrb[0].mxu0 %v985
      %v2362 = vpop.f32.mrb[0].mxu0
      %v2363 = vadd.f32 %v2158, %v2362
      %v2364 = vpop.f32.mrb[0].mxu0
      %v2365 = vpop.f32.mrb[0].mxu0
      %v2366 = vadd.f32 %v2158, %v2365
      %v2367 = vpop.f32.mrb[0].mxu0
      %2368 = vmatprep.mubr.bf16.mxu0 0
      %2369 = vmatmul.mubr.bf16.gmra.mrb[0].mxu0 %v986
      %v2370 = vpop.f32.mrb[0].mxu0
      %v2371 = vadd.f32 %v2158, %v2370
      %v2372 = vpop.f32.mrb[0].mxu0
      %v2373 = vpop.f32.mrb[0].mxu0
      %v2374 = vadd.f32 %v2158, %v2373
      %v2375 = vpop.f32.mrb[0].mxu0
      %2376 = vmatprep.mubr.bf16.mxu0 0
      %2377 = vmatmul.mubr.bf16.gmra.mrb[0].mxu0 %v987
      %v2378 = vpop.f32.mrb[0].mxu0
      %v2379 = vadd.f32 %v2158, %v2378
      %v2380 = vpop.f32.mrb[0].mxu0
      %v2381 = vpop.f32.mrb[0].mxu0
      %v2382 = vadd.f32 %v2158, %v2381
      %v2383 = vpop.f32.mrb[0].mxu0
      %2384 = vmatprep.mubr.bf16.mxu0 0
      %2385 = vmatmul.mubr.bf16.gmra.mrb[0].mxu0 %v988
      %v2386 = vpop.f32.mrb[0].mxu0
      %v2387 = vadd.f32 %v2158, %v2386
      %v2388 = vpop.f32.mrb[0].mxu0
      %v2389 = vpop.f32.mrb[0].mxu0
      %v2390 = vadd.f32 %v2158, %v2389
      %v2391 = vpop.f32.mrb[0].mxu0
      %2392 = vdwg.mxu0
      %v2393 = vxor.u32 %v2243, 2147483648
      %v2394 = vxor.u32 %v2246, 2147483648
      %v2395 = vxor.u32 %v2251, 2147483648
      %v2396 = vxor.u32 %v2254, 2147483648
      %v2397 = vxor.u32 %v2259, 2147483648
      %v2398 = vxor.u32 %v2262, 2147483648
      %v2399 = vxor.u32 %v2267, 2147483648
      %v2400 = vxor.u32 %v2270, 2147483648
      %v2401 = vxor.u32 %v2275, 2147483648
      %v2402 = vxor.u32 %v2278, 2147483648
      %v2403 = vxor.u32 %v2283, 2147483648
      %v2404 = vxor.u32 %v2286, 2147483648
      %v2405 = vxor.u32 %v2291, 2147483648
      %v2406 = vxor.u32 %v2294, 2147483648
      %v2407 = vxor.u32 %v2299, 2147483648
      %v2408 = vxor.u32 %v2302, 2147483648
      %v2409 = vxor.u32 %v2307, 2147483648
      %v2410 = vxor.u32 %v2310, 2147483648
      %v2411 = vxor.u32 %v2315, 2147483648
      %v2412 = vxor.u32 %v2318, 2147483648
      %v2413 = vxor.u32 %v2323, 2147483648
      %v2414 = vxor.u32 %v2326, 2147483648
      %v2415 = vxor.u32 %v2331, 2147483648
      %v2416 = vxor.u32 %v2334, 2147483648
      %v2417 = vxor.u32 %v2339, 2147483648
      %v2418 = vxor.u32 %v2342, 2147483648
      %v2419 = vxor.u32 %v2347, 2147483648
      %v2420 = vxor.u32 %v2350, 2147483648
      %v2421 = vxor.u32 %v2355, 2147483648
      %v2422 = vxor.u32 %v2358, 2147483648
      %v2423 = vxor.u32 %v2363, 2147483648
      %v2424 = vxor.u32 %v2366, 2147483648
      %v2425 = vxor.u32 %v2371, 2147483648
      %v2426 = vxor.u32 %v2374, 2147483648
      %v2427 = vxor.u32 %v2379, 2147483648
      %v2428 = vxor.u32 %v2382, 2147483648
      %v2429 = vxor.u32 %v2387, 2147483648
      %v2430 = vxor.u32 %v2390, 2147483648
      %v2431 = vmul.f32 %v2393, 1.442695
      %v2432 = vpow.pop %v2431
      %v2433 = vmul.f32 %v2394, 1.442695
      %v2434 = vpow.pop %v2433
      %v2435 = vmul.f32 %v2395, 1.442695
      %v2436 = vpow.pop %v2435
      %v2437 = vmul.f32 %v2396, 1.442695
      %v2438 = vpow.pop %v2437
      %v2439 = vmul.f32 %v2397, 1.442695
      %v2440 = vpow.pop %v2439
      %v2441 = vmul.f32 %v2398, 1.442695
      %v2442 = vpow.pop %v2441
      %v2443 = vmul.f32 %v2399, 1.442695
      %v2444 = vpow.pop %v2443
      %v2445 = vmul.f32 %v2400, 1.442695
      %v2446 = vpow.pop %v2445
      %v2447 = vmul.f32 %v2401, 1.442695
      %v2448 = vpow.pop %v2447
      %v2449 = vmul.f32 %v2402, 1.442695
      %v2450 = vpow.pop %v2449
      %v2451 = vmul.f32 %v2403, 1.442695
      %v2452 = vpow.pop %v2451
      %v2453 = vmul.f32 %v2404, 1.442695
      %v2454 = vpow.pop %v2453
      %v2455 = vmul.f32 %v2405, 1.442695
      %v2456 = vpow.pop %v2455
      %v2457 = vmul.f32 %v2406, 1.442695
      %v2458 = vpow.pop %v2457
      %v2459 = vmul.f32 %v2407, 1.442695
      %v2460 = vpow.pop %v2459
      %v2461 = vmul.f32 %v2408, 1.442695
      %v2462 = vpow.pop %v2461
      %v2463 = vmul.f32 %v2409, 1.442695
      %v2464 = vpow.pop %v2463
      %v2465 = vmul.f32 %v2410, 1.442695
      %v2466 = vpow.pop %v2465
      %v2467 = vmul.f32 %v2411, 1.442695
      %v2468 = vpow.pop %v2467
      %v2469 = vmul.f32 %v2412, 1.442695
      %v2470 = vpow.pop %v2469
      %v2471 = vmul.f32 %v2413, 1.442695
      %v2472 = vpow.pop %v2471
      %v2473 = vmul.f32 %v2414, 1.442695
      %v2474 = vpow.pop %v2473
      %v2475 = vmul.f32 %v2415, 1.442695
      %v2476 = vpow.pop %v2475
      %v2477 = vmul.f32 %v2416, 1.442695
      %v2478 = vpow.pop %v2477
      %v2479 = vmul.f32 %v2417, 1.442695
      %v2480 = vpow.pop %v2479
      %v2481 = vmul.f32 %v2418, 1.442695
      %v2482 = vpow.pop %v2481
      %v2483 = vmul.f32 %v2419, 1.442695
      %v2484 = vpow.pop %v2483
      %v2485 = vmul.f32 %v2420, 1.442695
      %v2486 = vpow.pop %v2485
      %v2487 = vmul.f32 %v2421, 1.442695
      %v2488 = vpow.pop %v2487
      %v2489 = vmul.f32 %v2422, 1.442695
      %v2490 = vpow.pop %v2489
      %v2491 = vmul.f32 %v2423, 1.442695
      %v2492 = vpow.pop %v2491
      %v2493 = vmul.f32 %v2424, 1.442695
      %v2494 = vpow.pop %v2493
      %v2495 = vmul.f32 %v2425, 1.442695
      %v2496 = vpow.pop %v2495
      %v2497 = vmul.f32 %v2426, 1.442695
      %v2498 = vpow.pop %v2497
      %v2499 = vmul.f32 %v2427, 1.442695
      %v2500 = vpow.pop %v2499
      %v2501 = vmul.f32 %v2428, 1.442695
      %v2502 = vpow.pop %v2501
      %v2503 = vmul.f32 %v2429, 1.442695
      %v2504 = vpow.pop %v2503
      %v2505 = vmul.f32 %v2430, 1.442695
      %v2506 = vpow.pop %v2505
      %v2507 = vadd.f32 %v2432, 1.0
      %v2508 = vadd.f32 %v2434, 1.0
      %v2509 = vadd.f32 %v2436, 1.0
      %v2510 = vadd.f32 %v2438, 1.0
      %v2511 = vadd.f32 %v2440, 1.0
      %v2512 = vadd.f32 %v2442, 1.0
      %v2513 = vadd.f32 %v2444, 1.0
      %v2514 = vadd.f32 %v2446, 1.0
      %v2515 = vadd.f32 %v2448, 1.0
      %v2516 = vadd.f32 %v2450, 1.0
      %v2517 = vadd.f32 %v2452, 1.0
      %v2518 = vadd.f32 %v2454, 1.0
      %v2519 = vadd.f32 %v2456, 1.0
      %v2520 = vadd.f32 %v2458, 1.0
      %v2521 = vadd.f32 %v2460, 1.0
      %v2522 = vadd.f32 %v2462, 1.0
      %v2523 = vadd.f32 %v2464, 1.0
      %v2524 = vadd.f32 %v2466, 1.0
      %v2525 = vadd.f32 %v2468, 1.0
      %v2526 = vadd.f32 %v2470, 1.0
      %v2527 = vadd.f32 %v2472, 1.0
      %v2528 = vadd.f32 %v2474, 1.0
      %v2529 = vadd.f32 %v2476, 1.0
      %v2530 = vadd.f32 %v2478, 1.0
      %v2531 = vadd.f32 %v2480, 1.0
      %v2532 = vadd.f32 %v2482, 1.0
      %v2533 = vadd.f32 %v2484, 1.0
      %v2534 = vadd.f32 %v2486, 1.0
      %v2535 = vadd.f32 %v2488, 1.0
      %v2536 = vadd.f32 %v2490, 1.0
      %v2537 = vadd.f32 %v2492, 1.0
      %v2538 = vadd.f32 %v2494, 1.0
      %v2539 = vadd.f32 %v2496, 1.0
      %v2540 = vadd.f32 %v2498, 1.0
      %v2541 = vadd.f32 %v2500, 1.0
      %v2542 = vadd.f32 %v2502, 1.0
      %v2543 = vadd.f32 %v2504, 1.0
      %v2544 = vadd.f32 %v2506, 1.0
      %v2545 = vrcp.pop %v2507
      %v2546 = vmul.f32 1.0, %v2545
      %v2547 = vrcp.pop %v2508
      %v2548 = vmul.f32 1.0, %v2547
      %v2549 = vrcp.pop %v2509
      %v2550 = vmul.f32 1.0, %v2549
      %v2551 = vrcp.pop %v2510
      %v2552 = vmul.f32 1.0, %v2551
      %v2553 = vrcp.pop %v2511
      %v2554 = vmul.f32 1.0, %v2553
      %v2555 = vrcp.pop %v2512
      %v2556 = vmul.f32 1.0, %v2555
      %v2557 = vrcp.pop %v2513
      %v2558 = vmul.f32 1.0, %v2557
      %v2559 = vrcp.pop %v2514
      %v2560 = vmul.f32 1.0, %v2559
      %v2561 = vrcp.pop %v2515
      %v2562 = vmul.f32 1.0, %v2561
      %v2563 = vrcp.pop %v2516
      %v2564 = vmul.f32 1.0, %v2563
      %v2565 = vrcp.pop %v2517
      %v2566 = vmul.f32 1.0, %v2565
      %v2567 = vrcp.pop %v2518
      %v2568 = vmul.f32 1.0, %v2567
      %v2569 = vrcp.pop %v2519
      %v2570 = vmul.f32 1.0, %v2569
      %v2571 = vrcp.pop %v2520
      %v2572 = vmul.f32 1.0, %v2571
      %v2573 = vrcp.pop %v2521
      %v2574 = vmul.f32 1.0, %v2573
      %v2575 = vrcp.pop %v2522
      %v2576 = vmul.f32 1.0, %v2575
      %v2577 = vrcp.pop %v2523
      %v2578 = vmul.f32 1.0, %v2577
      %v2579 = vrcp.pop %v2524
      %v2580 = vmul.f32 1.0, %v2579
      %v2581 = vrcp.pop %v2525
      %v2582 = vmul.f32 1.0, %v2581
      %v2583 = vrcp.pop %v2526
      %v2584 = vmul.f32 1.0, %v2583
      %v2585 = vrcp.pop %v2527
      %v2586 = vmul.f32 1.0, %v2585
      %v2587 = vrcp.pop %v2528
      %v2588 = vmul.f32 1.0, %v2587
      %v2589 = vrcp.pop %v2529
      %v2590 = vmul.f32 1.0, %v2589
      %v2591 = vrcp.pop %v2530
      %v2592 = vmul.f32 1.0, %v2591
      %v2593 = vrcp.pop %v2531
      %v2594 = vmul.f32 1.0, %v2593
      %v2595 = vrcp.pop %v2532
      %v2596 = vmul.f32 1.0, %v2595
      %v2597 = vrcp.pop %v2533
      %v2598 = vmul.f32 1.0, %v2597
      %v2599 = vrcp.pop %v2534
      %v2600 = vmul.f32 1.0, %v2599
      %v2601 = vrcp.pop %v2535
      %v2602 = vmul.f32 1.0, %v2601
      %v2603 = vrcp.pop %v2536
      %v2604 = vmul.f32 1.0, %v2603
      %v2605 = vrcp.pop %v2537
      %v2606 = vmul.f32 1.0, %v2605
      %v2607 = vrcp.pop %v2538
      %v2608 = vmul.f32 1.0, %v2607
      %v2609 = vrcp.pop %v2539
      %v2610 = vmul.f32 1.0, %v2609
      %v2611 = vrcp.pop %v2540
      %v2612 = vmul.f32 1.0, %v2611
      %v2613 = vrcp.pop %v2541
      %v2614 = vmul.f32 1.0, %v2613
      %v2615 = vrcp.pop %v2542
      %v2616 = vmul.f32 1.0, %v2615
      %v2617 = vrcp.pop %v2543
      %v2618 = vmul.f32 1.0, %v2617
      %v2619 = vrcp.pop %v2544
      %v2620 = vmul.f32 1.0, %v2619
      %v2621 = vsub.f32 %v2546, 0.5
      %v2622 = vsub.f32 %v2548, 0.5
      %v2623 = vsub.f32 %v2550, 0.5
      %v2624 = vsub.f32 %v2552, 0.5
      %v2625 = vsub.f32 %v2554, 0.5
      %v2626 = vsub.f32 %v2556, 0.5
      %v2627 = vsub.f32 %v2558, 0.5
      %v2628 = vsub.f32 %v2560, 0.5
      %v2629 = vsub.f32 %v2562, 0.5
      %v2630 = vsub.f32 %v2564, 0.5
      %v2631 = vsub.f32 %v2566, 0.5
      %v2632 = vsub.f32 %v2568, 0.5
      %v2633 = vsub.f32 %v2570, 0.5
      %v2634 = vsub.f32 %v2572, 0.5
      %v2635 = vsub.f32 %v2574, 0.5
      %v2636 = vsub.f32 %v2576, 0.5
      %v2637 = vsub.f32 %v2578, 0.5
      %v2638 = vsub.f32 %v2580, 0.5
      %v2639 = vsub.f32 %v2582, 0.5
      %v2640 = vsub.f32 %v2584, 0.5
      %v2641 = vsub.f32 %v2586, 0.5
      %v2642 = vsub.f32 %v2588, 0.5
      %v2643 = vsub.f32 %v2590, 0.5
      %v2644 = vsub.f32 %v2592, 0.5
      %v2645 = vsub.f32 %v2594, 0.5
      %v2646 = vsub.f32 %v2596, 0.5
      %v2647 = vsub.f32 %v2598, 0.5
      %v2648 = vsub.f32 %v2600, 0.5
      %v2649 = vsub.f32 %v2602, 0.5
      %v2650 = vsub.f32 %v2604, 0.5
      %v2651 = vsub.f32 %v2606, 0.5
      %v2652 = vsub.f32 %v2608, 0.5
      %v2653 = vsub.f32 %v2610, 0.5
      %v2654 = vsub.f32 %v2612, 0.5
      %v2655 = vsub.f32 %v2614, 0.5
      %v2656 = vsub.f32 %v2616, 0.5
      %v2657 = vsub.f32 %v2618, 0.5
      %v2658 = vsub.f32 %v2620, 0.5
      %v2659 = vmul.f32 %v2621, 0.2
      %v2660 = vmul.f32 %v2622, 0.2
      %v2661 = vmul.f32 %v2623, 0.2
      %v2662 = vmul.f32 %v2624, 0.2
      %v2663 = vmul.f32 %v2625, 0.2
      %v2664 = vmul.f32 %v2626, 0.2
      %v2665 = vmul.f32 %v2627, 0.2
      %v2666 = vmul.f32 %v2628, 0.2
      %v2667 = vmul.f32 %v2629, 0.2
      %v2668 = vmul.f32 %v2630, 0.2
      %v2669 = vmul.f32 %v2631, 0.2
      %v2670 = vmul.f32 %v2632, 0.2
      %v2671 = vmul.f32 %v2633, 0.2
      %v2672 = vmul.f32 %v2634, 0.2
      %v2673 = vmul.f32 %v2635, 0.2
      %v2674 = vmul.f32 %v2636, 0.2
      %v2675 = vmul.f32 %v2637, 0.2
      %v2676 = vmul.f32 %v2638, 0.2
      %v2677 = vmul.f32 %v2639, 0.2
      %v2678 = vmul.f32 %v2640, 0.2
      %v2679 = vmul.f32 %v2641, 0.2
      %v2680 = vmul.f32 %v2642, 0.2
      %v2681 = vmul.f32 %v2643, 0.2
      %v2682 = vmul.f32 %v2644, 0.2
      %v2683 = vmul.f32 %v2645, 0.2
      %v2684 = vmul.f32 %v2646, 0.2
      %v2685 = vmul.f32 %v2647, 0.2
      %v2686 = vmul.f32 %v2648, 0.2
      %v2687 = vmul.f32 %v2649, 0.2
      %v2688 = vmul.f32 %v2650, 0.2
      %v2689 = vmul.f32 %v2651, 0.2
      %v2690 = vmul.f32 %v2652, 0.2
      %v2691 = vmul.f32 %v2653, 0.2
      %v2692 = vmul.f32 %v2654, 0.2
      %v2693 = vmul.f32 %v2655, 0.2
      %v2694 = vmul.f32 %v2656, 0.2
      %v2695 = vmul.f32 %v2657, 0.2
      %v2696 = vmul.f32 %v2658, 0.2
      %v2697 = vadd.f32 %v2659, 0.5
      %v2698 = vadd.f32 %v2660, 0.5
      %v2699 = vadd.f32 %v2661, 0.5
      %v2700 = vadd.f32 %v2662, 0.5
      %v2701 = vadd.f32 %v2663, 0.5
      %v2702 = vadd.f32 %v2664, 0.5
      %v2703 = vadd.f32 %v2665, 0.5
      %v2704 = vadd.f32 %v2666, 0.5
      %v2705 = vadd.f32 %v2667, 0.5
      %v2706 = vadd.f32 %v2668, 0.5
      %v2707 = vadd.f32 %v2669, 0.5
      %v2708 = vadd.f32 %v2670, 0.5
      %v2709 = vadd.f32 %v2671, 0.5
      %v2710 = vadd.f32 %v2672, 0.5
      %v2711 = vadd.f32 %v2673, 0.5
      %v2712 = vadd.f32 %v2674, 0.5
      %v2713 = vadd.f32 %v2675, 0.5
      %v2714 = vadd.f32 %v2676, 0.5
      %v2715 = vadd.f32 %v2677, 0.5
      %v2716 = vadd.f32 %v2678, 0.5
      %v2717 = vadd.f32 %v2679, 0.5
      %v2718 = vadd.f32 %v2680, 0.5
      %v2719 = vadd.f32 %v2681, 0.5
      %v2720 = vadd.f32 %v2682, 0.5
      %v2721 = vadd.f32 %v2683, 0.5
      %v2722 = vadd.f32 %v2684, 0.5
      %v2723 = vadd.f32 %v2685, 0.5
      %v2724 = vadd.f32 %v2686, 0.5
      %v2725 = vadd.f32 %v2687, 0.5
      %v2726 = vadd.f32 %v2688, 0.5
      %v2727 = vadd.f32 %v2689, 0.5
      %v2728 = vadd.f32 %v2690, 0.5
      %v2729 = vadd.f32 %v2691, 0.5
      %v2730 = vadd.f32 %v2692, 0.5
      %v2731 = vadd.f32 %v2693, 0.5
      %v2732 = vadd.f32 %v2694, 0.5
      %v2733 = vadd.f32 %v2695, 0.5
      %v2734 = vadd.f32 %v2696, 0.5
      %vm2735 = vcmp.gt.f32.partialorder %v2062, %v2697
      %vm2736 = vcmp.gt.f32.partialorder %v2064, %v2698
      %vm2737 = vcmp.gt.f32.partialorder %v2066, %v2699
      %vm2738 = vcmp.gt.f32.partialorder %v2068, %v2700
      %vm2739 = vcmp.gt.f32.partialorder %v2070, %v2701
      %vm2740 = vcmp.gt.f32.partialorder %v2072, %v2702
      %vm2741 = vcmp.gt.f32.partialorder %v2074, %v2703
      %vm2742 = vcmp.gt.f32.partialorder %v2076, %v2704
      %vm2743 = vcmp.gt.f32.partialorder %v2078, %v2705
      %vm2744 = vcmp.gt.f32.partialorder %v2080, %v2706
      %vm2745 = vcmp.gt.f32.partialorder %v2082, %v2707
      %vm2746 = vcmp.gt.f32.partialorder %v2084, %v2708
      %vm2747 = vcmp.gt.f32.partialorder %v2086, %v2709
      %vm2748 = vcmp.gt.f32.partialorder %v2088, %v2710
      %vm2749 = vcmp.gt.f32.partialorder %v2090, %v2711
      %vm2750 = vcmp.gt.f32.partialorder %v2092, %v2712
      %vm2751 = vcmp.gt.f32.partialorder %v2094, %v2713
      %vm2752 = vcmp.gt.f32.partialorder %v2096, %v2714
      %vm2753 = vcmp.gt.f32.partialorder %v2098, %v2715
      %vm2754 = vcmp.gt.f32.partialorder %v2100, %v2716
      %vm2755 = vcmp.gt.f32.partialorder %v2102, %v2717
      %vm2756 = vcmp.gt.f32.partialorder %v2104, %v2718
      %vm2757 = vcmp.gt.f32.partialorder %v2106, %v2719
      %vm2758 = vcmp.gt.f32.partialorder %v2108, %v2720
      %vm2759 = vcmp.gt.f32.partialorder %v2110, %v2721
      %vm2760 = vcmp.gt.f32.partialorder %v2112, %v2722
      %vm2761 = vcmp.gt.f32.partialorder %v2114, %v2723
      %vm2762 = vcmp.gt.f32.partialorder %v2116, %v2724
      %vm2763 = vcmp.gt.f32.partialorder %v2118, %v2725
      %vm2764 = vcmp.gt.f32.partialorder %v2120, %v2726
      %vm2765 = vcmp.gt.f32.partialorder %v2122, %v2727
      %vm2766 = vcmp.gt.f32.partialorder %v2124, %v2728
      %vm2767 = vcmp.gt.f32.partialorder %v2126, %v2729
      %vm2768 = vcmp.gt.f32.partialorder %v2128, %v2730
      %vm2769 = vcmp.gt.f32.partialorder %v2130, %v2731
      %vm2770 = vcmp.gt.f32.partialorder %v2132, %v2732
      %vm2771 = vcmp.gt.f32.partialorder %v2134, %v2733
      %vm2772 = vcmp.gt.f32.partialorder %v2136, %v2734
      %v2773 = vsel %vm2735, 1, 0
      %v2774 = vsel %vm2736, 1, 0
      %v2775 = vsel %vm2737, 1, 0
      %v2776 = vsel %vm2738, 1, 0
      %v2777 = vsel %vm2739, 1, 0
      %v2778 = vsel %vm2740, 1, 0
      %v2779 = vsel %vm2741, 1, 0
      %v2780 = vsel %vm2742, 1, 0
      %v2781 = vsel %vm2743, 1, 0
      %v2782 = vsel %vm2744, 1, 0
      %v2783 = vsel %vm2745, 1, 0
      %v2784 = vsel %vm2746, 1, 0
      %v2785 = vsel %vm2747, 1, 0
      %v2786 = vsel %vm2748, 1, 0
      %v2787 = vsel %vm2749, 1, 0
      %v2788 = vsel %vm2750, 1, 0
      %v2789 = vsel %vm2751, 1, 0
      %v2790 = vsel %vm2752, 1, 0
      %v2791 = vsel %vm2753, 1, 0
      %v2792 = vsel %vm2754, 1, 0
      %v2793 = vsel %vm2755, 1, 0
      %v2794 = vsel %vm2756, 1, 0
      %v2795 = vsel %vm2757, 1, 0
      %v2796 = vsel %vm2758, 1, 0
      %v2797 = vsel %vm2759, 1, 0
      %v2798 = vsel %vm2760, 1, 0
      %v2799 = vsel %vm2761, 1, 0
      %v2800 = vsel %vm2762, 1, 0
      %v2801 = vsel %vm2763, 1, 0
      %v2802 = vsel %vm2764, 1, 0
      %v2803 = vsel %vm2765, 1, 0
      %v2804 = vsel %vm2766, 1, 0
      %v2805 = vsel %vm2767, 1, 0
      %v2806 = vsel %vm2768, 1, 0
      %v2807 = vsel %vm2769, 1, 0
      %v2808 = vsel %vm2770, 1, 0
      %v2809 = vsel %vm2771, 1, 0
      %v2810 = vsel %vm2772, 1, 0
      %v2811 = vcvt.s32.f32 %v2773
      %v2812 = vcvt.s32.f32 %v2774
      %v2813 = vcvt.s32.f32 %v2775
      %v2814 = vcvt.s32.f32 %v2776
      %v2815 = vcvt.s32.f32 %v2777
      %v2816 = vcvt.s32.f32 %v2778
      %v2817 = vcvt.s32.f32 %v2779
      %v2818 = vcvt.s32.f32 %v2780
      %v2819 = vcvt.s32.f32 %v2781
      %v2820 = vcvt.s32.f32 %v2782
      %v2821 = vcvt.s32.f32 %v2783
      %v2822 = vcvt.s32.f32 %v2784
      %v2823 = vcvt.s32.f32 %v2785
      %v2824 = vcvt.s32.f32 %v2786
      %v2825 = vcvt.s32.f32 %v2787
      %v2826 = vcvt.s32.f32 %v2788
      %v2827 = vcvt.s32.f32 %v2789
      %v2828 = vcvt.s32.f32 %v2790
      %v2829 = vcvt.s32.f32 %v2791
      %v2830 = vcvt.s32.f32 %v2792
      %v2831 = vcvt.s32.f32 %v2793
      %v2832 = vcvt.s32.f32 %v2794
      %v2833 = vcvt.s32.f32 %v2795
      %v2834 = vcvt.s32.f32 %v2796
      %v2835 = vcvt.s32.f32 %v2797
      %v2836 = vcvt.s32.f32 %v2798
      %v2837 = vcvt.s32.f32 %v2799
      %v2838 = vcvt.s32.f32 %v2800
      %v2839 = vcvt.s32.f32 %v2801
      %v2840 = vcvt.s32.f32 %v2802
      %v2841 = vcvt.s32.f32 %v2803
      %v2842 = vcvt.s32.f32 %v2804
      %v2843 = vcvt.s32.f32 %v2805
      %v2844 = vcvt.s32.f32 %v2806
      %v2845 = vcvt.s32.f32 %v2807
      %v2846 = vcvt.s32.f32 %v2808
      %v2847 = vcvt.s32.f32 %v2809
      %v2848 = vcvt.s32.f32 %v2810
      %2849 = vst [vmem:[%s388] sm:$0xff] %v2811
      %2850 = vst [vmem:[%s388 + $0x8] sm:$0xff] %v2812
      %2851 = vst [vmem:[%s388 + $0x10] sm:$0xff] %v2813
      %2852 = vst [vmem:[%s388 + $0x18] sm:$0xff] %v2814
      %2853 = vst [vmem:[%s388 + $0x20] sm:$0xff] %v2815
      %2854 = vst [vmem:[%s388 + $0x28] sm:$0xff] %v2816
      %2855 = vst [vmem:[%s388 + $0x30] sm:$0xff] %v2817
      %2856 = vst [vmem:[%s388 + $0x38] sm:$0xff] %v2818
      %2857 = vst [vmem:[%s388 + $0x40] sm:$0xff] %v2819
      %2858 = vst [vmem:[%s388 + $0x48] sm:$0xff] %v2820
      %2859 = vst [vmem:[%s388 + $0x50] sm:$0xff] %v2821
      %2860 = vst [vmem:[%s388 + $0x58] sm:$0xff] %v2822
      %2861 = vst [vmem:[%s388 + $0x60] sm:$0xff] %v2823
      %2862 = vst [vmem:[%s388 + $0x68] sm:$0xff] %v2824
      %2863 = vst [vmem:[%s388 + $0x70] sm:$0xff] %v2825
      %2864 = vst [vmem:[%s388 + $0x78] sm:$0xff] %v2826
      %2865 = vst [vmem:[%s388 + $0x80] sm:$0xff] %v2827
      %2866 = vst [vmem:[%s388 + $0x88] sm:$0xff] %v2828
      %2867 = vst [vmem:[%s388 + $0x90] sm:$0xff] %v2829
      %2868 = vst [vmem:[%s388 + $0x98] sm:$0xff] %v2830
      %2869 = vst [vmem:[%s388 + $0xa0] sm:$0xff] %v2831
      %2870 = vst [vmem:[%s388 + $0xa8] sm:$0xff] %v2832
      %2871 = vst [vmem:[%s388 + $0xb0] sm:$0xff] %v2833
      %2872 = vst [vmem:[%s388 + $0xb8] sm:$0xff] %v2834
      %2873 = vst [vmem:[%s388 + $0xc0] sm:$0xff] %v2835
      %2874 = vst [vmem:[%s388 + $0xc8] sm:$0xff] %v2836
      %2875 = vst [vmem:[%s388 + $0xd0] sm:$0xff] %v2837
      %2876 = vst [vmem:[%s388 + $0xd8] sm:$0xff] %v2838
      %2877 = vst [vmem:[%s388 + $0xe0] sm:$0xff] %v2839
      %2878 = vst [vmem:[%s388 + $0xe8] sm:$0xff] %v2840
      %2879 = vst [vmem:[%s388 + $0xf0] sm:$0xff] %v2841
      %2880 = vst [vmem:[%s388 + $0xf8] sm:$0xff] %v2842
      %2881 = vst [vmem:[%s388 + $0x100] sm:$0xff] %v2843
      %2882 = vst [vmem:[%s388 + $0x108] sm:$0xff] %v2844
      %2883 = vst [vmem:[%s388 + $0x110] sm:$0xff] %v2845
      %2884 = vst [vmem:[%s388 + $0x118] sm:$0xff] %v2846
      %2885 = vst [vmem:[%s388 + $0x120] sm:$0xff] %v2847
      %2886 = vst [vmem:[%s388 + $0x128] sm:$0xff] %v2848
      %s2887 = smul.u32 38, %s22
      %p2888 = scmp.lt.s32.totalorder %s2887, 75
      %s2889 = scalar_select %p2888, %s2887, 75
      %s2890 = smul.addr %s2889, 8
      %s2891 = scalar_lea.vmem %s11, %s2890
      // Predicated region
      $region65: #{_ecc_impl.1} parent=63 // pred_check
        %p2892 = pneg %p276
      $region66: #{_ecc_impl.1} parent=63 // pred_check_branch
        %2894 = sbr.rel (%p2892) target = $region68
      $region67: #{_ecc_impl.1} parent=63 // pred_region
        %s2895 = smul.u32 38, %s22
      $region68: #{_ecc_impl.1} parent=63 // pred_fallthru
        _
    $region64: #{_ecc_impl.1} parent=5 // pred_fallthru
      _
    %p2896 = scmp.le.s32.totalorder 2, %s17
    // Predicated region
    $region69: #{_ecc_impl.1} parent=5 // pred_check
      %p2897 = pneg %p2896
    $region70: #{_ecc_impl.1} parent=5 // pred_check_branch
      %2899 = sbr.rel (%p2897) target = $region72
    $region71: #{_ecc_impl.1} parent=5 // pred_region
      %s2900 = ssub.s32 %s17, 2
      // Predicated region
      $region73: #{_ecc_impl.1} parent=71 // pred_check
        %p2901 = pneg %p282
      $region74: #{_ecc_impl.1} parent=71 // pred_check_branch
        %2903 = sbr.rel (%p2901) target = $region76
      $region75: #{_ecc_impl.1} parent=71 // pred_region
        %s2904 = smul.u32 38, %s23
        %p2905 = scmp.lt.s32.totalorder %s2904, 75
        %s2906 = scalar_select %p2905, %s2904, 75
        %s2907 = smul.addr %s2906, 8
        %s2908 = scalar_lea.vmem %s11, %s2907
      $region76: #{_ecc_impl.1} parent=71 // pred_fallthru
        _
    $region72: #{_ecc_impl.1} parent=5 // pred_fallthru
      _
  $region6: #{_ecc_impl.1} parent=0 // loop_footer
    %s21 = sadd.s32 1, %s17
  $region7: #{_ecc_impl.1} parent=0 // loop_footer_branch
    %16 = sbr.rel target = $region3
  $region8: #{_ecc_impl.1} parent=0 // loop_exit
    _

</llo_original>
